<compile_context>
chip_gen: v7x
topology: tpu7x:2x2x1
jax: 0.10.0
libtpu: 0.0.40
codegen_flags: <defaults>
</compile_context>

<pallas_src>
import math

import jax
import jax.numpy as jnp
from jax.experimental import pallas as pl
from jax.experimental.pallas import tpu as pltpu  # noqa: F401  (TPU backend assumed)

# ---- model shapes (toy stand-ins for bert-base 768/12/3072) ----
B, S = 2, 8                       # batch, sequence length (<= 256, cf. tokenizer max_length)
H, NH, FFN = 64, 4, 256           # hidden, heads, FFN width
DH = H // NH                      # 16
NLAYERS = 2
VOCAB, MAXPOS = 100, 256
CLS_HIDDEN = (H // 2, H // 4, H // 8)   # BaseClassifier hidden_size=[dim/2, dim/4, dim/8]
LN_EPS = 1e-12
NEG_INF = -1e9

# ---- lane-padded shapes (TPU vregs are 128 lanes wide) ----
HP = 128                          # hidden padded to one full vreg of lanes
CP = 128                          # classifier hidden widths padded
VOCAB_P = 128                     # vocab padded for the one-hot gather matmul

BF16, F32 = jnp.bfloat16, jnp.float32


def _ln_pad(x, g, b):
    # LayerNorm over the H valid features of a 128-lane-padded activation.
    # Invariant: padded lanes of x are exactly 0, so sum(x)/H and sum(x*x)/H equal the
    # unpadded mean / E[x^2]; gamma/beta are zero in the padded lanes so the output
    # padding stays exactly 0.
    mu = jnp.sum(x, axis=-1, keepdims=True) * (1.0 / H)
    ex2 = jnp.sum(x * x, axis=-1, keepdims=True) * (1.0 / H)
    var = jnp.maximum(ex2 - mu * mu, 0.0)
    return (x - mu) * jax.lax.rsqrt(var + LN_EPS) * g + b


# ---------------- the fused forward-pass kernel ----------------

def text_pretrain_kernel(
        # data
        ids_ref, mask_ref, label_ref,
        # embeddings
        wemb_ref, pemb_ref, temb_ref, elng_ref, elnb_ref,
        # stacked encoder-layer weights (leading dim = NLAYERS)
        wqkv_ref, bqkv_ref, wo_ref, bo_ref, ln1g_ref, ln1b_ref,
        w1_ref, b1_ref, w2_ref, b2_ref, ln2g_ref, ln2b_ref,
        # pooler + BaseClassifier
        wp_ref, bp_ref,
        cw1_ref, cb1_ref, cw2_ref, cb2_ref, cw3_ref, cb3_ref, cw4t_ref, cb4_ref,
        # outputs
        pred_ref, pooled_ref, loss_ref):
    # ---- embeddings: one-hot token gather on the MXU + position/type add + LayerNorm ----
    ids = ids_ref[...]                                              # (B,S) int32
    iota = jax.lax.broadcasted_iota(jnp.int32, (B, S, VOCAB_P), 2)
    onehot = jnp.where(ids[:, :, None] == iota, 1.0, 0.0).astype(BF16)
    x = jnp.einsum('bsv,vh->bsh', onehot, wemb_ref[...],
                   preferred_element_type=F32)
    x = x + pemb_ref[...][None, :, :] + temb_ref[...][None, :, :]
    x = _ln_pad(x, elng_ref[...], elnb_ref[...])                    # (B,S,HP) f32

    # key-padding additive bias -- computed once for all layers
    add_mask = (1.0 - mask_ref[...]) * NEG_INF                      # (B,S)
    scale = 1.0 / math.sqrt(DH)

    # ---- encoder layers (dropout = eval-mode identity) ----
    for l in range(NLAYERS):
        xb = x.astype(BF16)
        qkv = jnp.einsum('bsh,hd->bsd', xb, wqkv_ref[l],
                         preferred_element_type=F32) + bqkv_ref[l]  # (B,S,3*HP)
        q = qkv[:, :, 0 * HP:1 * HP]                                # 128-aligned lane slices
        k = qkv[:, :, 1 * HP:2 * HP]
        v = qkv[:, :, 2 * HP:3 * HP]
        wo_l = wo_ref[l]                                            # (H, HP) bf16

        # per-head attention (short unrolled loop over the NH real heads only --
        # the padded lanes 64..127 of q/k/v are identically zero)
        proj = []
        for h in range(NH):
            sl = slice(h * DH, (h + 1) * DH)
            s = jnp.einsum('bqd,bkd->bqk',
                           q[:, :, sl].astype(BF16), k[:, :, sl].astype(BF16),
                           preferred_element_type=F32) * scale
            s = s + add_mask[:, None, :]
            s = s - jnp.max(s, axis=-1, keepdims=True)
            p = jnp.exp(s)
            p = p * pl.reciprocal(jnp.sum(p, axis=-1, keepdims=True), approx=True)
            ctx = jnp.einsum('bqk,bkd->bqd', p.astype(BF16), v[:, :, sl].astype(BF16),
                             preferred_element_type=F32)            # (B,S,DH)
            proj.append(jnp.einsum('bqd,dh->bqh', ctx.astype(BF16), wo_l[sl, :],
                                   preferred_element_type=F32))
        while len(proj) > 1:                                        # pairwise tree sum
            proj = [proj[i] + proj[i + 1] for i in range(0, len(proj), 2)]
        attn = proj[0] + bo_ref[l]

        h1 = _ln_pad(x + attn, ln1g_ref[l], ln1b_ref[l])
        f = jnp.einsum('bsh,hf->bsf', h1.astype(BF16), w1_ref[l],
                       preferred_element_type=F32) + b1_ref[l]
        # TODO(synk): HF BERT uses the exact erf GELU; tanh approximation used here.
        f = jax.nn.gelu(f, approximate=True)
        f = jnp.einsum('bsf,fh->bsh', f.astype(BF16), w2_ref[l],
                       preferred_element_type=F32) + b2_ref[l]
        x = _ln_pad(h1 + f, ln2g_ref[l], ln2b_ref[l])

    # ---- BERT pooler (tanh(W h_cls + b)) + BaseClassifier MLP + MSE loss ----
    cls = x[:, 0, :]                                                # [CLS] token, (B,HP)
    pooled = jnp.tanh(jnp.dot(cls.astype(BF16), wp_ref[...],
                              preferred_element_type=F32) + bp_ref[...])
    z = jnp.maximum(jnp.dot(pooled.astype(BF16), cw1_ref[...],
                            preferred_element_type=F32) + cb1_ref[...], 0.0)
    z = jnp.maximum(jnp.dot(z.astype(BF16), cw2_ref[...],
                            preferred_element_type=F32) + cb2_ref[...], 0.0)
    z = jnp.maximum(jnp.dot(z.astype(BF16), cw3_ref[...],
                            preferred_element_type=F32) + cb3_ref[...], 0.0)
    # final Linear(->1): weight kept transposed (1, CP) -> lane reduction on the VPU
    pred = jnp.sum(z * cw4t_ref[...], axis=-1, keepdims=True) + cb4_ref[...]   # (B,1)

    pred_ref[...] = pred
    pooled_ref[...] = pooled
    diff = pred - label_ref[...]                 # MSELoss(pred.squeeze(), label.squeeze())
    loss_ref[...] = jnp.reshape(jnp.mean(diff * diff), (1, 1))


# ---------------- wrapper ----------------

def text_pretrain_forward(params, token_ids, attn_mask, label):
    # TODO(synk): BertTokenizer / pretrained bert-base-uncased weights have no Pallas
    #             equivalent; deterministic token_ids + attention_mask stand in for
    #             tokenizer(text, padding=True, truncation=True, max_length=256).
    out_shape = (jax.ShapeDtypeStruct((B, 1), F32),      # pred
                 jax.ShapeDtypeStruct((B, HP), F32),     # pooler_output (lane-padded)
                 jax.ShapeDtypeStruct((1, 1), F32))      # MSE loss
    pred, pooled_pad, loss = pl.pallas_call(
        text_pretrain_kernel,
        out_shape=out_shape,
        # Single-block launch: all weights (~0.6 MiB of bf16) + activations stay resident
        # in VMEM, so no grid / BlockSpecs are needed.
        # TODO(synk): at real BERT-base dims, add a batch grid with
        #             dimension_semantics=("parallel",) (v7x megacore) and K-tile the FFN.
    )(token_ids.astype(jnp.int32),
      attn_mask.astype(F32),
      label.reshape(B, 1).astype(F32),
      params['word_emb'], params['pos_emb'][:S], params['type_emb'][:1],
      params['emb_ln_g'], params['emb_ln_b'],
      params['wqkv'], params['bqkv'], params['wo'], params['bo'],
      params['ln1g'], params['ln1b'], params['w1'], params['b1'],
      params['w2'], params['b2'], params['ln2g'], params['ln2b'],
      params['wp'], params['bp'],
      params['cw1'], params['cb1'], params['cw2'], params['cb2'],
      params['cw3'], params['cb3'], params['cw4t'], params['cb4'])
    return pred, pooled_pad[:, :H], loss[0, 0]


# ---------------- parameter construction (synthetic, lane-padded) ----------------

def _pad2(w, rows, cols, dtype=F32):
    out = jnp.zeros((rows, cols), F32).at[:w.shape[0], :w.shape[1]].set(w)
    return out.astype(dtype)


def init_params(key):
    ks = iter(jax.random.split(key, 64))

    def nrm(shape, scale=0.02):
        return scale * jax.random.normal(next(ks), shape, dtype=F32)

    names = ('wqkv', 'bqkv', 'wo', 'bo', 'ln1g', 'ln1b',
             'w1', 'b1', 'w2', 'b2', 'ln2g', 'ln2b')
    layers = {n: [] for n in names}
    for _ in range(NLAYERS):
        wqkv = jnp.concatenate(
            [_pad2(nrm((H, H)), HP, HP) for _ in range(3)], axis=1)      # (HP, 3*HP)
        layers['wqkv'].append(wqkv.astype(BF16))
        layers['bqkv'].append(jnp.zeros((1, 3 * HP), F32))
        layers['wo'].append(_pad2(nrm((H, H)), H, HP, BF16))
        layers['bo'].append(jnp.zeros((1, HP), F32))
        layers['ln1g'].append(_pad2(jnp.ones((1, H), F32), 1, HP))
        layers['ln1b'].append(jnp.zeros((1, HP), F32))
        layers['w1'].append(_pad2(nrm((H, FFN)), HP, FFN, BF16))
        layers['b1'].append(jnp.zeros((1, FFN), F32))
        layers['w2'].append(_pad2(nrm((FFN, H)), FFN, HP, BF16))
        layers['b2'].append(jnp.zeros((1, HP), F32))
        layers['ln2g'].append(_pad2(jnp.ones((1, H), F32), 1, HP))
        layers['ln2b'].append(jnp.zeros((1, HP), F32))

    p = {n: jnp.stack(v, axis=0) for n, v in layers.items()}
    p.update({
        # embeddings (zero-padded to lane-dense widths; padded rows/cols are never hit)
        'word_emb': _pad2(nrm((VOCAB, H)), VOCAB_P, HP, BF16),
        'pos_emb': _pad2(nrm((MAXPOS, H)), MAXPOS, HP),
        'type_emb': _pad2(nrm((2, H)), 2, HP),
        'emb_ln_g': _pad2(jnp.ones((1, H), F32), 1, HP),
        'emb_ln_b': jnp.zeros((1, HP), F32),
        # pooler
        'wp': _pad2(nrm((H, H)), HP, HP, BF16),
        'bp': jnp.zeros((1, HP), F32),
        # BaseClassifier(input=H, hidden=[H/2, H/4, H/8], output=1)
        'cw1': _pad2(nrm((H, CLS_HIDDEN[0])), HP, CP, BF16),
        'cb1': jnp.zeros((1, CP), F32),
        'cw2': _pad2(nrm((CLS_HIDDEN[0], CLS_HIDDEN[1])), CP, CP, BF16),
        'cb2': jnp.zeros((1, CP), F32),
        'cw3': _pad2(nrm((CLS_HIDDEN[1], CLS_HIDDEN[2])), CP, CP, BF16),
        'cb3': jnp.zeros((1, CP), F32),
        'cw4t': _pad2(nrm((1, CLS_HIDDEN[2])), 1, CP),     # final Linear weight, transposed
        'cb4': jnp.zeros((1, 1), F32),
    })
    return p


if __name__ == "__main__":
    key = jax.random.PRNGKey(0)
    pkey, tkey, lkey = jax.random.split(key, 3)
    params = init_params(pkey)

    token_ids = jax.random.randint(tkey, (B, S), 0, VOCAB)    # deterministic "tokenized text"
    attn_mask = jnp.ones((B, S), F32)                         # all tokens valid (no padding)
    label = jax.random.normal(lkey, (B,), F32)                # regression targets

    pred, pooled, loss = text_pretrain_forward(params, token_ids, attn_mask, label)
    jax.block_until_ready((pred, pooled, loss))
    assert pred.shape == (B, 1) and pooled.shape == (B, H) and loss.shape == ()
    assert bool(jnp.isfinite(loss))
    print("KERNEL_OK")
</pallas_src>

<mosaic_0001>
module attributes {stable_mosaic.version = 11 : i64} {
  func.func @text_pretrain_kernel(%arg0: memref<2x8xi32, #tpu.memory_space<vmem>>, %arg1: memref<2x8xf32, #tpu.memory_space<vmem>>, %arg2: memref<2x1xf32, #tpu.memory_space<vmem>>, %arg3: memref<128x128xbf16, #tpu.memory_space<vmem>>, %arg4: memref<8x128xf32, #tpu.memory_space<vmem>>, %arg5: memref<1x128xf32, #tpu.memory_space<vmem>>, %arg6: memref<1x128xf32, #tpu.memory_space<vmem>>, %arg7: memref<1x128xf32, #tpu.memory_space<vmem>>, %arg8: memref<2x128x384xbf16, #tpu.memory_space<vmem>>, %arg9: memref<2x1x384xf32, #tpu.memory_space<vmem>>, %arg10: memref<2x64x128xbf16, #tpu.memory_space<vmem>>, %arg11: memref<2x1x128xf32, #tpu.memory_space<vmem>>, %arg12: memref<2x1x128xf32, #tpu.memory_space<vmem>>, %arg13: memref<2x1x128xf32, #tpu.memory_space<vmem>>, %arg14: memref<2x128x256xbf16, #tpu.memory_space<vmem>>, %arg15: memref<2x1x256xf32, #tpu.memory_space<vmem>>, %arg16: memref<2x256x128xbf16, #tpu.memory_space<vmem>>, %arg17: memref<2x1x128xf32, #tpu.memory_space<vmem>>, %arg18: memref<2x1x128xf32, #tpu.memory_space<vmem>>, %arg19: memref<2x1x128xf32, #tpu.memory_space<vmem>>, %arg20: memref<128x128xbf16, #tpu.memory_space<vmem>>, %arg21: memref<1x128xf32, #tpu.memory_space<vmem>>, %arg22: memref<128x128xbf16, #tpu.memory_space<vmem>>, %arg23: memref<1x128xf32, #tpu.memory_space<vmem>>, %arg24: memref<128x128xbf16, #tpu.memory_space<vmem>>, %arg25: memref<1x128xf32, #tpu.memory_space<vmem>>, %arg26: memref<128x128xbf16, #tpu.memory_space<vmem>>, %arg27: memref<1x128xf32, #tpu.memory_space<vmem>>, %arg28: memref<1x128xf32, #tpu.memory_space<vmem>>, %arg29: memref<1x1xf32, #tpu.memory_space<vmem>>, %arg30: memref<2x1xf32, #tpu.memory_space<vmem>>, %arg31: memref<2x128xf32, #tpu.memory_space<vmem>>, %arg32: memref<1x1xf32, #tpu.memory_space<vmem>>) attributes {dimension_semantics = [], scalar_prefetch = 0 : i64, scratch_operands = 0 : i64, tpu.core_type = #tpu.core_type<tc>} {
    %c0 = arith.constant 0 : index
    %c0_0 = arith.constant 0 : index
    %0 = vector.load %arg0[%c0, %c0_0] : memref<2x8xi32, #tpu.memory_space<vmem>>, vector<2x8xi32>
    %1 = tpu.iota {dimensions = array<i32: 2>} : vector<2x8x128xi32>
    %2 = vector.shape_cast %0 : vector<2x8xi32> to vector<2x8x1xi32>
    %3 = vector.broadcast %2 : vector<2x8x1xi32> to vector<2x8x128xi32>
    %4 = arith.cmpi eq, %3, %1 : vector<2x8x128xi32>
    %cst = arith.constant 1.000000e+00 : f32
    %cst_1 = arith.constant 0.000000e+00 : f32
    %5 = vector.broadcast %cst : f32 to vector<2x8x128xf32>
    %6 = vector.broadcast %cst_1 : f32 to vector<2x8x128xf32>
    %7 = arith.select %4, %5, %6 : vector<2x8x128xi1>, vector<2x8x128xf32>
    %8 = arith.truncf %7 : vector<2x8x128xf32> to vector<2x8x128xbf16>
    %c0_2 = arith.constant 0 : index
    %c0_3 = arith.constant 0 : index
    %9 = vector.load %arg3[%c0_2, %c0_3] : memref<128x128xbf16, #tpu.memory_space<vmem>>, vector<128x128xbf16>
    "tpu.trace_start"() <{level = 10 : i32, message = "bsv,vh->bsh"}> : () -> ()
    %cst_4 = arith.constant dense<0.000000e+00> : vector<2x8x128xf32>
    %10 = tpu.matmul %8, %9, %cst_4 {dimension_numbers = #tpu.dot_dimension_numbers<[2], [0], [0, 1], [1], [0, 0, 0, 1, 1, 1], [], []>} : vector<2x8x128xbf16>, vector<128x128xbf16>, vector<2x8x128xf32> -> vector<2x8x128xf32>
    "tpu.trace_stop"() : () -> ()
    %c0_5 = arith.constant 0 : index
    %c0_6 = arith.constant 0 : index
    %11 = vector.load %arg4[%c0_5, %c0_6] : memref<8x128xf32, #tpu.memory_space<vmem>>, vector<8x128xf32>
    %12 = vector.shape_cast %11 : vector<8x128xf32> to vector<1x8x128xf32>
    %13 = vector.broadcast %12 : vector<1x8x128xf32> to vector<2x8x128xf32>
    %14 = arith.addf %10, %13 : vector<2x8x128xf32>
    %c0_7 = arith.constant 0 : index
    %c0_8 = arith.constant 0 : index
    %15 = vector.load %arg5[%c0_7, %c0_8] : memref<1x128xf32, #tpu.memory_space<vmem>>, vector<1x128xf32>
    %16 = vector.shape_cast %15 : vector<1x128xf32> to vector<1x1x128xf32>
    %17 = vector.broadcast %16 : vector<1x1x128xf32> to vector<2x8x128xf32>
    %18 = arith.addf %14, %17 : vector<2x8x128xf32>
    %c0_9 = arith.constant 0 : index
    %c0_10 = arith.constant 0 : index
    %19 = vector.load %arg6[%c0_9, %c0_10] : memref<1x128xf32, #tpu.memory_space<vmem>>, vector<1x128xf32>
    %c0_11 = arith.constant 0 : index
    %c0_12 = arith.constant 0 : index
    %20 = vector.load %arg7[%c0_11, %c0_12] : memref<1x128xf32, #tpu.memory_space<vmem>>, vector<1x128xf32>
    %cst_13 = arith.constant dense<0.000000e+00> : vector<2x8xf32>
    %21 = vector.multi_reduction <add>, %18, %cst_13 [2] : vector<2x8x128xf32> to vector<2x8xf32>
    %22 = vector.shape_cast %21 : vector<2x8xf32> to vector<2x8x1xf32>
    %cst_14 = arith.constant 1.562500e-02 : f32
    %23 = vector.broadcast %cst_14 : f32 to vector<2x8x1xf32>
    %24 = arith.mulf %22, %23 : vector<2x8x1xf32>
    %25 = arith.mulf %18, %18 : vector<2x8x128xf32>
    %cst_15 = arith.constant dense<0.000000e+00> : vector<2x8xf32>
    %26 = vector.multi_reduction <add>, %25, %cst_15 [2] : vector<2x8x128xf32> to vector<2x8xf32>
    %27 = vector.shape_cast %26 : vector<2x8xf32> to vector<2x8x1xf32>
    %cst_16 = arith.constant 1.562500e-02 : f32
    %28 = vector.broadcast %cst_16 : f32 to vector<2x8x1xf32>
    %29 = arith.mulf %27, %28 : vector<2x8x1xf32>
    %30 = arith.mulf %24, %24 : vector<2x8x1xf32>
    %31 = arith.subf %29, %30 : vector<2x8x1xf32>
    %cst_17 = arith.constant 0.000000e+00 : f32
    %32 = vector.broadcast %cst_17 : f32 to vector<2x8x1xf32>
    %33 = arith.maximumf %31, %32 : vector<2x8x1xf32>
    %34 = vector.broadcast %24 : vector<2x8x1xf32> to vector<2x8x128xf32>
    %35 = arith.subf %18, %34 : vector<2x8x128xf32>
    %cst_18 = arith.constant 9.99999996E-13 : f32
    %36 = vector.broadcast %cst_18 : f32 to vector<2x8x1xf32>
    %37 = arith.addf %33, %36 : vector<2x8x1xf32>
    %38 = math.rsqrt %37 : vector<2x8x1xf32>
    %39 = vector.broadcast %38 : vector<2x8x1xf32> to vector<2x8x128xf32>
    %40 = arith.mulf %35, %39 : vector<2x8x128xf32>
    %41 = vector.shape_cast %19 : vector<1x128xf32> to vector<1x1x128xf32>
    %42 = vector.broadcast %41 : vector<1x1x128xf32> to vector<2x8x128xf32>
    %43 = arith.mulf %40, %42 : vector<2x8x128xf32>
    %44 = vector.shape_cast %20 : vector<1x128xf32> to vector<1x1x128xf32>
    %45 = vector.broadcast %44 : vector<1x1x128xf32> to vector<2x8x128xf32>
    %46 = arith.addf %43, %45 : vector<2x8x128xf32>
    %c0_19 = arith.constant 0 : index
    %c0_20 = arith.constant 0 : index
    %47 = vector.load %arg1[%c0_19, %c0_20] : memref<2x8xf32, #tpu.memory_space<vmem>>, vector<2x8xf32>
    %cst_21 = arith.constant 1.000000e+00 : f32
    %48 = vector.broadcast %cst_21 : f32 to vector<2x8xf32>
    %49 = arith.subf %48, %47 : vector<2x8xf32>
    %cst_22 = arith.constant -1.000000e+09 : f32
    %50 = vector.broadcast %cst_22 : f32 to vector<2x8xf32>
    %51 = arith.mulf %49, %50 : vector<2x8xf32>
    %52 = arith.truncf %46 : vector<2x8x128xf32> to vector<2x8x128xbf16>
    %c0_23 = arith.constant 0 : index
    %c0_24 = arith.constant 0 : index
    %c0_25 = arith.constant 0 : index
    %53 = vector.load %arg8[%c0_23, %c0_24, %c0_25] : memref<2x128x384xbf16, #tpu.memory_space<vmem>>, vector<1x128x384xbf16>
    %54 = vector.shape_cast %53 : vector<1x128x384xbf16> to vector<128x384xbf16>
    "tpu.trace_start"() <{level = 10 : i32, message = "bsh,hd->bsd"}> : () -> ()
    %cst_26 = arith.constant dense<0.000000e+00> : vector<2x8x384xf32>
    %55 = tpu.matmul %52, %54, %cst_26 {dimension_numbers = #tpu.dot_dimension_numbers<[2], [0], [0, 1], [1], [0, 0, 0, 1, 1, 1], [], []>} : vector<2x8x128xbf16>, vector<128x384xbf16>, vector<2x8x384xf32> -> vector<2x8x384xf32>
    "tpu.trace_stop"() : () -> ()
    %c0_27 = arith.constant 0 : index
    %c0_28 = arith.constant 0 : index
    %c0_29 = arith.constant 0 : index
    %56 = vector.load %arg9[%c0_27, %c0_28, %c0_29] : memref<2x1x384xf32, #tpu.memory_space<vmem>>, vector<1x1x384xf32>
    %57 = vector.shape_cast %56 : vector<1x1x384xf32> to vector<1x384xf32>
    %58 = vector.shape_cast %57 : vector<1x384xf32> to vector<1x1x384xf32>
    %59 = vector.broadcast %58 : vector<1x1x384xf32> to vector<2x8x384xf32>
    %60 = arith.addf %55, %59 : vector<2x8x384xf32>
    %61 = vector.extract_strided_slice %60 {offsets = [0, 0, 0], sizes = [2, 8, 128], strides = [1, 1, 1]} : vector<2x8x384xf32> to vector<2x8x128xf32>
    %62 = vector.extract_strided_slice %60 {offsets = [0, 0, 128], sizes = [2, 8, 128], strides = [1, 1, 1]} : vector<2x8x384xf32> to vector<2x8x128xf32>
    %63 = vector.extract_strided_slice %60 {offsets = [0, 0, 256], sizes = [2, 8, 128], strides = [1, 1, 1]} : vector<2x8x384xf32> to vector<2x8x128xf32>
    %c0_30 = arith.constant 0 : index
    %c0_31 = arith.constant 0 : index
    %c0_32 = arith.constant 0 : index
    %64 = vector.load %arg10[%c0_30, %c0_31, %c0_32] : memref<2x64x128xbf16, #tpu.memory_space<vmem>>, vector<1x64x128xbf16>
    %65 = vector.shape_cast %64 : vector<1x64x128xbf16> to vector<64x128xbf16>
    %66 = vector.extract_strided_slice %61 {offsets = [0, 0, 0], sizes = [2, 8, 16], strides = [1, 1, 1]} : vector<2x8x128xf32> to vector<2x8x16xf32>
    %67 = arith.truncf %66 : vector<2x8x16xf32> to vector<2x8x16xbf16>
    %68 = vector.extract_strided_slice %62 {offsets = [0, 0, 0], sizes = [2, 8, 16], strides = [1, 1, 1]} : vector<2x8x128xf32> to vector<2x8x16xf32>
    %69 = arith.truncf %68 : vector<2x8x16xf32> to vector<2x8x16xbf16>
    "tpu.trace_start"() <{level = 10 : i32, message = "bqd,bkd->bqk"}> : () -> ()
    %cst_33 = arith.constant dense<0.000000e+00> : vector<2x8x8xf32>
    %70 = tpu.matmul %67, %69, %cst_33 {dimension_numbers = #tpu.dot_dimension_numbers<[2], [2], [1], [1], [0, 0, 0, 1, 1, 1], [0], [0]>} : vector<2x8x16xbf16>, vector<2x8x16xbf16>, vector<2x8x8xf32> -> vector<2x8x8xf32>
    "tpu.trace_stop"() : () -> ()
    %cst_34 = arith.constant 2.500000e-01 : f32
    %71 = vector.broadcast %cst_34 : f32 to vector<2x8x8xf32>
    %72 = arith.mulf %70, %71 : vector<2x8x8xf32>
    %73 = vector.shape_cast %51 : vector<2x8xf32> to vector<2x1x8xf32>
    %74 = vector.broadcast %73 : vector<2x1x8xf32> to vector<2x8x8xf32>
    %75 = arith.addf %72, %74 : vector<2x8x8xf32>
    %cst_35 = arith.constant dense<0xFF800000> : vector<2x8xf32>
    %76 = vector.multi_reduction <maximumf>, %75, %cst_35 [2] : vector<2x8x8xf32> to vector<2x8xf32>
    %77 = vector.shape_cast %76 : vector<2x8xf32> to vector<2x8x1xf32>
    %78 = vector.broadcast %77 : vector<2x8x1xf32> to vector<2x8x8xf32>
    %79 = arith.subf %75, %78 : vector<2x8x8xf32>
    %80 = math.exp %79 : vector<2x8x8xf32>
    %cst_36 = arith.constant dense<0.000000e+00> : vector<2x8xf32>
    %81 = vector.multi_reduction <add>, %80, %cst_36 [2] : vector<2x8x8xf32> to vector<2x8xf32>
    %82 = vector.shape_cast %81 : vector<2x8xf32> to vector<2x8x1xf32>
    %83 = tpu.reciprocal %82 {approx = true} : vector<2x8x1xf32> -> vector<2x8x1xf32>
    %84 = vector.broadcast %83 : vector<2x8x1xf32> to vector<2x8x8xf32>
    %85 = arith.mulf %80, %84 : vector<2x8x8xf32>
    %86 = arith.truncf %85 : vector<2x8x8xf32> to vector<2x8x8xbf16>
    %87 = vector.extract_strided_slice %63 {offsets = [0, 0, 0], sizes = [2, 8, 16], strides = [1, 1, 1]} : vector<2x8x128xf32> to vector<2x8x16xf32>
    %88 = arith.truncf %87 : vector<2x8x16xf32> to vector<2x8x16xbf16>
    "tpu.trace_start"() <{level = 10 : i32, message = "bqk,bkd->bqd"}> : () -> ()
    %cst_37 = arith.constant dense<0.000000e+00> : vector<2x8x16xf32>
    %89 = tpu.matmul %86, %88, %cst_37 {dimension_numbers = #tpu.dot_dimension_numbers<[2], [1], [1], [2], [0, 0, 0, 1, 1, 2], [0], [0]>} : vector<2x8x8xbf16>, vector<2x8x16xbf16>, vector<2x8x16xf32> -> vector<2x8x16xf32>
    "tpu.trace_stop"() : () -> ()
    %90 = arith.truncf %89 : vector<2x8x16xf32> to vector<2x8x16xbf16>
    %91 = vector.extract_strided_slice %65 {offsets = [0, 0], sizes = [16, 128], strides = [1, 1]} : vector<64x128xbf16> to vector<16x128xbf16>
    "tpu.trace_start"() <{level = 10 : i32, message = "bqd,dh->bqh"}> : () -> ()
    %cst_38 = arith.constant dense<0.000000e+00> : vector<2x8x128xf32>
    %92 = tpu.matmul %90, %91, %cst_38 {dimension_numbers = #tpu.dot_dimension_numbers<[2], [0], [0, 1], [1], [0, 0, 0, 1, 1, 1], [], []>} : vector<2x8x16xbf16>, vector<16x128xbf16>, vector<2x8x128xf32> -> vector<2x8x128xf32>
    "tpu.trace_stop"() : () -> ()
    %93 = vector.extract_strided_slice %61 {offsets = [0, 0, 16], sizes = [2, 8, 16], strides = [1, 1, 1]} : vector<2x8x128xf32> to vector<2x8x16xf32>
    %94 = arith.truncf %93 : vector<2x8x16xf32> to vector<2x8x16xbf16>
    %95 = vector.extract_strided_slice %62 {offsets = [0, 0, 16], sizes = [2, 8, 16], strides = [1, 1, 1]} : vector<2x8x128xf32> to vector<2x8x16xf32>
    %96 = arith.truncf %95 : vector<2x8x16xf32> to vector<2x8x16xbf16>
    "tpu.trace_start"() <{level = 10 : i32, message = "bqd,bkd->bqk"}> : () -> ()
    %cst_39 = arith.constant dense<0.000000e+00> : vector<2x8x8xf32>
    %97 = tpu.matmul %94, %96, %cst_39 {dimension_numbers = #tpu.dot_dimension_numbers<[2], [2], [1], [1], [0, 0, 0, 1, 1, 1], [0], [0]>} : vector<2x8x16xbf16>, vector<2x8x16xbf16>, vector<2x8x8xf32> -> vector<2x8x8xf32>
    "tpu.trace_stop"() : () -> ()
    %cst_40 = arith.constant 2.500000e-01 : f32
    %98 = vector.broadcast %cst_40 : f32 to vector<2x8x8xf32>
    %99 = arith.mulf %97, %98 : vector<2x8x8xf32>
    %100 = vector.shape_cast %51 : vector<2x8xf32> to vector<2x1x8xf32>
    %101 = vector.broadcast %100 : vector<2x1x8xf32> to vector<2x8x8xf32>
    %102 = arith.addf %99, %101 : vector<2x8x8xf32>
    %cst_41 = arith.constant dense<0xFF800000> : vector<2x8xf32>
    %103 = vector.multi_reduction <maximumf>, %102, %cst_41 [2] : vector<2x8x8xf32> to vector<2x8xf32>
    %104 = vector.shape_cast %103 : vector<2x8xf32> to vector<2x8x1xf32>
    %105 = vector.broadcast %104 : vector<2x8x1xf32> to vector<2x8x8xf32>
    %106 = arith.subf %102, %105 : vector<2x8x8xf32>
    %107 = math.exp %106 : vector<2x8x8xf32>
    %cst_42 = arith.constant dense<0.000000e+00> : vector<2x8xf32>
    %108 = vector.multi_reduction <add>, %107, %cst_42 [2] : vector<2x8x8xf32> to vector<2x8xf32>
    %109 = vector.shape_cast %108 : vector<2x8xf32> to vector<2x8x1xf32>
    %110 = tpu.reciprocal %109 {approx = true} : vector<2x8x1xf32> -> vector<2x8x1xf32>
    %111 = vector.broadcast %110 : vector<2x8x1xf32> to vector<2x8x8xf32>
    %112 = arith.mulf %107, %111 : vector<2x8x8xf32>
    %113 = arith.truncf %112 : vector<2x8x8xf32> to vector<2x8x8xbf16>
    %114 = vector.extract_strided_slice %63 {offsets = [0, 0, 16], sizes = [2, 8, 16], strides = [1, 1, 1]} : vector<2x8x128xf32> to vector<2x8x16xf32>
    %115 = arith.truncf %114 : vector<2x8x16xf32> to vector<2x8x16xbf16>
    "tpu.trace_start"() <{level = 10 : i32, message = "bqk,bkd->bqd"}> : () -> ()
    %cst_43 = arith.constant dense<0.000000e+00> : vector<2x8x16xf32>
    %116 = tpu.matmul %113, %115, %cst_43 {dimension_numbers = #tpu.dot_dimension_numbers<[2], [1], [1], [2], [0, 0, 0, 1, 1, 2], [0], [0]>} : vector<2x8x8xbf16>, vector<2x8x16xbf16>, vector<2x8x16xf32> -> vector<2x8x16xf32>
    "tpu.trace_stop"() : () -> ()
    %117 = arith.truncf %116 : vector<2x8x16xf32> to vector<2x8x16xbf16>
    %118 = vector.extract_strided_slice %65 {offsets = [16, 0], sizes = [16, 128], strides = [1, 1]} : vector<64x128xbf16> to vector<16x128xbf16>
    "tpu.trace_start"() <{level = 10 : i32, message = "bqd,dh->bqh"}> : () -> ()
    %cst_44 = arith.constant dense<0.000000e+00> : vector<2x8x128xf32>
    %119 = tpu.matmul %117, %118, %cst_44 {dimension_numbers = #tpu.dot_dimension_numbers<[2], [0], [0, 1], [1], [0, 0, 0, 1, 1, 1], [], []>} : vector<2x8x16xbf16>, vector<16x128xbf16>, vector<2x8x128xf32> -> vector<2x8x128xf32>
    "tpu.trace_stop"() : () -> ()
    %120 = vector.extract_strided_slice %61 {offsets = [0, 0, 32], sizes = [2, 8, 16], strides = [1, 1, 1]} : vector<2x8x128xf32> to vector<2x8x16xf32>
    %121 = arith.truncf %120 : vector<2x8x16xf32> to vector<2x8x16xbf16>
    %122 = vector.extract_strided_slice %62 {offsets = [0, 0, 32], sizes = [2, 8, 16], strides = [1, 1, 1]} : vector<2x8x128xf32> to vector<2x8x16xf32>
    %123 = arith.truncf %122 : vector<2x8x16xf32> to vector<2x8x16xbf16>
    "tpu.trace_start"() <{level = 10 : i32, message = "bqd,bkd->bqk"}> : () -> ()
    %cst_45 = arith.constant dense<0.000000e+00> : vector<2x8x8xf32>
    %124 = tpu.matmul %121, %123, %cst_45 {dimension_numbers = #tpu.dot_dimension_numbers<[2], [2], [1], [1], [0, 0, 0, 1, 1, 1], [0], [0]>} : vector<2x8x16xbf16>, vector<2x8x16xbf16>, vector<2x8x8xf32> -> vector<2x8x8xf32>
    "tpu.trace_stop"() : () -> ()
    %cst_46 = arith.constant 2.500000e-01 : f32
    %125 = vector.broadcast %cst_46 : f32 to vector<2x8x8xf32>
    %126 = arith.mulf %124, %125 : vector<2x8x8xf32>
    %127 = vector.shape_cast %51 : vector<2x8xf32> to vector<2x1x8xf32>
    %128 = vector.broadcast %127 : vector<2x1x8xf32> to vector<2x8x8xf32>
    %129 = arith.addf %126, %128 : vector<2x8x8xf32>
    %cst_47 = arith.constant dense<0xFF800000> : vector<2x8xf32>
    %130 = vector.multi_reduction <maximumf>, %129, %cst_47 [2] : vector<2x8x8xf32> to vector<2x8xf32>
    %131 = vector.shape_cast %130 : vector<2x8xf32> to vector<2x8x1xf32>
    %132 = vector.broadcast %131 : vector<2x8x1xf32> to vector<2x8x8xf32>
    %133 = arith.subf %129, %132 : vector<2x8x8xf32>
    %134 = math.exp %133 : vector<2x8x8xf32>
    %cst_48 = arith.constant dense<0.000000e+00> : vector<2x8xf32>
    %135 = vector.multi_reduction <add>, %134, %cst_48 [2] : vector<2x8x8xf32> to vector<2x8xf32>
    %136 = vector.shape_cast %135 : vector<2x8xf32> to vector<2x8x1xf32>
    %137 = tpu.reciprocal %136 {approx = true} : vector<2x8x1xf32> -> vector<2x8x1xf32>
    %138 = vector.broadcast %137 : vector<2x8x1xf32> to vector<2x8x8xf32>
    %139 = arith.mulf %134, %138 : vector<2x8x8xf32>
    %140 = arith.truncf %139 : vector<2x8x8xf32> to vector<2x8x8xbf16>
    %141 = vector.extract_strided_slice %63 {offsets = [0, 0, 32], sizes = [2, 8, 16], strides = [1, 1, 1]} : vector<2x8x128xf32> to vector<2x8x16xf32>
    %142 = arith.truncf %141 : vector<2x8x16xf32> to vector<2x8x16xbf16>
    "tpu.trace_start"() <{level = 10 : i32, message = "bqk,bkd->bqd"}> : () -> ()
    %cst_49 = arith.constant dense<0.000000e+00> : vector<2x8x16xf32>
    %143 = tpu.matmul %140, %142, %cst_49 {dimension_numbers = #tpu.dot_dimension_numbers<[2], [1], [1], [2], [0, 0, 0, 1, 1, 2], [0], [0]>} : vector<2x8x8xbf16>, vector<2x8x16xbf16>, vector<2x8x16xf32> -> vector<2x8x16xf32>
    "tpu.trace_stop"() : () -> ()
    %144 = arith.truncf %143 : vector<2x8x16xf32> to vector<2x8x16xbf16>
    %145 = vector.extract_strided_slice %65 {offsets = [32, 0], sizes = [16, 128], strides = [1, 1]} : vector<64x128xbf16> to vector<16x128xbf16>
    "tpu.trace_start"() <{level = 10 : i32, message = "bqd,dh->bqh"}> : () -> ()
    %cst_50 = arith.constant dense<0.000000e+00> : vector<2x8x128xf32>
    %146 = tpu.matmul %144, %145, %cst_50 {dimension_numbers = #tpu.dot_dimension_numbers<[2], [0], [0, 1], [1], [0, 0, 0, 1, 1, 1], [], []>} : vector<2x8x16xbf16>, vector<16x128xbf16>, vector<2x8x128xf32> -> vector<2x8x128xf32>
    "tpu.trace_stop"() : () -> ()
    %147 = vector.extract_strided_slice %61 {offsets = [0, 0, 48], sizes = [2, 8, 16], strides = [1, 1, 1]} : vector<2x8x128xf32> to vector<2x8x16xf32>
    %148 = arith.truncf %147 : vector<2x8x16xf32> to vector<2x8x16xbf16>
    %149 = vector.extract_strided_slice %62 {offsets = [0, 0, 48], sizes = [2, 8, 16], strides = [1, 1, 1]} : vector<2x8x128xf32> to vector<2x8x16xf32>
    %150 = arith.truncf %149 : vector<2x8x16xf32> to vector<2x8x16xbf16>
    "tpu.trace_start"() <{level = 10 : i32, message = "bqd,bkd->bqk"}> : () -> ()
    %cst_51 = arith.constant dense<0.000000e+00> : vector<2x8x8xf32>
    %151 = tpu.matmul %148, %150, %cst_51 {dimension_numbers = #tpu.dot_dimension_numbers<[2], [2], [1], [1], [0, 0, 0, 1, 1, 1], [0], [0]>} : vector<2x8x16xbf16>, vector<2x8x16xbf16>, vector<2x8x8xf32> -> vector<2x8x8xf32>
    "tpu.trace_stop"() : () -> ()
    %cst_52 = arith.constant 2.500000e-01 : f32
    %152 = vector.broadcast %cst_52 : f32 to vector<2x8x8xf32>
    %153 = arith.mulf %151, %152 : vector<2x8x8xf32>
    %154 = vector.shape_cast %51 : vector<2x8xf32> to vector<2x1x8xf32>
    %155 = vector.broadcast %154 : vector<2x1x8xf32> to vector<2x8x8xf32>
    %156 = arith.addf %153, %155 : vector<2x8x8xf32>
    %cst_53 = arith.constant dense<0xFF800000> : vector<2x8xf32>
    %157 = vector.multi_reduction <maximumf>, %156, %cst_53 [2] : vector<2x8x8xf32> to vector<2x8xf32>
    %158 = vector.shape_cast %157 : vector<2x8xf32> to vector<2x8x1xf32>
    %159 = vector.broadcast %158 : vector<2x8x1xf32> to vector<2x8x8xf32>
    %160 = arith.subf %156, %159 : vector<2x8x8xf32>
    %161 = math.exp %160 : vector<2x8x8xf32>
    %cst_54 = arith.constant dense<0.000000e+00> : vector<2x8xf32>
    %162 = vector.multi_reduction <add>, %161, %cst_54 [2] : vector<2x8x8xf32> to vector<2x8xf32>
    %163 = vector.shape_cast %162 : vector<2x8xf32> to vector<2x8x1xf32>
    %164 = tpu.reciprocal %163 {approx = true} : vector<2x8x1xf32> -> vector<2x8x1xf32>
    %165 = vector.broadcast %164 : vector<2x8x1xf32> to vector<2x8x8xf32>
    %166 = arith.mulf %161, %165 : vector<2x8x8xf32>
    %167 = arith.truncf %166 : vector<2x8x8xf32> to vector<2x8x8xbf16>
    %168 = vector.extract_strided_slice %63 {offsets = [0, 0, 48], sizes = [2, 8, 16], strides = [1, 1, 1]} : vector<2x8x128xf32> to vector<2x8x16xf32>
    %169 = arith.truncf %168 : vector<2x8x16xf32> to vector<2x8x16xbf16>
    "tpu.trace_start"() <{level = 10 : i32, message = "bqk,bkd->bqd"}> : () -> ()
    %cst_55 = arith.constant dense<0.000000e+00> : vector<2x8x16xf32>
    %170 = tpu.matmul %167, %169, %cst_55 {dimension_numbers = #tpu.dot_dimension_numbers<[2], [1], [1], [2], [0, 0, 0, 1, 1, 2], [0], [0]>} : vector<2x8x8xbf16>, vector<2x8x16xbf16>, vector<2x8x16xf32> -> vector<2x8x16xf32>
    "tpu.trace_stop"() : () -> ()
    %171 = arith.truncf %170 : vector<2x8x16xf32> to vector<2x8x16xbf16>
    %172 = vector.extract_strided_slice %65 {offsets = [48, 0], sizes = [16, 128], strides = [1, 1]} : vector<64x128xbf16> to vector<16x128xbf16>
    "tpu.trace_start"() <{level = 10 : i32, message = "bqd,dh->bqh"}> : () -> ()
    %cst_56 = arith.constant dense<0.000000e+00> : vector<2x8x128xf32>
    %173 = tpu.matmul %171, %172, %cst_56 {dimension_numbers = #tpu.dot_dimension_numbers<[2], [0], [0, 1], [1], [0, 0, 0, 1, 1, 1], [], []>} : vector<2x8x16xbf16>, vector<16x128xbf16>, vector<2x8x128xf32> -> vector<2x8x128xf32>
    "tpu.trace_stop"() : () -> ()
    %174 = arith.addf %92, %119 : vector<2x8x128xf32>
    %175 = arith.addf %146, %173 : vector<2x8x128xf32>
    %176 = arith.addf %174, %175 : vector<2x8x128xf32>
    %c0_57 = arith.constant 0 : index
    %c0_58 = arith.constant 0 : index
    %c0_59 = arith.constant 0 : index
    %177 = vector.load %arg11[%c0_57, %c0_58, %c0_59] : memref<2x1x128xf32, #tpu.memory_space<vmem>>, vector<1x1x128xf32>
    %178 = vector.shape_cast %177 : vector<1x1x128xf32> to vector<1x128xf32>
    %179 = vector.shape_cast %178 : vector<1x128xf32> to vector<1x1x128xf32>
    %180 = vector.broadcast %179 : vector<1x1x128xf32> to vector<2x8x128xf32>
    %181 = arith.addf %176, %180 : vector<2x8x128xf32>
    %182 = arith.addf %46, %181 : vector<2x8x128xf32>
    %c0_60 = arith.constant 0 : index
    %c0_61 = arith.constant 0 : index
    %c0_62 = arith.constant 0 : index
    %183 = vector.load %arg12[%c0_60, %c0_61, %c0_62] : memref<2x1x128xf32, #tpu.memory_space<vmem>>, vector<1x1x128xf32>
    %184 = vector.shape_cast %183 : vector<1x1x128xf32> to vector<1x128xf32>
    %c0_63 = arith.constant 0 : index
    %c0_64 = arith.constant 0 : index
    %c0_65 = arith.constant 0 : index
    %185 = vector.load %arg13[%c0_63, %c0_64, %c0_65] : memref<2x1x128xf32, #tpu.memory_space<vmem>>, vector<1x1x128xf32>
    %186 = vector.shape_cast %185 : vector<1x1x128xf32> to vector<1x128xf32>
    %cst_66 = arith.constant dense<0.000000e+00> : vector<2x8xf32>
    %187 = vector.multi_reduction <add>, %182, %cst_66 [2] : vector<2x8x128xf32> to vector<2x8xf32>
    %188 = vector.shape_cast %187 : vector<2x8xf32> to vector<2x8x1xf32>
    %cst_67 = arith.constant 1.562500e-02 : f32
    %189 = vector.broadcast %cst_67 : f32 to vector<2x8x1xf32>
    %190 = arith.mulf %188, %189 : vector<2x8x1xf32>
    %191 = arith.mulf %182, %182 : vector<2x8x128xf32>
    %cst_68 = arith.constant dense<0.000000e+00> : vector<2x8xf32>
    %192 = vector.multi_reduction <add>, %191, %cst_68 [2] : vector<2x8x128xf32> to vector<2x8xf32>
    %193 = vector.shape_cast %192 : vector<2x8xf32> to vector<2x8x1xf32>
    %cst_69 = arith.constant 1.562500e-02 : f32
    %194 = vector.broadcast %cst_69 : f32 to vector<2x8x1xf32>
    %195 = arith.mulf %193, %194 : vector<2x8x1xf32>
    %196 = arith.mulf %190, %190 : vector<2x8x1xf32>
    %197 = arith.subf %195, %196 : vector<2x8x1xf32>
    %cst_70 = arith.constant 0.000000e+00 : f32
    %198 = vector.broadcast %cst_70 : f32 to vector<2x8x1xf32>
    %199 = arith.maximumf %197, %198 : vector<2x8x1xf32>
    %200 = vector.broadcast %190 : vector<2x8x1xf32> to vector<2x8x128xf32>
    %201 = arith.subf %182, %200 : vector<2x8x128xf32>
    %cst_71 = arith.constant 9.99999996E-13 : f32
    %202 = vector.broadcast %cst_71 : f32 to vector<2x8x1xf32>
    %203 = arith.addf %199, %202 : vector<2x8x1xf32>
    %204 = math.rsqrt %203 : vector<2x8x1xf32>
    %205 = vector.broadcast %204 : vector<2x8x1xf32> to vector<2x8x128xf32>
    %206 = arith.mulf %201, %205 : vector<2x8x128xf32>
    %207 = vector.shape_cast %184 : vector<1x128xf32> to vector<1x1x128xf32>
    %208 = vector.broadcast %207 : vector<1x1x128xf32> to vector<2x8x128xf32>
    %209 = arith.mulf %206, %208 : vector<2x8x128xf32>
    %210 = vector.shape_cast %186 : vector<1x128xf32> to vector<1x1x128xf32>
    %211 = vector.broadcast %210 : vector<1x1x128xf32> to vector<2x8x128xf32>
    %212 = arith.addf %209, %211 : vector<2x8x128xf32>
    %213 = arith.truncf %212 : vector<2x8x128xf32> to vector<2x8x128xbf16>
    %c0_72 = arith.constant 0 : index
    %c0_73 = arith.constant 0 : index
    %c0_74 = arith.constant 0 : index
    %214 = vector.load %arg14[%c0_72, %c0_73, %c0_74] : memref<2x128x256xbf16, #tpu.memory_space<vmem>>, vector<1x128x256xbf16>
    %215 = vector.shape_cast %214 : vector<1x128x256xbf16> to vector<128x256xbf16>
    "tpu.trace_start"() <{level = 10 : i32, message = "bsh,hf->bsf"}> : () -> ()
    %cst_75 = arith.constant dense<0.000000e+00> : vector<2x8x256xf32>
    %216 = tpu.matmul %213, %215, %cst_75 {dimension_numbers = #tpu.dot_dimension_numbers<[2], [0], [0, 1], [1], [0, 0, 0, 1, 1, 1], [], []>} : vector<2x8x128xbf16>, vector<128x256xbf16>, vector<2x8x256xf32> -> vector<2x8x256xf32>
    "tpu.trace_stop"() : () -> ()
    %c0_76 = arith.constant 0 : index
    %c0_77 = arith.constant 0 : index
    %c0_78 = arith.constant 0 : index
    %217 = vector.load %arg15[%c0_76, %c0_77, %c0_78] : memref<2x1x256xf32, #tpu.memory_space<vmem>>, vector<1x1x256xf32>
    %218 = vector.shape_cast %217 : vector<1x1x256xf32> to vector<1x256xf32>
    %219 = vector.shape_cast %218 : vector<1x256xf32> to vector<1x1x256xf32>
    %220 = vector.broadcast %219 : vector<1x1x256xf32> to vector<2x8x256xf32>
    %221 = arith.addf %216, %220 : vector<2x8x256xf32>
    %222 = arith.mulf %221, %221 : vector<2x8x256xf32>
    %223 = arith.mulf %221, %222 : vector<2x8x256xf32>
    %cst_79 = arith.constant 4.471500e-02 : f32
    %224 = vector.broadcast %cst_79 : f32 to vector<2x8x256xf32>
    %225 = arith.mulf %224, %223 : vector<2x8x256xf32>
    %226 = arith.addf %221, %225 : vector<2x8x256xf32>
    %cst_80 = arith.constant 0.797884583 : f32
    %227 = vector.broadcast %cst_80 : f32 to vector<2x8x256xf32>
    %228 = arith.mulf %227, %226 : vector<2x8x256xf32>
    %229 = math.tanh %228 : vector<2x8x256xf32>
    %cst_81 = arith.constant 1.000000e+00 : f32
    %230 = vector.broadcast %cst_81 : f32 to vector<2x8x256xf32>
    %231 = arith.addf %230, %229 : vector<2x8x256xf32>
    %cst_82 = arith.constant 5.000000e-01 : f32
    %232 = vector.broadcast %cst_82 : f32 to vector<2x8x256xf32>
    %233 = arith.mulf %232, %231 : vector<2x8x256xf32>
    %234 = arith.mulf %221, %233 : vector<2x8x256xf32>
    %235 = arith.truncf %234 : vector<2x8x256xf32> to vector<2x8x256xbf16>
    %c0_83 = arith.constant 0 : index
    %c0_84 = arith.constant 0 : index
    %c0_85 = arith.constant 0 : index
    %236 = vector.load %arg16[%c0_83, %c0_84, %c0_85] : memref<2x256x128xbf16, #tpu.memory_space<vmem>>, vector<1x256x128xbf16>
    %237 = vector.shape_cast %236 : vector<1x256x128xbf16> to vector<256x128xbf16>
    "tpu.trace_start"() <{level = 10 : i32, message = "bsf,fh->bsh"}> : () -> ()
    %cst_86 = arith.constant dense<0.000000e+00> : vector<2x8x128xf32>
    %238 = tpu.matmul %235, %237, %cst_86 {dimension_numbers = #tpu.dot_dimension_numbers<[2], [0], [0, 1], [1], [0, 0, 0, 1, 1, 1], [], []>} : vector<2x8x256xbf16>, vector<256x128xbf16>, vector<2x8x128xf32> -> vector<2x8x128xf32>
    "tpu.trace_stop"() : () -> ()
    %c0_87 = arith.constant 0 : index
    %c0_88 = arith.constant 0 : index
    %c0_89 = arith.constant 0 : index
    %239 = vector.load %arg17[%c0_87, %c0_88, %c0_89] : memref<2x1x128xf32, #tpu.memory_space<vmem>>, vector<1x1x128xf32>
    %240 = vector.shape_cast %239 : vector<1x1x128xf32> to vector<1x128xf32>
    %241 = vector.shape_cast %240 : vector<1x128xf32> to vector<1x1x128xf32>
    %242 = vector.broadcast %241 : vector<1x1x128xf32> to vector<2x8x128xf32>
    %243 = arith.addf %238, %242 : vector<2x8x128xf32>
    %244 = arith.addf %212, %243 : vector<2x8x128xf32>
    %c0_90 = arith.constant 0 : index
    %c0_91 = arith.constant 0 : index
    %c0_92 = arith.constant 0 : index
    %245 = vector.load %arg18[%c0_90, %c0_91, %c0_92] : memref<2x1x128xf32, #tpu.memory_space<vmem>>, vector<1x1x128xf32>
    %246 = vector.shape_cast %245 : vector<1x1x128xf32> to vector<1x128xf32>
    %c0_93 = arith.constant 0 : index
    %c0_94 = arith.constant 0 : index
    %c0_95 = arith.constant 0 : index
    %247 = vector.load %arg19[%c0_93, %c0_94, %c0_95] : memref<2x1x128xf32, #tpu.memory_space<vmem>>, vector<1x1x128xf32>
    %248 = vector.shape_cast %247 : vector<1x1x128xf32> to vector<1x128xf32>
    %cst_96 = arith.constant dense<0.000000e+00> : vector<2x8xf32>
    %249 = vector.multi_reduction <add>, %244, %cst_96 [2] : vector<2x8x128xf32> to vector<2x8xf32>
    %250 = vector.shape_cast %249 : vector<2x8xf32> to vector<2x8x1xf32>
    %cst_97 = arith.constant 1.562500e-02 : f32
    %251 = vector.broadcast %cst_97 : f32 to vector<2x8x1xf32>
    %252 = arith.mulf %250, %251 : vector<2x8x1xf32>
    %253 = arith.mulf %244, %244 : vector<2x8x128xf32>
    %cst_98 = arith.constant dense<0.000000e+00> : vector<2x8xf32>
    %254 = vector.multi_reduction <add>, %253, %cst_98 [2] : vector<2x8x128xf32> to vector<2x8xf32>
    %255 = vector.shape_cast %254 : vector<2x8xf32> to vector<2x8x1xf32>
    %cst_99 = arith.constant 1.562500e-02 : f32
    %256 = vector.broadcast %cst_99 : f32 to vector<2x8x1xf32>
    %257 = arith.mulf %255, %256 : vector<2x8x1xf32>
    %258 = arith.mulf %252, %252 : vector<2x8x1xf32>
    %259 = arith.subf %257, %258 : vector<2x8x1xf32>
    %cst_100 = arith.constant 0.000000e+00 : f32
    %260 = vector.broadcast %cst_100 : f32 to vector<2x8x1xf32>
    %261 = arith.maximumf %259, %260 : vector<2x8x1xf32>
    %262 = vector.broadcast %252 : vector<2x8x1xf32> to vector<2x8x128xf32>
    %263 = arith.subf %244, %262 : vector<2x8x128xf32>
    %cst_101 = arith.constant 9.99999996E-13 : f32
    %264 = vector.broadcast %cst_101 : f32 to vector<2x8x1xf32>
    %265 = arith.addf %261, %264 : vector<2x8x1xf32>
    %266 = math.rsqrt %265 : vector<2x8x1xf32>
    %267 = vector.broadcast %266 : vector<2x8x1xf32> to vector<2x8x128xf32>
    %268 = arith.mulf %263, %267 : vector<2x8x128xf32>
    %269 = vector.shape_cast %246 : vector<1x128xf32> to vector<1x1x128xf32>
    %270 = vector.broadcast %269 : vector<1x1x128xf32> to vector<2x8x128xf32>
    %271 = arith.mulf %268, %270 : vector<2x8x128xf32>
    %272 = vector.shape_cast %248 : vector<1x128xf32> to vector<1x1x128xf32>
    %273 = vector.broadcast %272 : vector<1x1x128xf32> to vector<2x8x128xf32>
    %274 = arith.addf %271, %273 : vector<2x8x128xf32>
    %275 = arith.truncf %274 : vector<2x8x128xf32> to vector<2x8x128xbf16>
    %c1 = arith.constant 1 : index
    %c0_102 = arith.constant 0 : index
    %c0_103 = arith.constant 0 : index
    %276 = vector.load %arg8[%c1, %c0_102, %c0_103] : memref<2x128x384xbf16, #tpu.memory_space<vmem>>, vector<1x128x384xbf16>
    %277 = vector.shape_cast %276 : vector<1x128x384xbf16> to vector<128x384xbf16>
    "tpu.trace_start"() <{level = 10 : i32, message = "bsh,hd->bsd"}> : () -> ()
    %cst_104 = arith.constant dense<0.000000e+00> : vector<2x8x384xf32>
    %278 = tpu.matmul %275, %277, %cst_104 {dimension_numbers = #tpu.dot_dimension_numbers<[2], [0], [0, 1], [1], [0, 0, 0, 1, 1, 1], [], []>} : vector<2x8x128xbf16>, vector<128x384xbf16>, vector<2x8x384xf32> -> vector<2x8x384xf32>
    "tpu.trace_stop"() : () -> ()
    %c1_105 = arith.constant 1 : index
    %c0_106 = arith.constant 0 : index
    %c0_107 = arith.constant 0 : index
    %279 = vector.load %arg9[%c1_105, %c0_106, %c0_107] : memref<2x1x384xf32, #tpu.memory_space<vmem>>, vector<1x1x384xf32>
    %280 = vector.shape_cast %279 : vector<1x1x384xf32> to vector<1x384xf32>
    %281 = vector.shape_cast %280 : vector<1x384xf32> to vector<1x1x384xf32>
    %282 = vector.broadcast %281 : vector<1x1x384xf32> to vector<2x8x384xf32>
    %283 = arith.addf %278, %282 : vector<2x8x384xf32>
    %284 = vector.extract_strided_slice %283 {offsets = [0, 0, 0], sizes = [2, 8, 128], strides = [1, 1, 1]} : vector<2x8x384xf32> to vector<2x8x128xf32>
    %285 = vector.extract_strided_slice %283 {offsets = [0, 0, 128], sizes = [2, 8, 128], strides = [1, 1, 1]} : vector<2x8x384xf32> to vector<2x8x128xf32>
    %286 = vector.extract_strided_slice %283 {offsets = [0, 0, 256], sizes = [2, 8, 128], strides = [1, 1, 1]} : vector<2x8x384xf32> to vector<2x8x128xf32>
    %c1_108 = arith.constant 1 : index
    %c0_109 = arith.constant 0 : index
    %c0_110 = arith.constant 0 : index
    %287 = vector.load %arg10[%c1_108, %c0_109, %c0_110] : memref<2x64x128xbf16, #tpu.memory_space<vmem>>, vector<1x64x128xbf16>
    %288 = vector.shape_cast %287 : vector<1x64x128xbf16> to vector<64x128xbf16>
    %289 = vector.extract_strided_slice %284 {offsets = [0, 0, 0], sizes = [2, 8, 16], strides = [1, 1, 1]} : vector<2x8x128xf32> to vector<2x8x16xf32>
    %290 = arith.truncf %289 : vector<2x8x16xf32> to vector<2x8x16xbf16>
    %291 = vector.extract_strided_slice %285 {offsets = [0, 0, 0], sizes = [2, 8, 16], strides = [1, 1, 1]} : vector<2x8x128xf32> to vector<2x8x16xf32>
    %292 = arith.truncf %291 : vector<2x8x16xf32> to vector<2x8x16xbf16>
    "tpu.trace_start"() <{level = 10 : i32, message = "bqd,bkd->bqk"}> : () -> ()
    %cst_111 = arith.constant dense<0.000000e+00> : vector<2x8x8xf32>
    %293 = tpu.matmul %290, %292, %cst_111 {dimension_numbers = #tpu.dot_dimension_numbers<[2], [2], [1], [1], [0, 0, 0, 1, 1, 1], [0], [0]>} : vector<2x8x16xbf16>, vector<2x8x16xbf16>, vector<2x8x8xf32> -> vector<2x8x8xf32>
    "tpu.trace_stop"() : () -> ()
    %cst_112 = arith.constant 2.500000e-01 : f32
    %294 = vector.broadcast %cst_112 : f32 to vector<2x8x8xf32>
    %295 = arith.mulf %293, %294 : vector<2x8x8xf32>
    %296 = vector.shape_cast %51 : vector<2x8xf32> to vector<2x1x8xf32>
    %297 = vector.broadcast %296 : vector<2x1x8xf32> to vector<2x8x8xf32>
    %298 = arith.addf %295, %297 : vector<2x8x8xf32>
    %cst_113 = arith.constant dense<0xFF800000> : vector<2x8xf32>
    %299 = vector.multi_reduction <maximumf>, %298, %cst_113 [2] : vector<2x8x8xf32> to vector<2x8xf32>
    %300 = vector.shape_cast %299 : vector<2x8xf32> to vector<2x8x1xf32>
    %301 = vector.broadcast %300 : vector<2x8x1xf32> to vector<2x8x8xf32>
    %302 = arith.subf %298, %301 : vector<2x8x8xf32>
    %303 = math.exp %302 : vector<2x8x8xf32>
    %cst_114 = arith.constant dense<0.000000e+00> : vector<2x8xf32>
    %304 = vector.multi_reduction <add>, %303, %cst_114 [2] : vector<2x8x8xf32> to vector<2x8xf32>
    %305 = vector.shape_cast %304 : vector<2x8xf32> to vector<2x8x1xf32>
    %306 = tpu.reciprocal %305 {approx = true} : vector<2x8x1xf32> -> vector<2x8x1xf32>
    %307 = vector.broadcast %306 : vector<2x8x1xf32> to vector<2x8x8xf32>
    %308 = arith.mulf %303, %307 : vector<2x8x8xf32>
    %309 = arith.truncf %308 : vector<2x8x8xf32> to vector<2x8x8xbf16>
    %310 = vector.extract_strided_slice %286 {offsets = [0, 0, 0], sizes = [2, 8, 16], strides = [1, 1, 1]} : vector<2x8x128xf32> to vector<2x8x16xf32>
    %311 = arith.truncf %310 : vector<2x8x16xf32> to vector<2x8x16xbf16>
    "tpu.trace_start"() <{level = 10 : i32, message = "bqk,bkd->bqd"}> : () -> ()
    %cst_115 = arith.constant dense<0.000000e+00> : vector<2x8x16xf32>
    %312 = tpu.matmul %309, %311, %cst_115 {dimension_numbers = #tpu.dot_dimension_numbers<[2], [1], [1], [2], [0, 0, 0, 1, 1, 2], [0], [0]>} : vector<2x8x8xbf16>, vector<2x8x16xbf16>, vector<2x8x16xf32> -> vector<2x8x16xf32>
    "tpu.trace_stop"() : () -> ()
    %313 = arith.truncf %312 : vector<2x8x16xf32> to vector<2x8x16xbf16>
    %314 = vector.extract_strided_slice %288 {offsets = [0, 0], sizes = [16, 128], strides = [1, 1]} : vector<64x128xbf16> to vector<16x128xbf16>
    "tpu.trace_start"() <{level = 10 : i32, message = "bqd,dh->bqh"}> : () -> ()
    %cst_116 = arith.constant dense<0.000000e+00> : vector<2x8x128xf32>
    %315 = tpu.matmul %313, %314, %cst_116 {dimension_numbers = #tpu.dot_dimension_numbers<[2], [0], [0, 1], [1], [0, 0, 0, 1, 1, 1], [], []>} : vector<2x8x16xbf16>, vector<16x128xbf16>, vector<2x8x128xf32> -> vector<2x8x128xf32>
    "tpu.trace_stop"() : () -> ()
    %316 = vector.extract_strided_slice %284 {offsets = [0, 0, 16], sizes = [2, 8, 16], strides = [1, 1, 1]} : vector<2x8x128xf32> to vector<2x8x16xf32>
    %317 = arith.truncf %316 : vector<2x8x16xf32> to vector<2x8x16xbf16>
    %318 = vector.extract_strided_slice %285 {offsets = [0, 0, 16], sizes = [2, 8, 16], strides = [1, 1, 1]} : vector<2x8x128xf32> to vector<2x8x16xf32>
    %319 = arith.truncf %318 : vector<2x8x16xf32> to vector<2x8x16xbf16>
    "tpu.trace_start"() <{level = 10 : i32, message = "bqd,bkd->bqk"}> : () -> ()
    %cst_117 = arith.constant dense<0.000000e+00> : vector<2x8x8xf32>
    %320 = tpu.matmul %317, %319, %cst_117 {dimension_numbers = #tpu.dot_dimension_numbers<[2], [2], [1], [1], [0, 0, 0, 1, 1, 1], [0], [0]>} : vector<2x8x16xbf16>, vector<2x8x16xbf16>, vector<2x8x8xf32> -> vector<2x8x8xf32>
    "tpu.trace_stop"() : () -> ()
    %cst_118 = arith.constant 2.500000e-01 : f32
    %321 = vector.broadcast %cst_118 : f32 to vector<2x8x8xf32>
    %322 = arith.mulf %320, %321 : vector<2x8x8xf32>
    %323 = vector.shape_cast %51 : vector<2x8xf32> to vector<2x1x8xf32>
    %324 = vector.broadcast %323 : vector<2x1x8xf32> to vector<2x8x8xf32>
    %325 = arith.addf %322, %324 : vector<2x8x8xf32>
    %cst_119 = arith.constant dense<0xFF800000> : vector<2x8xf32>
    %326 = vector.multi_reduction <maximumf>, %325, %cst_119 [2] : vector<2x8x8xf32> to vector<2x8xf32>
    %327 = vector.shape_cast %326 : vector<2x8xf32> to vector<2x8x1xf32>
    %328 = vector.broadcast %327 : vector<2x8x1xf32> to vector<2x8x8xf32>
    %329 = arith.subf %325, %328 : vector<2x8x8xf32>
    %330 = math.exp %329 : vector<2x8x8xf32>
    %cst_120 = arith.constant dense<0.000000e+00> : vector<2x8xf32>
    %331 = vector.multi_reduction <add>, %330, %cst_120 [2] : vector<2x8x8xf32> to vector<2x8xf32>
    %332 = vector.shape_cast %331 : vector<2x8xf32> to vector<2x8x1xf32>
    %333 = tpu.reciprocal %332 {approx = true} : vector<2x8x1xf32> -> vector<2x8x1xf32>
    %334 = vector.broadcast %333 : vector<2x8x1xf32> to vector<2x8x8xf32>
    %335 = arith.mulf %330, %334 : vector<2x8x8xf32>
    %336 = arith.truncf %335 : vector<2x8x8xf32> to vector<2x8x8xbf16>
    %337 = vector.extract_strided_slice %286 {offsets = [0, 0, 16], sizes = [2, 8, 16], strides = [1, 1, 1]} : vector<2x8x128xf32> to vector<2x8x16xf32>
    %338 = arith.truncf %337 : vector<2x8x16xf32> to vector<2x8x16xbf16>
    "tpu.trace_start"() <{level = 10 : i32, message = "bqk,bkd->bqd"}> : () -> ()
    %cst_121 = arith.constant dense<0.000000e+00> : vector<2x8x16xf32>
    %339 = tpu.matmul %336, %338, %cst_121 {dimension_numbers = #tpu.dot_dimension_numbers<[2], [1], [1], [2], [0, 0, 0, 1, 1, 2], [0], [0]>} : vector<2x8x8xbf16>, vector<2x8x16xbf16>, vector<2x8x16xf32> -> vector<2x8x16xf32>
    "tpu.trace_stop"() : () -> ()
    %340 = arith.truncf %339 : vector<2x8x16xf32> to vector<2x8x16xbf16>
    %341 = vector.extract_strided_slice %288 {offsets = [16, 0], sizes = [16, 128], strides = [1, 1]} : vector<64x128xbf16> to vector<16x128xbf16>
    "tpu.trace_start"() <{level = 10 : i32, message = "bqd,dh->bqh"}> : () -> ()
    %cst_122 = arith.constant dense<0.000000e+00> : vector<2x8x128xf32>
    %342 = tpu.matmul %340, %341, %cst_122 {dimension_numbers = #tpu.dot_dimension_numbers<[2], [0], [0, 1], [1], [0, 0, 0, 1, 1, 1], [], []>} : vector<2x8x16xbf16>, vector<16x128xbf16>, vector<2x8x128xf32> -> vector<2x8x128xf32>
    "tpu.trace_stop"() : () -> ()
    %343 = vector.extract_strided_slice %284 {offsets = [0, 0, 32], sizes = [2, 8, 16], strides = [1, 1, 1]} : vector<2x8x128xf32> to vector<2x8x16xf32>
    %344 = arith.truncf %343 : vector<2x8x16xf32> to vector<2x8x16xbf16>
    %345 = vector.extract_strided_slice %285 {offsets = [0, 0, 32], sizes = [2, 8, 16], strides = [1, 1, 1]} : vector<2x8x128xf32> to vector<2x8x16xf32>
    %346 = arith.truncf %345 : vector<2x8x16xf32> to vector<2x8x16xbf16>
    "tpu.trace_start"() <{level = 10 : i32, message = "bqd,bkd->bqk"}> : () -> ()
    %cst_123 = arith.constant dense<0.000000e+00> : vector<2x8x8xf32>
    %347 = tpu.matmul %344, %346, %cst_123 {dimension_numbers = #tpu.dot_dimension_numbers<[2], [2], [1], [1], [0, 0, 0, 1, 1, 1], [0], [0]>} : vector<2x8x16xbf16>, vector<2x8x16xbf16>, vector<2x8x8xf32> -> vector<2x8x8xf32>
    "tpu.trace_stop"() : () -> ()
    %cst_124 = arith.constant 2.500000e-01 : f32
    %348 = vector.broadcast %cst_124 : f32 to vector<2x8x8xf32>
    %349 = arith.mulf %347, %348 : vector<2x8x8xf32>
    %350 = vector.shape_cast %51 : vector<2x8xf32> to vector<2x1x8xf32>
    %351 = vector.broadcast %350 : vector<2x1x8xf32> to vector<2x8x8xf32>
    %352 = arith.addf %349, %351 : vector<2x8x8xf32>
    %cst_125 = arith.constant dense<0xFF800000> : vector<2x8xf32>
    %353 = vector.multi_reduction <maximumf>, %352, %cst_125 [2] : vector<2x8x8xf32> to vector<2x8xf32>
    %354 = vector.shape_cast %353 : vector<2x8xf32> to vector<2x8x1xf32>
    %355 = vector.broadcast %354 : vector<2x8x1xf32> to vector<2x8x8xf32>
    %356 = arith.subf %352, %355 : vector<2x8x8xf32>
    %357 = math.exp %356 : vector<2x8x8xf32>
    %cst_126 = arith.constant dense<0.000000e+00> : vector<2x8xf32>
    %358 = vector.multi_reduction <add>, %357, %cst_126 [2] : vector<2x8x8xf32> to vector<2x8xf32>
    %359 = vector.shape_cast %358 : vector<2x8xf32> to vector<2x8x1xf32>
    %360 = tpu.reciprocal %359 {approx = true} : vector<2x8x1xf32> -> vector<2x8x1xf32>
    %361 = vector.broadcast %360 : vector<2x8x1xf32> to vector<2x8x8xf32>
    %362 = arith.mulf %357, %361 : vector<2x8x8xf32>
    %363 = arith.truncf %362 : vector<2x8x8xf32> to vector<2x8x8xbf16>
    %364 = vector.extract_strided_slice %286 {offsets = [0, 0, 32], sizes = [2, 8, 16], strides = [1, 1, 1]} : vector<2x8x128xf32> to vector<2x8x16xf32>
    %365 = arith.truncf %364 : vector<2x8x16xf32> to vector<2x8x16xbf16>
    "tpu.trace_start"() <{level = 10 : i32, message = "bqk,bkd->bqd"}> : () -> ()
    %cst_127 = arith.constant dense<0.000000e+00> : vector<2x8x16xf32>
    %366 = tpu.matmul %363, %365, %cst_127 {dimension_numbers = #tpu.dot_dimension_numbers<[2], [1], [1], [2], [0, 0, 0, 1, 1, 2], [0], [0]>} : vector<2x8x8xbf16>, vector<2x8x16xbf16>, vector<2x8x16xf32> -> vector<2x8x16xf32>
    "tpu.trace_stop"() : () -> ()
    %367 = arith.truncf %366 : vector<2x8x16xf32> to vector<2x8x16xbf16>
    %368 = vector.extract_strided_slice %288 {offsets = [32, 0], sizes = [16, 128], strides = [1, 1]} : vector<64x128xbf16> to vector<16x128xbf16>
    "tpu.trace_start"() <{level = 10 : i32, message = "bqd,dh->bqh"}> : () -> ()
    %cst_128 = arith.constant dense<0.000000e+00> : vector<2x8x128xf32>
    %369 = tpu.matmul %367, %368, %cst_128 {dimension_numbers = #tpu.dot_dimension_numbers<[2], [0], [0, 1], [1], [0, 0, 0, 1, 1, 1], [], []>} : vector<2x8x16xbf16>, vector<16x128xbf16>, vector<2x8x128xf32> -> vector<2x8x128xf32>
    "tpu.trace_stop"() : () -> ()
    %370 = vector.extract_strided_slice %284 {offsets = [0, 0, 48], sizes = [2, 8, 16], strides = [1, 1, 1]} : vector<2x8x128xf32> to vector<2x8x16xf32>
    %371 = arith.truncf %370 : vector<2x8x16xf32> to vector<2x8x16xbf16>
    %372 = vector.extract_strided_slice %285 {offsets = [0, 0, 48], sizes = [2, 8, 16], strides = [1, 1, 1]} : vector<2x8x128xf32> to vector<2x8x16xf32>
    %373 = arith.truncf %372 : vector<2x8x16xf32> to vector<2x8x16xbf16>
    "tpu.trace_start"() <{level = 10 : i32, message = "bqd,bkd->bqk"}> : () -> ()
    %cst_129 = arith.constant dense<0.000000e+00> : vector<2x8x8xf32>
    %374 = tpu.matmul %371, %373, %cst_129 {dimension_numbers = #tpu.dot_dimension_numbers<[2], [2], [1], [1], [0, 0, 0, 1, 1, 1], [0], [0]>} : vector<2x8x16xbf16>, vector<2x8x16xbf16>, vector<2x8x8xf32> -> vector<2x8x8xf32>
    "tpu.trace_stop"() : () -> ()
    %cst_130 = arith.constant 2.500000e-01 : f32
    %375 = vector.broadcast %cst_130 : f32 to vector<2x8x8xf32>
    %376 = arith.mulf %374, %375 : vector<2x8x8xf32>
    %377 = vector.shape_cast %51 : vector<2x8xf32> to vector<2x1x8xf32>
    %378 = vector.broadcast %377 : vector<2x1x8xf32> to vector<2x8x8xf32>
    %379 = arith.addf %376, %378 : vector<2x8x8xf32>
    %cst_131 = arith.constant dense<0xFF800000> : vector<2x8xf32>
    %380 = vector.multi_reduction <maximumf>, %379, %cst_131 [2] : vector<2x8x8xf32> to vector<2x8xf32>
    %381 = vector.shape_cast %380 : vector<2x8xf32> to vector<2x8x1xf32>
    %382 = vector.broadcast %381 : vector<2x8x1xf32> to vector<2x8x8xf32>
    %383 = arith.subf %379, %382 : vector<2x8x8xf32>
    %384 = math.exp %383 : vector<2x8x8xf32>
    %cst_132 = arith.constant dense<0.000000e+00> : vector<2x8xf32>
    %385 = vector.multi_reduction <add>, %384, %cst_132 [2] : vector<2x8x8xf32> to vector<2x8xf32>
    %386 = vector.shape_cast %385 : vector<2x8xf32> to vector<2x8x1xf32>
    %387 = tpu.reciprocal %386 {approx = true} : vector<2x8x1xf32> -> vector<2x8x1xf32>
    %388 = vector.broadcast %387 : vector<2x8x1xf32> to vector<2x8x8xf32>
    %389 = arith.mulf %384, %388 : vector<2x8x8xf32>
    %390 = arith.truncf %389 : vector<2x8x8xf32> to vector<2x8x8xbf16>
    %391 = vector.extract_strided_slice %286 {offsets = [0, 0, 48], sizes = [2, 8, 16], strides = [1, 1, 1]} : vector<2x8x128xf32> to vector<2x8x16xf32>
    %392 = arith.truncf %391 : vector<2x8x16xf32> to vector<2x8x16xbf16>
    "tpu.trace_start"() <{level = 10 : i32, message = "bqk,bkd->bqd"}> : () -> ()
    %cst_133 = arith.constant dense<0.000000e+00> : vector<2x8x16xf32>
    %393 = tpu.matmul %390, %392, %cst_133 {dimension_numbers = #tpu.dot_dimension_numbers<[2], [1], [1], [2], [0, 0, 0, 1, 1, 2], [0], [0]>} : vector<2x8x8xbf16>, vector<2x8x16xbf16>, vector<2x8x16xf32> -> vector<2x8x16xf32>
    "tpu.trace_stop"() : () -> ()
    %394 = arith.truncf %393 : vector<2x8x16xf32> to vector<2x8x16xbf16>
    %395 = vector.extract_strided_slice %288 {offsets = [48, 0], sizes = [16, 128], strides = [1, 1]} : vector<64x128xbf16> to vector<16x128xbf16>
    "tpu.trace_start"() <{level = 10 : i32, message = "bqd,dh->bqh"}> : () -> ()
    %cst_134 = arith.constant dense<0.000000e+00> : vector<2x8x128xf32>
    %396 = tpu.matmul %394, %395, %cst_134 {dimension_numbers = #tpu.dot_dimension_numbers<[2], [0], [0, 1], [1], [0, 0, 0, 1, 1, 1], [], []>} : vector<2x8x16xbf16>, vector<16x128xbf16>, vector<2x8x128xf32> -> vector<2x8x128xf32>
    "tpu.trace_stop"() : () -> ()
    %397 = arith.addf %315, %342 : vector<2x8x128xf32>
    %398 = arith.addf %369, %396 : vector<2x8x128xf32>
    %399 = arith.addf %397, %398 : vector<2x8x128xf32>
    %c1_135 = arith.constant 1 : index
    %c0_136 = arith.constant 0 : index
    %c0_137 = arith.constant 0 : index
    %400 = vector.load %arg11[%c1_135, %c0_136, %c0_137] : memref<2x1x128xf32, #tpu.memory_space<vmem>>, vector<1x1x128xf32>
    %401 = vector.shape_cast %400 : vector<1x1x128xf32> to vector<1x128xf32>
    %402 = vector.shape_cast %401 : vector<1x128xf32> to vector<1x1x128xf32>
    %403 = vector.broadcast %402 : vector<1x1x128xf32> to vector<2x8x128xf32>
    %404 = arith.addf %399, %403 : vector<2x8x128xf32>
    %405 = arith.addf %274, %404 : vector<2x8x128xf32>
    %c1_138 = arith.constant 1 : index
    %c0_139 = arith.constant 0 : index
    %c0_140 = arith.constant 0 : index
    %406 = vector.load %arg12[%c1_138, %c0_139, %c0_140] : memref<2x1x128xf32, #tpu.memory_space<vmem>>, vector<1x1x128xf32>
    %407 = vector.shape_cast %406 : vector<1x1x128xf32> to vector<1x128xf32>
    %c1_141 = arith.constant 1 : index
    %c0_142 = arith.constant 0 : index
    %c0_143 = arith.constant 0 : index
    %408 = vector.load %arg13[%c1_141, %c0_142, %c0_143] : memref<2x1x128xf32, #tpu.memory_space<vmem>>, vector<1x1x128xf32>
    %409 = vector.shape_cast %408 : vector<1x1x128xf32> to vector<1x128xf32>
    %cst_144 = arith.constant dense<0.000000e+00> : vector<2x8xf32>
    %410 = vector.multi_reduction <add>, %405, %cst_144 [2] : vector<2x8x128xf32> to vector<2x8xf32>
    %411 = vector.shape_cast %410 : vector<2x8xf32> to vector<2x8x1xf32>
    %cst_145 = arith.constant 1.562500e-02 : f32
    %412 = vector.broadcast %cst_145 : f32 to vector<2x8x1xf32>
    %413 = arith.mulf %411, %412 : vector<2x8x1xf32>
    %414 = arith.mulf %405, %405 : vector<2x8x128xf32>
    %cst_146 = arith.constant dense<0.000000e+00> : vector<2x8xf32>
    %415 = vector.multi_reduction <add>, %414, %cst_146 [2] : vector<2x8x128xf32> to vector<2x8xf32>
    %416 = vector.shape_cast %415 : vector<2x8xf32> to vector<2x8x1xf32>
    %cst_147 = arith.constant 1.562500e-02 : f32
    %417 = vector.broadcast %cst_147 : f32 to vector<2x8x1xf32>
    %418 = arith.mulf %416, %417 : vector<2x8x1xf32>
    %419 = arith.mulf %413, %413 : vector<2x8x1xf32>
    %420 = arith.subf %418, %419 : vector<2x8x1xf32>
    %cst_148 = arith.constant 0.000000e+00 : f32
    %421 = vector.broadcast %cst_148 : f32 to vector<2x8x1xf32>
    %422 = arith.maximumf %420, %421 : vector<2x8x1xf32>
    %423 = vector.broadcast %413 : vector<2x8x1xf32> to vector<2x8x128xf32>
    %424 = arith.subf %405, %423 : vector<2x8x128xf32>
    %cst_149 = arith.constant 9.99999996E-13 : f32
    %425 = vector.broadcast %cst_149 : f32 to vector<2x8x1xf32>
    %426 = arith.addf %422, %425 : vector<2x8x1xf32>
    %427 = math.rsqrt %426 : vector<2x8x1xf32>
    %428 = vector.broadcast %427 : vector<2x8x1xf32> to vector<2x8x128xf32>
    %429 = arith.mulf %424, %428 : vector<2x8x128xf32>
    %430 = vector.shape_cast %407 : vector<1x128xf32> to vector<1x1x128xf32>
    %431 = vector.broadcast %430 : vector<1x1x128xf32> to vector<2x8x128xf32>
    %432 = arith.mulf %429, %431 : vector<2x8x128xf32>
    %433 = vector.shape_cast %409 : vector<1x128xf32> to vector<1x1x128xf32>
    %434 = vector.broadcast %433 : vector<1x1x128xf32> to vector<2x8x128xf32>
    %435 = arith.addf %432, %434 : vector<2x8x128xf32>
    %436 = arith.truncf %435 : vector<2x8x128xf32> to vector<2x8x128xbf16>
    %c1_150 = arith.constant 1 : index
    %c0_151 = arith.constant 0 : index
    %c0_152 = arith.constant 0 : index
    %437 = vector.load %arg14[%c1_150, %c0_151, %c0_152] : memref<2x128x256xbf16, #tpu.memory_space<vmem>>, vector<1x128x256xbf16>
    %438 = vector.shape_cast %437 : vector<1x128x256xbf16> to vector<128x256xbf16>
    "tpu.trace_start"() <{level = 10 : i32, message = "bsh,hf->bsf"}> : () -> ()
    %cst_153 = arith.constant dense<0.000000e+00> : vector<2x8x256xf32>
    %439 = tpu.matmul %436, %438, %cst_153 {dimension_numbers = #tpu.dot_dimension_numbers<[2], [0], [0, 1], [1], [0, 0, 0, 1, 1, 1], [], []>} : vector<2x8x128xbf16>, vector<128x256xbf16>, vector<2x8x256xf32> -> vector<2x8x256xf32>
    "tpu.trace_stop"() : () -> ()
    %c1_154 = arith.constant 1 : index
    %c0_155 = arith.constant 0 : index
    %c0_156 = arith.constant 0 : index
    %440 = vector.load %arg15[%c1_154, %c0_155, %c0_156] : memref<2x1x256xf32, #tpu.memory_space<vmem>>, vector<1x1x256xf32>
    %441 = vector.shape_cast %440 : vector<1x1x256xf32> to vector<1x256xf32>
    %442 = vector.shape_cast %441 : vector<1x256xf32> to vector<1x1x256xf32>
    %443 = vector.broadcast %442 : vector<1x1x256xf32> to vector<2x8x256xf32>
    %444 = arith.addf %439, %443 : vector<2x8x256xf32>
    %445 = arith.mulf %444, %444 : vector<2x8x256xf32>
    %446 = arith.mulf %444, %445 : vector<2x8x256xf32>
    %cst_157 = arith.constant 4.471500e-02 : f32
    %447 = vector.broadcast %cst_157 : f32 to vector<2x8x256xf32>
    %448 = arith.mulf %447, %446 : vector<2x8x256xf32>
    %449 = arith.addf %444, %448 : vector<2x8x256xf32>
    %cst_158 = arith.constant 0.797884583 : f32
    %450 = vector.broadcast %cst_158 : f32 to vector<2x8x256xf32>
    %451 = arith.mulf %450, %449 : vector<2x8x256xf32>
    %452 = math.tanh %451 : vector<2x8x256xf32>
    %cst_159 = arith.constant 1.000000e+00 : f32
    %453 = vector.broadcast %cst_159 : f32 to vector<2x8x256xf32>
    %454 = arith.addf %453, %452 : vector<2x8x256xf32>
    %cst_160 = arith.constant 5.000000e-01 : f32
    %455 = vector.broadcast %cst_160 : f32 to vector<2x8x256xf32>
    %456 = arith.mulf %455, %454 : vector<2x8x256xf32>
    %457 = arith.mulf %444, %456 : vector<2x8x256xf32>
    %458 = arith.truncf %457 : vector<2x8x256xf32> to vector<2x8x256xbf16>
    %c1_161 = arith.constant 1 : index
    %c0_162 = arith.constant 0 : index
    %c0_163 = arith.constant 0 : index
    %459 = vector.load %arg16[%c1_161, %c0_162, %c0_163] : memref<2x256x128xbf16, #tpu.memory_space<vmem>>, vector<1x256x128xbf16>
    %460 = vector.shape_cast %459 : vector<1x256x128xbf16> to vector<256x128xbf16>
    "tpu.trace_start"() <{level = 10 : i32, message = "bsf,fh->bsh"}> : () -> ()
    %cst_164 = arith.constant dense<0.000000e+00> : vector<2x8x128xf32>
    %461 = tpu.matmul %458, %460, %cst_164 {dimension_numbers = #tpu.dot_dimension_numbers<[2], [0], [0, 1], [1], [0, 0, 0, 1, 1, 1], [], []>} : vector<2x8x256xbf16>, vector<256x128xbf16>, vector<2x8x128xf32> -> vector<2x8x128xf32>
    "tpu.trace_stop"() : () -> ()
    %c1_165 = arith.constant 1 : index
    %c0_166 = arith.constant 0 : index
    %c0_167 = arith.constant 0 : index
    %462 = vector.load %arg17[%c1_165, %c0_166, %c0_167] : memref<2x1x128xf32, #tpu.memory_space<vmem>>, vector<1x1x128xf32>
    %463 = vector.shape_cast %462 : vector<1x1x128xf32> to vector<1x128xf32>
    %464 = vector.shape_cast %463 : vector<1x128xf32> to vector<1x1x128xf32>
    %465 = vector.broadcast %464 : vector<1x1x128xf32> to vector<2x8x128xf32>
    %466 = arith.addf %461, %465 : vector<2x8x128xf32>
    %467 = arith.addf %435, %466 : vector<2x8x128xf32>
    %c1_168 = arith.constant 1 : index
    %c0_169 = arith.constant 0 : index
    %c0_170 = arith.constant 0 : index
    %468 = vector.load %arg18[%c1_168, %c0_169, %c0_170] : memref<2x1x128xf32, #tpu.memory_space<vmem>>, vector<1x1x128xf32>
    %469 = vector.shape_cast %468 : vector<1x1x128xf32> to vector<1x128xf32>
    %c1_171 = arith.constant 1 : index
    %c0_172 = arith.constant 0 : index
    %c0_173 = arith.constant 0 : index
    %470 = vector.load %arg19[%c1_171, %c0_172, %c0_173] : memref<2x1x128xf32, #tpu.memory_space<vmem>>, vector<1x1x128xf32>
    %471 = vector.shape_cast %470 : vector<1x1x128xf32> to vector<1x128xf32>
    %cst_174 = arith.constant dense<0.000000e+00> : vector<2x8xf32>
    %472 = vector.multi_reduction <add>, %467, %cst_174 [2] : vector<2x8x128xf32> to vector<2x8xf32>
    %473 = vector.shape_cast %472 : vector<2x8xf32> to vector<2x8x1xf32>
    %cst_175 = arith.constant 1.562500e-02 : f32
    %474 = vector.broadcast %cst_175 : f32 to vector<2x8x1xf32>
    %475 = arith.mulf %473, %474 : vector<2x8x1xf32>
    %476 = arith.mulf %467, %467 : vector<2x8x128xf32>
    %cst_176 = arith.constant dense<0.000000e+00> : vector<2x8xf32>
    %477 = vector.multi_reduction <add>, %476, %cst_176 [2] : vector<2x8x128xf32> to vector<2x8xf32>
    %478 = vector.shape_cast %477 : vector<2x8xf32> to vector<2x8x1xf32>
    %cst_177 = arith.constant 1.562500e-02 : f32
    %479 = vector.broadcast %cst_177 : f32 to vector<2x8x1xf32>
    %480 = arith.mulf %478, %479 : vector<2x8x1xf32>
    %481 = arith.mulf %475, %475 : vector<2x8x1xf32>
    %482 = arith.subf %480, %481 : vector<2x8x1xf32>
    %cst_178 = arith.constant 0.000000e+00 : f32
    %483 = vector.broadcast %cst_178 : f32 to vector<2x8x1xf32>
    %484 = arith.maximumf %482, %483 : vector<2x8x1xf32>
    %485 = vector.broadcast %475 : vector<2x8x1xf32> to vector<2x8x128xf32>
    %486 = arith.subf %467, %485 : vector<2x8x128xf32>
    %cst_179 = arith.constant 9.99999996E-13 : f32
    %487 = vector.broadcast %cst_179 : f32 to vector<2x8x1xf32>
    %488 = arith.addf %484, %487 : vector<2x8x1xf32>
    %489 = math.rsqrt %488 : vector<2x8x1xf32>
    %490 = vector.broadcast %489 : vector<2x8x1xf32> to vector<2x8x128xf32>
    %491 = arith.mulf %486, %490 : vector<2x8x128xf32>
    %492 = vector.shape_cast %469 : vector<1x128xf32> to vector<1x1x128xf32>
    %493 = vector.broadcast %492 : vector<1x1x128xf32> to vector<2x8x128xf32>
    %494 = arith.mulf %491, %493 : vector<2x8x128xf32>
    %495 = vector.shape_cast %471 : vector<1x128xf32> to vector<1x1x128xf32>
    %496 = vector.broadcast %495 : vector<1x1x128xf32> to vector<2x8x128xf32>
    %497 = arith.addf %494, %496 : vector<2x8x128xf32>
    %498 = vector.extract_strided_slice %497 {offsets = [0, 0, 0], sizes = [2, 1, 128], strides = [1, 1, 1]} : vector<2x8x128xf32> to vector<2x1x128xf32>
    %499 = vector.shape_cast %498 : vector<2x1x128xf32> to vector<2x128xf32>
    %500 = arith.truncf %499 : vector<2x128xf32> to vector<2x128xbf16>
    %c0_180 = arith.constant 0 : index
    %c0_181 = arith.constant 0 : index
    %501 = vector.load %arg20[%c0_180, %c0_181] : memref<128x128xbf16, #tpu.memory_space<vmem>>, vector<128x128xbf16>
    %cst_182 = arith.constant dense<0.000000e+00> : vector<2x128xf32>
    %502 = tpu.matmul %500, %501, %cst_182 {dimension_numbers = #tpu.dot_dimension_numbers<[1], [0], [0], [1], [0, 0, 1, 1], [], []>} : vector<2x128xbf16>, vector<128x128xbf16>, vector<2x128xf32> -> vector<2x128xf32>
    %c0_183 = arith.constant 0 : index
    %c0_184 = arith.constant 0 : index
    %503 = vector.load %arg21[%c0_183, %c0_184] : memref<1x128xf32, #tpu.memory_space<vmem>>, vector<1x128xf32>
    %504 = vector.broadcast %503 : vector<1x128xf32> to vector<2x128xf32>
    %505 = arith.addf %502, %504 : vector<2x128xf32>
    %506 = math.tanh %505 : vector<2x128xf32>
    %507 = arith.truncf %506 : vector<2x128xf32> to vector<2x128xbf16>
    %c0_185 = arith.constant 0 : index
    %c0_186 = arith.constant 0 : index
    %508 = vector.load %arg22[%c0_185, %c0_186] : memref<128x128xbf16, #tpu.memory_space<vmem>>, vector<128x128xbf16>
    %cst_187 = arith.constant dense<0.000000e+00> : vector<2x128xf32>
    %509 = tpu.matmul %507, %508, %cst_187 {dimension_numbers = #tpu.dot_dimension_numbers<[1], [0], [0], [1], [0, 0, 1, 1], [], []>} : vector<2x128xbf16>, vector<128x128xbf16>, vector<2x128xf32> -> vector<2x128xf32>
    %c0_188 = arith.constant 0 : index
    %c0_189 = arith.constant 0 : index
    %510 = vector.load %arg23[%c0_188, %c0_189] : memref<1x128xf32, #tpu.memory_space<vmem>>, vector<1x128xf32>
    %511 = vector.broadcast %510 : vector<1x128xf32> to vector<2x128xf32>
    %512 = arith.addf %509, %511 : vector<2x128xf32>
    %cst_190 = arith.constant 0.000000e+00 : f32
    %513 = vector.broadcast %cst_190 : f32 to vector<2x128xf32>
    %514 = arith.maximumf %512, %513 : vector<2x128xf32>
    %515 = arith.truncf %514 : vector<2x128xf32> to vector<2x128xbf16>
    %c0_191 = arith.constant 0 : index
    %c0_192 = arith.constant 0 : index
    %516 = vector.load %arg24[%c0_191, %c0_192] : memref<128x128xbf16, #tpu.memory_space<vmem>>, vector<128x128xbf16>
    %cst_193 = arith.constant dense<0.000000e+00> : vector<2x128xf32>
    %517 = tpu.matmul %515, %516, %cst_193 {dimension_numbers = #tpu.dot_dimension_numbers<[1], [0], [0], [1], [0, 0, 1, 1], [], []>} : vector<2x128xbf16>, vector<128x128xbf16>, vector<2x128xf32> -> vector<2x128xf32>
    %c0_194 = arith.constant 0 : index
    %c0_195 = arith.constant 0 : index
    %518 = vector.load %arg25[%c0_194, %c0_195] : memref<1x128xf32, #tpu.memory_space<vmem>>, vector<1x128xf32>
    %519 = vector.broadcast %518 : vector<1x128xf32> to vector<2x128xf32>
    %520 = arith.addf %517, %519 : vector<2x128xf32>
    %cst_196 = arith.constant 0.000000e+00 : f32
    %521 = vector.broadcast %cst_196 : f32 to vector<2x128xf32>
    %522 = arith.maximumf %520, %521 : vector<2x128xf32>
    %523 = arith.truncf %522 : vector<2x128xf32> to vector<2x128xbf16>
    %c0_197 = arith.constant 0 : index
    %c0_198 = arith.constant 0 : index
    %524 = vector.load %arg26[%c0_197, %c0_198] : memref<128x128xbf16, #tpu.memory_space<vmem>>, vector<128x128xbf16>
    %cst_199 = arith.constant dense<0.000000e+00> : vector<2x128xf32>
    %525 = tpu.matmul %523, %524, %cst_199 {dimension_numbers = #tpu.dot_dimension_numbers<[1], [0], [0], [1], [0, 0, 1, 1], [], []>} : vector<2x128xbf16>, vector<128x128xbf16>, vector<2x128xf32> -> vector<2x128xf32>
    %c0_200 = arith.constant 0 : index
    %c0_201 = arith.constant 0 : index
    %526 = vector.load %arg27[%c0_200, %c0_201] : memref<1x128xf32, #tpu.memory_space<vmem>>, vector<1x128xf32>
    %527 = vector.broadcast %526 : vector<1x128xf32> to vector<2x128xf32>
    %528 = arith.addf %525, %527 : vector<2x128xf32>
    %cst_202 = arith.constant 0.000000e+00 : f32
    %529 = vector.broadcast %cst_202 : f32 to vector<2x128xf32>
    %530 = arith.maximumf %528, %529 : vector<2x128xf32>
    %c0_203 = arith.constant 0 : index
    %c0_204 = arith.constant 0 : index
    %531 = vector.load %arg28[%c0_203, %c0_204] : memref<1x128xf32, #tpu.memory_space<vmem>>, vector<1x128xf32>
    %532 = vector.broadcast %531 : vector<1x128xf32> to vector<2x128xf32>
    %533 = arith.mulf %530, %532 : vector<2x128xf32>
    %cst_205 = arith.constant dense<0.000000e+00> : vector<2xf32>
    %534 = vector.multi_reduction <add>, %533, %cst_205 [1] : vector<2x128xf32> to vector<2xf32>
    %535 = vector.shape_cast %534 : vector<2xf32> to vector<2x1xf32>
    %c0_206 = arith.constant 0 : index
    %c0_207 = arith.constant 0 : index
    %536 = vector.load %arg29[%c0_206, %c0_207] : memref<1x1xf32, #tpu.memory_space<vmem>>, vector<1x1xf32>
    %537 = vector.broadcast %536 : vector<1x1xf32> to vector<2x1xf32>
    %538 = arith.addf %535, %537 : vector<2x1xf32>
    %c0_208 = arith.constant 0 : index
    %c0_209 = arith.constant 0 : index
    %539 = vector.load %arg30[%c0_208, %c0_209] : memref<2x1xf32, #tpu.memory_space<vmem>>, vector<2x1xf32>
    tpu.vector_store %arg30[%c0_208, %c0_209], %538 {strides = array<i32>} : memref<2x1xf32, #tpu.memory_space<vmem>>, vector<2x1xf32>,
    %c0_210 = arith.constant 0 : index
    %c0_211 = arith.constant 0 : index
    %540 = vector.load %arg31[%c0_210, %c0_211] : memref<2x128xf32, #tpu.memory_space<vmem>>, vector<2x128xf32>
    tpu.vector_store %arg31[%c0_210, %c0_211], %506 {strides = array<i32>} : memref<2x128xf32, #tpu.memory_space<vmem>>, vector<2x128xf32>,
    %c0_212 = arith.constant 0 : index
    %c0_213 = arith.constant 0 : index
    %541 = vector.load %arg2[%c0_212, %c0_213] : memref<2x1xf32, #tpu.memory_space<vmem>>, vector<2x1xf32>
    %542 = arith.subf %538, %541 : vector<2x1xf32>
    %543 = arith.mulf %542, %542 : vector<2x1xf32>
    %544 = vector.shape_cast %543 : vector<2x1xf32> to vector<1x2x1xf32>
    %cst_214 = arith.constant dense<0.000000e+00> : vector<1xf32>
    %545 = vector.multi_reduction <add>, %544, %cst_214 [1, 2] : vector<1x2x1xf32> to vector<1xf32>
    %546 = vector.shape_cast %545 : vector<1xf32> to vector<1x1x1xf32>
    %547 = vector.extract %546[0, 0, 0] : f32 from vector<1x1x1xf32>
    %cst_215 = arith.constant 2.000000e+00 : f32
    %548 = arith.divf %547, %cst_215 : f32
    %549 = vector.broadcast %548 : f32 to vector<1x1xf32>
    %c0_216 = arith.constant 0 : index
    %c0_217 = arith.constant 0 : index
    %550 = vector.load %arg32[%c0_216, %c0_217] : memref<1x1xf32, #tpu.memory_space<vmem>>, vector<1x1xf32>
    tpu.vector_store %arg32[%c0_216, %c0_217], %549 {strides = array<i32>} : memref<1x1xf32, #tpu.memory_space<vmem>>, vector<1x1xf32>,
    return
  }
}

</mosaic_0001>

<llo_original>
// kernel: tpu_custom_call.1
$region0: #{tpu_custom_call.1}
  #allocation0 [shape = 'u32[]', space=smem, size = 0x4, offset = 0x4, fixed_abs, tag = 'smem constant byte address 0x4 - core index']
  #allocation1 [shape = 'u32[144,128]{1,0:T(1,128)}', space=vmem, size = 0x12000, scoped, tag = 'internal scratch']
  #allocation2 [shape = 'f32[1,1]{1,0:T(1,128)S(1)}', space=vmem, size = 0x200, scoped, tag = 'scoped memory for tpu_custom_call.1']
  %s0 = inlined_call_operand.smem [shape: u32[33], index: -1, kind: input, shape index: {}]
  %s1 = sld [smem:[%s0]]
  %s2 = scalar_lea.smem %s0, 1
  %s3 = sld [smem:[%s2]]
  %s4 = scalar_lea.smem %s0, 2
  %s5 = sld [smem:[%s4]]
  %s6 = scalar_lea.smem %s0, 3
  %s7 = sld [smem:[%s6]]
  %s8 = scalar_lea.smem %s0, 4
  %s9 = sld [smem:[%s8]]
  %s10 = scalar_lea.smem %s0, 5
  %s11 = sld [smem:[%s10]]
  %s12 = scalar_lea.smem %s0, 6
  %s13 = sld [smem:[%s12]]
  %s14 = scalar_lea.smem %s0, 7
  %s15 = sld [smem:[%s14]]
  %s16 = scalar_lea.smem %s0, 8
  %s17 = sld [smem:[%s16]]
  %s18 = scalar_lea.smem %s0, 9
  %s19 = sld [smem:[%s18]]
  %s20 = scalar_lea.smem %s0, 10
  %s21 = sld [smem:[%s20]]
  %s22 = scalar_lea.smem %s0, 11
  %s23 = sld [smem:[%s22]]
  %s24 = scalar_lea.smem %s0, 12
  %s25 = sld [smem:[%s24]]
  %s26 = scalar_lea.smem %s0, 13
  %s27 = sld [smem:[%s26]]
  %s28 = scalar_lea.smem %s0, 14
  %s29 = sld [smem:[%s28]]
  %s30 = scalar_lea.smem %s0, 15
  %s31 = sld [smem:[%s30]]
  %s32 = scalar_lea.smem %s0, 16
  %s33 = sld [smem:[%s32]]
  %s34 = scalar_lea.smem %s0, 17
  %s35 = sld [smem:[%s34]]
  %s36 = scalar_lea.smem %s0, 18
  %s37 = sld [smem:[%s36]]
  %s38 = scalar_lea.smem %s0, 19
  %s39 = sld [smem:[%s38]]
  %s40 = scalar_lea.smem %s0, 20
  %s41 = sld [smem:[%s40]]
  %s42 = scalar_lea.smem %s0, 21
  %s43 = sld [smem:[%s42]]
  %s44 = scalar_lea.smem %s0, 22
  %s45 = sld [smem:[%s44]]
  %s46 = scalar_lea.smem %s0, 23
  %s47 = sld [smem:[%s46]]
  %s48 = scalar_lea.smem %s0, 24
  %s49 = sld [smem:[%s48]]
  %s50 = scalar_lea.smem %s0, 25
  %s51 = sld [smem:[%s50]]
  %s52 = scalar_lea.smem %s0, 26
  %s53 = sld [smem:[%s52]]
  %s54 = scalar_lea.smem %s0, 27
  %s55 = sld [smem:[%s54]]
  %s56 = scalar_lea.smem %s0, 28
  %s57 = sld [smem:[%s56]]
  %s58 = scalar_lea.smem %s0, 29
  %s59 = sld [smem:[%s58]]
  %s60 = scalar_lea.smem %s0, 30
  %s61 = sld [smem:[%s60]]
  %s62 = scalar_lea.smem %s0, 31
  %s63 = sld [smem:[%s62]]
  %s64 = scalar_lea.smem %s0, 32
  %s65 = sld [smem:[%s64]]
  %66 = xla_tuple %s61, %s63, %s65
  %s67 = sld [smem:[#allocation0]]
  $region218: #{tpu_custom_call.1} parent=0
    _
  %s69 = ssub.s32 1, %s67
  %s70 = scalar_select 0, %s69, %s67
  %v71 = vstv %s59
  %72 = vst [vmem:[#allocation2] sm:$0x1] %v71
  $region1: #{tpu_custom_call.1} parent=0
    #allocation3 [shape = 'u8[1024]{0}', space=vmem, size = 0x400, scoped, tag = 'input window, operand 0, single buffered']
    #allocation4 [shape = 's32[1]{0}', space=sflag, size = 0x4, scoped, tag = 'scoped memory for tpu_custom_call.1']
    #allocation5 [shape = 's32[1]{0}', space=sflag, size = 0x4, scoped, tag = 'scoped memory for tpu_custom_call.1']
    #allocation6 [shape = 'u8[1024]{0}', space=vmem, size = 0x400, scoped, tag = 'input window, operand 1, single buffered']
    #allocation7 [shape = 's32[1]{0}', space=sflag, size = 0x4, scoped, tag = 'scoped memory for tpu_custom_call.1']
    #allocation8 [shape = 'u8[32768]{0}', space=vmem, size = 0x8000, scoped, tag = 'input window, operand 3, single buffered']
    #allocation9 [shape = 'u8[512]{0}', space=vmem, size = 0x400, scoped, tag = 'input window, operand 6, single buffered']
    #allocation10 [shape = 's32[1]{0}', space=sflag, size = 0x4, scoped, tag = 'scoped memory for tpu_custom_call.1']
    #allocation11 [shape = 'u8[512]{0}', space=vmem, size = 0x400, scoped, tag = 'input window, operand 7, single buffered']
    #allocation12 [shape = 'u8[196608]{0}', space=vmem, size = 0x30000, scoped, tag = 'input window, operand 8, single buffered']
    #allocation13 [shape = 's32[1]{0}', space=sflag, size = 0x4, scoped, tag = 'scoped memory for tpu_custom_call.1']
    #allocation14 [shape = 'u8[32768]{0}', space=vmem, size = 0x8000, scoped, tag = 'input window, operand 10, single buffered']
    #allocation15 [shape = 'u8[1024]{0}', space=vmem, size = 0x400, scoped, tag = 'input window, operand 11, single buffered']
    #allocation16 [shape = 's32[1]{0}', space=sflag, size = 0x4, scoped, tag = 'scoped memory for tpu_custom_call.1']
    #allocation17 [shape = 'u8[1024]{0}', space=vmem, size = 0x400, scoped, tag = 'input window, operand 12, single buffered']
    #allocation18 [shape = 'u8[1024]{0}', space=vmem, size = 0x400, scoped, tag = 'input window, operand 13, single buffered']
    #allocation19 [shape = 's32[1]{0}', space=sflag, size = 0x4, scoped, tag = 'scoped memory for tpu_custom_call.1']
    #allocation20 [shape = 'u8[131072]{0}', space=vmem, size = 0x20000, scoped, tag = 'input window, operand 14, single buffered']
    #allocation21 [shape = 'u8[131072]{0}', space=vmem, size = 0x20000, scoped, tag = 'input window, operand 16, single buffered']
    #allocation22 [shape = 's32[1]{0}', space=sflag, size = 0x4, scoped, tag = 'scoped memory for tpu_custom_call.1']
    #allocation23 [shape = 'u8[1024]{0}', space=vmem, size = 0x400, scoped, tag = 'input window, operand 17, single buffered']
    #allocation24 [shape = 'u8[1024]{0}', space=vmem, size = 0x400, scoped, tag = 'input window, operand 18, single buffered']
    #allocation25 [shape = 's32[1]{0}', space=sflag, size = 0x4, scoped, tag = 'scoped memory for tpu_custom_call.1']
    #allocation26 [shape = 'u8[1024]{0}', space=vmem, size = 0x400, scoped, tag = 'input window, operand 19, single buffered']
    #allocation27 [shape = 'u8[32768]{0}', space=vmem, size = 0x8000, scoped, tag = 'input window, operand 22, single buffered']
    #allocation28 [shape = 's32[1]{0}', space=sflag, size = 0x4, scoped, tag = 'scoped memory for tpu_custom_call.1']
    #allocation29 [shape = 'u8[32768]{0}', space=vmem, size = 0x8000, scoped, tag = 'input window, operand 24, single buffered']
    #allocation30 [shape = 'u8[32768]{0}', space=vmem, size = 0x8000, scoped, tag = 'input window, operand 26, single buffered']
    #allocation31 [shape = 's32[1]{0}', space=sflag, size = 0x4, scoped, tag = 'scoped memory for tpu_custom_call.1']
    #allocation32 [shape = 'u8[1024]{0}', space=vmem, size = 0x400, scoped, tag = 'output window, operand 1, single buffered']
    #allocation33 [shape = 'u8[512]{0}', space=vmem, size = 0x400, scoped, tag = 'output window, operand 2, single buffered']
    #allocation34 [shape = 's32[1]{0}', space=sflag, size = 0x4, scoped, tag = 'scoped memory for tpu_custom_call.1']
    %73 = vsyncpa [#allocation4], 0
    %74 = vsyncpa [#allocation7], 0
    %75 = vsyncpa [#allocation10], 0
    %76 = vsyncpa [#allocation13], 0
    %77 = vsyncpa [#allocation16], 0
    %78 = vsyncpa [#allocation19], 0
    %79 = vsyncpa [#allocation22], 0
    %80 = vsyncpa [#allocation25], 0
    %81 = vsyncpa [#allocation28], 0
    %82 = vsyncpa [#allocation31], 0
    %83 = vsyncpa [#allocation5], 0
    %84 = vsyncpa [#allocation34], 0
    // Predicated region
    $region2: #{tpu_custom_call.1} parent=1 // pred_check
      _
    $region3: #{tpu_custom_call.1} parent=1 // pred_check_branch
      %86 = sbr.rel (0) target = $region5
    $region4: #{tpu_custom_call.1} parent=1 // pred_region
      %s88 = ssub.s32 32, 32
      %89 = vsyncadd [#allocation4], %s88
      %s91 = sshll.u32 [#allocation3], 4
      %s92 = int_to_ptr.vmem [resolvable:$true] %s91
      %94 = dma.hbm_to_vmem [thread:$0]  %s1, 32, %s92, [#allocation4]
    $region5: #{tpu_custom_call.1} parent=1 // pred_fallthru
      _
    // Predicated region
    $region6: #{tpu_custom_call.1} parent=1 // pred_check
      _
    $region7: #{tpu_custom_call.1} parent=1 // pred_check_branch
      %96 = sbr.rel (0) target = $region9
    $region8: #{tpu_custom_call.1} parent=1 // pred_region
      %s98 = ssub.s32 32, 32
      %99 = vsyncadd [#allocation7], %s98
      %s101 = sshll.u32 [#allocation6], 4
      %s102 = int_to_ptr.vmem [resolvable:$true] %s101
      %104 = dma.hbm_to_vmem [thread:$0]  %s3, 32, %s102, [#allocation7]
    $region9: #{tpu_custom_call.1} parent=1 // pred_fallthru
      _
    // Predicated region
    $region10: #{tpu_custom_call.1} parent=1 // pred_check
      _
    $region11: #{tpu_custom_call.1} parent=1 // pred_check_branch
      %106 = sbr.rel (0) target = $region13
    $region12: #{tpu_custom_call.1} parent=1 // pred_region
      _
    $region13: #{tpu_custom_call.1} parent=1 // pred_fallthru
      _
    // Predicated region
    $region14: #{tpu_custom_call.1} parent=1 // pred_check
      _
    $region15: #{tpu_custom_call.1} parent=1 // pred_check_branch
      %108 = sbr.rel (0) target = $region17
    $region16: #{tpu_custom_call.1} parent=1 // pred_region
      %s110 = ssub.s32 1024, 1024
      %111 = vsyncadd [#allocation7], %s110
      %s112 = sshll.u32 [#allocation8], 4
      %s113 = int_to_ptr.vmem [resolvable:$true] %s112
      %118 = dma.hbm_to_vmem [thread:$0]  %s7, 1024, %s113, [#allocation7], 64, 64, 4
    $region17: #{tpu_custom_call.1} parent=1 // pred_fallthru
      _
    // Predicated region
    $region18: #{tpu_custom_call.1} parent=1 // pred_check
      _
    $region19: #{tpu_custom_call.1} parent=1 // pred_check_branch
      %120 = sbr.rel (0) target = $region21
    $region20: #{tpu_custom_call.1} parent=1 // pred_region
      _
    $region21: #{tpu_custom_call.1} parent=1 // pred_fallthru
      _
    // Predicated region
    $region22: #{tpu_custom_call.1} parent=1 // pred_check
      _
    $region23: #{tpu_custom_call.1} parent=1 // pred_check_branch
      %122 = sbr.rel (0) target = $region25
    $region24: #{tpu_custom_call.1} parent=1 // pred_region
      _
    $region25: #{tpu_custom_call.1} parent=1 // pred_fallthru
      _
    // Predicated region
    $region26: #{tpu_custom_call.1} parent=1 // pred_check
      _
    $region27: #{tpu_custom_call.1} parent=1 // pred_check_branch
      %124 = sbr.rel (0) target = $region29
    $region28: #{tpu_custom_call.1} parent=1 // pred_region
      %s126 = ssub.s32 16, 16
      %127 = vsyncadd [#allocation10], %s126
      %s129 = sshll.u32 [#allocation9], 4
      %s130 = int_to_ptr.vmem [resolvable:$true] %s129
      %132 = dma.hbm_to_vmem [thread:$0]  %s13, 16, %s130, [#allocation10]
    $region29: #{tpu_custom_call.1} parent=1 // pred_fallthru
      _
    // Predicated region
    $region30: #{tpu_custom_call.1} parent=1 // pred_check
      _
    $region31: #{tpu_custom_call.1} parent=1 // pred_check_branch
      %134 = sbr.rel (0) target = $region33
    $region32: #{tpu_custom_call.1} parent=1 // pred_region
      %s136 = ssub.s32 16, 16
      %137 = vsyncadd [#allocation10], %s136
      %s139 = sshll.u32 [#allocation11], 4
      %s140 = int_to_ptr.vmem [resolvable:$true] %s139
      %142 = dma.hbm_to_vmem [thread:$0]  %s15, 16, %s140, [#allocation10]
    $region33: #{tpu_custom_call.1} parent=1 // pred_fallthru
      _
    // Predicated region
    $region34: #{tpu_custom_call.1} parent=1 // pred_check
      _
    $region35: #{tpu_custom_call.1} parent=1 // pred_check_branch
      %144 = sbr.rel (0) target = $region37
    $region36: #{tpu_custom_call.1} parent=1 // pred_region
      %s146 = ssub.s32 6144, 6144
      %147 = vsyncadd [#allocation13], %s146
      %s148 = sshll.u32 [#allocation12], 4
      %s149 = int_to_ptr.vmem [resolvable:$true] %s148
      %154 = dma.hbm_to_vmem [thread:$0]  %s17, 6144, %s149, [#allocation13], 192, 192, 12
    $region37: #{tpu_custom_call.1} parent=1 // pred_fallthru
      _
    // Predicated region
    $region38: #{tpu_custom_call.1} parent=1 // pred_check
      _
    $region39: #{tpu_custom_call.1} parent=1 // pred_check_branch
      %156 = sbr.rel (0) target = $region41
    $region40: #{tpu_custom_call.1} parent=1 // pred_region
      _
    $region41: #{tpu_custom_call.1} parent=1 // pred_fallthru
      _
    // Predicated region
    $region42: #{tpu_custom_call.1} parent=1 // pred_check
      _
    $region43: #{tpu_custom_call.1} parent=1 // pred_check_branch
      %158 = sbr.rel (0) target = $region45
    $region44: #{tpu_custom_call.1} parent=1 // pred_region
      %s160 = ssub.s32 1024, 1024
      %161 = vsyncadd [#allocation13], %s160
      %s162 = sshll.u32 [#allocation14], 4
      %s163 = int_to_ptr.vmem [resolvable:$true] %s162
      %168 = dma.hbm_to_vmem [thread:$0]  %s21, 1024, %s163, [#allocation13], 64, 64, 4
    $region45: #{tpu_custom_call.1} parent=1 // pred_fallthru
      _
    // Predicated region
    $region46: #{tpu_custom_call.1} parent=1 // pred_check
      _
    $region47: #{tpu_custom_call.1} parent=1 // pred_check_branch
      %170 = sbr.rel (0) target = $region49
    $region48: #{tpu_custom_call.1} parent=1 // pred_region
      %s172 = ssub.s32 32, 32
      %173 = vsyncadd [#allocation16], %s172
      %s174 = sshll.u32 [#allocation15], 4
      %s175 = int_to_ptr.vmem [resolvable:$true] %s174
      %180 = dma.hbm_to_vmem [thread:$0]  %s23, 32, %s175, [#allocation16], 16, 16, 1
    $region49: #{tpu_custom_call.1} parent=1 // pred_fallthru
      _
    // Predicated region
    $region50: #{tpu_custom_call.1} parent=1 // pred_check
      _
    $region51: #{tpu_custom_call.1} parent=1 // pred_check_branch
      %182 = sbr.rel (0) target = $region53
    $region52: #{tpu_custom_call.1} parent=1 // pred_region
      %s184 = ssub.s32 32, 32
      %185 = vsyncadd [#allocation16], %s184
      %s186 = sshll.u32 [#allocation17], 4
      %s187 = int_to_ptr.vmem [resolvable:$true] %s186
      %192 = dma.hbm_to_vmem [thread:$0]  %s25, 32, %s187, [#allocation16], 16, 16, 1
    $region53: #{tpu_custom_call.1} parent=1 // pred_fallthru
      _
    // Predicated region
    $region54: #{tpu_custom_call.1} parent=1 // pred_check
      _
    $region55: #{tpu_custom_call.1} parent=1 // pred_check_branch
      %194 = sbr.rel (0) target = $region57
    $region56: #{tpu_custom_call.1} parent=1 // pred_region
      %s196 = ssub.s32 32, 32
      %197 = vsyncadd [#allocation19], %s196
      %s198 = sshll.u32 [#allocation18], 4
      %s199 = int_to_ptr.vmem [resolvable:$true] %s198
      %204 = dma.hbm_to_vmem [thread:$0]  %s27, 32, %s199, [#allocation19], 16, 16, 1
    $region57: #{tpu_custom_call.1} parent=1 // pred_fallthru
      _
    // Predicated region
    $region58: #{tpu_custom_call.1} parent=1 // pred_check
      _
    $region59: #{tpu_custom_call.1} parent=1 // pred_check_branch
      %206 = sbr.rel (0) target = $region61
    $region60: #{tpu_custom_call.1} parent=1 // pred_region
      %s208 = ssub.s32 4096, 4096
      %209 = vsyncadd [#allocation19], %s208
      %s210 = sshll.u32 [#allocation20], 4
      %s211 = int_to_ptr.vmem [resolvable:$true] %s210
      %216 = dma.hbm_to_vmem [thread:$0]  %s29, 4096, %s211, [#allocation19], 128, 128, 8
    $region61: #{tpu_custom_call.1} parent=1 // pred_fallthru
      _
    // Predicated region
    $region62: #{tpu_custom_call.1} parent=1 // pred_check
      _
    $region63: #{tpu_custom_call.1} parent=1 // pred_check_branch
      %218 = sbr.rel (0) target = $region65
    $region64: #{tpu_custom_call.1} parent=1 // pred_region
      _
    $region65: #{tpu_custom_call.1} parent=1 // pred_fallthru
      _
    // Predicated region
    $region66: #{tpu_custom_call.1} parent=1 // pred_check
      _
    $region67: #{tpu_custom_call.1} parent=1 // pred_check_branch
      %220 = sbr.rel (0) target = $region69
    $region68: #{tpu_custom_call.1} parent=1 // pred_region
      %s222 = ssub.s32 4096, 4096
      %223 = vsyncadd [#allocation22], %s222
      %s224 = sshll.u32 [#allocation21], 4
      %s225 = int_to_ptr.vmem [resolvable:$true] %s224
      %230 = dma.hbm_to_vmem [thread:$0]  %s33, 4096, %s225, [#allocation22], 64, 64, 4
    $region69: #{tpu_custom_call.1} parent=1 // pred_fallthru
      _
    // Predicated region
    $region70: #{tpu_custom_call.1} parent=1 // pred_check
      _
    $region71: #{tpu_custom_call.1} parent=1 // pred_check_branch
      %232 = sbr.rel (0) target = $region73
    $region72: #{tpu_custom_call.1} parent=1 // pred_region
      %s234 = ssub.s32 32, 32
      %235 = vsyncadd [#allocation22], %s234
      %s236 = sshll.u32 [#allocation23], 4
      %s237 = int_to_ptr.vmem [resolvable:$true] %s236
      %242 = dma.hbm_to_vmem [thread:$0]  %s35, 32, %s237, [#allocation22], 16, 16, 1
    $region73: #{tpu_custom_call.1} parent=1 // pred_fallthru
      _
    // Predicated region
    $region74: #{tpu_custom_call.1} parent=1 // pred_check
      _
    $region75: #{tpu_custom_call.1} parent=1 // pred_check_branch
      %244 = sbr.rel (0) target = $region77
    $region76: #{tpu_custom_call.1} parent=1 // pred_region
      %s246 = ssub.s32 32, 32
      %247 = vsyncadd [#allocation25], %s246
      %s248 = sshll.u32 [#allocation24], 4
      %s249 = int_to_ptr.vmem [resolvable:$true] %s248
      %254 = dma.hbm_to_vmem [thread:$0]  %s37, 32, %s249, [#allocation25], 16, 16, 1
    $region77: #{tpu_custom_call.1} parent=1 // pred_fallthru
      _
    // Predicated region
    $region78: #{tpu_custom_call.1} parent=1 // pred_check
      _
    $region79: #{tpu_custom_call.1} parent=1 // pred_check_branch
      %256 = sbr.rel (0) target = $region81
    $region80: #{tpu_custom_call.1} parent=1 // pred_region
      %s258 = ssub.s32 32, 32
      %259 = vsyncadd [#allocation25], %s258
      %s260 = sshll.u32 [#allocation26], 4
      %s261 = int_to_ptr.vmem [resolvable:$true] %s260
      %266 = dma.hbm_to_vmem [thread:$0]  %s39, 32, %s261, [#allocation25], 16, 16, 1
    $region81: #{tpu_custom_call.1} parent=1 // pred_fallthru
      _
    // Predicated region
    $region82: #{tpu_custom_call.1} parent=1 // pred_check
      _
    $region83: #{tpu_custom_call.1} parent=1 // pred_check_branch
      %268 = sbr.rel (0) target = $region85
    $region84: #{tpu_custom_call.1} parent=1 // pred_region
      _
    $region85: #{tpu_custom_call.1} parent=1 // pred_fallthru
      _
    // Predicated region
    $region86: #{tpu_custom_call.1} parent=1 // pred_check
      _
    $region87: #{tpu_custom_call.1} parent=1 // pred_check_branch
      %270 = sbr.rel (0) target = $region89
    $region88: #{tpu_custom_call.1} parent=1 // pred_region
      _
    $region89: #{tpu_custom_call.1} parent=1 // pred_fallthru
      _
    // Predicated region
    $region90: #{tpu_custom_call.1} parent=1 // pred_check
      _
    $region91: #{tpu_custom_call.1} parent=1 // pred_check_branch
      %272 = sbr.rel (0) target = $region93
    $region92: #{tpu_custom_call.1} parent=1 // pred_region
      %s274 = ssub.s32 1024, 1024
      %275 = vsyncadd [#allocation28], %s274
      %s276 = sshll.u32 [#allocation27], 4
      %s277 = int_to_ptr.vmem [resolvable:$true] %s276
      %282 = dma.hbm_to_vmem [thread:$0]  %s45, 1024, %s277, [#allocation28], 64, 64, 4
    $region93: #{tpu_custom_call.1} parent=1 // pred_fallthru
      _
    // Predicated region
    $region94: #{tpu_custom_call.1} parent=1 // pred_check
      _
    $region95: #{tpu_custom_call.1} parent=1 // pred_check_branch
      %284 = sbr.rel (0) target = $region97
    $region96: #{tpu_custom_call.1} parent=1 // pred_region
      _
    $region97: #{tpu_custom_call.1} parent=1 // pred_fallthru
      _
    // Predicated region
    $region98: #{tpu_custom_call.1} parent=1 // pred_check
      _
    $region99: #{tpu_custom_call.1} parent=1 // pred_check_branch
      %286 = sbr.rel (0) target = $region101
    $region100: #{tpu_custom_call.1} parent=1 // pred_region
      %s288 = ssub.s32 1024, 1024
      %289 = vsyncadd [#allocation28], %s288
      %s290 = sshll.u32 [#allocation29], 4
      %s291 = int_to_ptr.vmem [resolvable:$true] %s290
      %296 = dma.hbm_to_vmem [thread:$0]  %s49, 1024, %s291, [#allocation28], 64, 64, 4
    $region101: #{tpu_custom_call.1} parent=1 // pred_fallthru
      _
    // Predicated region
    $region102: #{tpu_custom_call.1} parent=1 // pred_check
      _
    $region103: #{tpu_custom_call.1} parent=1 // pred_check_branch
      %298 = sbr.rel (0) target = $region105
    $region104: #{tpu_custom_call.1} parent=1 // pred_region
      _
    $region105: #{tpu_custom_call.1} parent=1 // pred_fallthru
      _
    // Predicated region
    $region106: #{tpu_custom_call.1} parent=1 // pred_check
      _
    $region107: #{tpu_custom_call.1} parent=1 // pred_check_branch
      %300 = sbr.rel (0) target = $region109
    $region108: #{tpu_custom_call.1} parent=1 // pred_region
      %s302 = ssub.s32 1024, 1024
      %303 = vsyncadd [#allocation31], %s302
      %s304 = sshll.u32 [#allocation30], 4
      %s305 = int_to_ptr.vmem [resolvable:$true] %s304
      %310 = dma.hbm_to_vmem [thread:$0]  %s53, 1024, %s305, [#allocation31], 64, 64, 4
    $region109: #{tpu_custom_call.1} parent=1 // pred_fallthru
      _
    // Predicated region
    $region110: #{tpu_custom_call.1} parent=1 // pred_check
      _
    $region111: #{tpu_custom_call.1} parent=1 // pred_check_branch
      %312 = sbr.rel (0) target = $region113
    $region112: #{tpu_custom_call.1} parent=1 // pred_region
      _
    $region113: #{tpu_custom_call.1} parent=1 // pred_fallthru
      _
    // Predicated region
    $region114: #{tpu_custom_call.1} parent=1 // pred_check
      _
    $region115: #{tpu_custom_call.1} parent=1 // pred_check_branch
      %314 = sbr.rel (0) target = $region117
    $region116: #{tpu_custom_call.1} parent=1 // pred_region
      _
    $region117: #{tpu_custom_call.1} parent=1 // pred_fallthru
      _
    // Predicated region
    $region118: #{tpu_custom_call.1} parent=1 // pred_check
      _
    $region119: #{tpu_custom_call.1} parent=1 // pred_check_branch
      %316 = sbr.rel (0) target = $region121
    $region120: #{tpu_custom_call.1} parent=1 // pred_region
      _
    $region121: #{tpu_custom_call.1} parent=1 // pred_fallthru
      _
    // Predicated region
    $region122: #{tpu_custom_call.1} parent=1 // pred_check
      _
    $region123: #{tpu_custom_call.1} parent=1 // pred_check_branch
      %318 = sbr.rel (0) target = $region125
    $region124: #{tpu_custom_call.1} parent=1 // pred_region
      %319 = dma.done [#allocation4], 32
    $region125: #{tpu_custom_call.1} parent=1 // pred_fallthru
      _
    // Predicated region
    $region126: #{tpu_custom_call.1} parent=1 // pred_check
      _
    $region127: #{tpu_custom_call.1} parent=1 // pred_check_branch
      %321 = sbr.rel (0) target = $region129
    $region128: #{tpu_custom_call.1} parent=1 // pred_region
      %322 = dma.done [#allocation7], 32
    $region129: #{tpu_custom_call.1} parent=1 // pred_fallthru
      _
    // Predicated region
    $region130: #{tpu_custom_call.1} parent=1 // pred_check
      _
    $region131: #{tpu_custom_call.1} parent=1 // pred_check_branch
      %324 = sbr.rel (0) target = $region133
    $region132: #{tpu_custom_call.1} parent=1 // pred_region
      %325 = dma.done [#allocation7], 1024
    $region133: #{tpu_custom_call.1} parent=1 // pred_fallthru
      _
    // Predicated region
    $region134: #{tpu_custom_call.1} parent=1 // pred_check
      _
    $region135: #{tpu_custom_call.1} parent=1 // pred_check_branch
      %327 = sbr.rel (0) target = $region137
    $region136: #{tpu_custom_call.1} parent=1 // pred_region
      %328 = dma.done [#allocation10], 16
    $region137: #{tpu_custom_call.1} parent=1 // pred_fallthru
      _
    // Predicated region
    $region138: #{tpu_custom_call.1} parent=1 // pred_check
      _
    $region139: #{tpu_custom_call.1} parent=1 // pred_check_branch
      %330 = sbr.rel (0) target = $region141
    $region140: #{tpu_custom_call.1} parent=1 // pred_region
      %331 = dma.done [#allocation10], 16
    $region141: #{tpu_custom_call.1} parent=1 // pred_fallthru
      _
    // Predicated region
    $region142: #{tpu_custom_call.1} parent=1 // pred_check
      _
    $region143: #{tpu_custom_call.1} parent=1 // pred_check_branch
      %333 = sbr.rel (0) target = $region145
    $region144: #{tpu_custom_call.1} parent=1 // pred_region
      %334 = dma.done [#allocation13], 6144
    $region145: #{tpu_custom_call.1} parent=1 // pred_fallthru
      _
    // Predicated region
    $region146: #{tpu_custom_call.1} parent=1 // pred_check
      _
    $region147: #{tpu_custom_call.1} parent=1 // pred_check_branch
      %336 = sbr.rel (0) target = $region149
    $region148: #{tpu_custom_call.1} parent=1 // pred_region
      %337 = dma.done [#allocation13], 1024
    $region149: #{tpu_custom_call.1} parent=1 // pred_fallthru
      _
    // Predicated region
    $region150: #{tpu_custom_call.1} parent=1 // pred_check
      _
    $region151: #{tpu_custom_call.1} parent=1 // pred_check_branch
      %339 = sbr.rel (0) target = $region153
    $region152: #{tpu_custom_call.1} parent=1 // pred_region
      %340 = dma.done [#allocation16], 32
    $region153: #{tpu_custom_call.1} parent=1 // pred_fallthru
      _
    // Predicated region
    $region154: #{tpu_custom_call.1} parent=1 // pred_check
      _
    $region155: #{tpu_custom_call.1} parent=1 // pred_check_branch
      %342 = sbr.rel (0) target = $region157
    $region156: #{tpu_custom_call.1} parent=1 // pred_region
      %343 = dma.done [#allocation16], 32
    $region157: #{tpu_custom_call.1} parent=1 // pred_fallthru
      _
    // Predicated region
    $region158: #{tpu_custom_call.1} parent=1 // pred_check
      _
    $region159: #{tpu_custom_call.1} parent=1 // pred_check_branch
      %345 = sbr.rel (0) target = $region161
    $region160: #{tpu_custom_call.1} parent=1 // pred_region
      %346 = dma.done [#allocation19], 32
    $region161: #{tpu_custom_call.1} parent=1 // pred_fallthru
      _
    // Predicated region
    $region162: #{tpu_custom_call.1} parent=1 // pred_check
      _
    $region163: #{tpu_custom_call.1} parent=1 // pred_check_branch
      %348 = sbr.rel (0) target = $region165
    $region164: #{tpu_custom_call.1} parent=1 // pred_region
      %349 = dma.done [#allocation19], 4096
    $region165: #{tpu_custom_call.1} parent=1 // pred_fallthru
      _
    // Predicated region
    $region166: #{tpu_custom_call.1} parent=1 // pred_check
      _
    $region167: #{tpu_custom_call.1} parent=1 // pred_check_branch
      %351 = sbr.rel (0) target = $region169
    $region168: #{tpu_custom_call.1} parent=1 // pred_region
      %352 = dma.done [#allocation22], 4096
    $region169: #{tpu_custom_call.1} parent=1 // pred_fallthru
      _
    // Predicated region
    $region170: #{tpu_custom_call.1} parent=1 // pred_check
      _
    $region171: #{tpu_custom_call.1} parent=1 // pred_check_branch
      %354 = sbr.rel (0) target = $region173
    $region172: #{tpu_custom_call.1} parent=1 // pred_region
      %355 = dma.done [#allocation22], 32
    $region173: #{tpu_custom_call.1} parent=1 // pred_fallthru
      _
    // Predicated region
    $region174: #{tpu_custom_call.1} parent=1 // pred_check
      _
    $region175: #{tpu_custom_call.1} parent=1 // pred_check_branch
      %357 = sbr.rel (0) target = $region177
    $region176: #{tpu_custom_call.1} parent=1 // pred_region
      %358 = dma.done [#allocation25], 32
    $region177: #{tpu_custom_call.1} parent=1 // pred_fallthru
      _
    // Predicated region
    $region178: #{tpu_custom_call.1} parent=1 // pred_check
      _
    $region179: #{tpu_custom_call.1} parent=1 // pred_check_branch
      %360 = sbr.rel (0) target = $region181
    $region180: #{tpu_custom_call.1} parent=1 // pred_region
      %361 = dma.done [#allocation25], 32
    $region181: #{tpu_custom_call.1} parent=1 // pred_fallthru
      _
    // Predicated region
    $region182: #{tpu_custom_call.1} parent=1 // pred_check
      _
    $region183: #{tpu_custom_call.1} parent=1 // pred_check_branch
      %363 = sbr.rel (0) target = $region185
    $region184: #{tpu_custom_call.1} parent=1 // pred_region
      %364 = dma.done [#allocation28], 1024
    $region185: #{tpu_custom_call.1} parent=1 // pred_fallthru
      _
    // Predicated region
    $region186: #{tpu_custom_call.1} parent=1 // pred_check
      _
    $region187: #{tpu_custom_call.1} parent=1 // pred_check_branch
      %366 = sbr.rel (0) target = $region189
    $region188: #{tpu_custom_call.1} parent=1 // pred_region
      %367 = dma.done [#allocation28], 1024
    $region189: #{tpu_custom_call.1} parent=1 // pred_fallthru
      _
    // Predicated region
    $region190: #{tpu_custom_call.1} parent=1 // pred_check
      _
    $region191: #{tpu_custom_call.1} parent=1 // pred_check_branch
      %369 = sbr.rel (0) target = $region193
    $region192: #{tpu_custom_call.1} parent=1 // pred_region
      %370 = dma.done [#allocation31], 1024
    $region193: #{tpu_custom_call.1} parent=1 // pred_fallthru
      _
    %v372 = vld [vmem:[#allocation3] sm:$0x3]
    %v373 = vlaneseq
    %v374 = vand.u32 %v373, 127
    %v375 = vlaneseq
    %v376 = vshrl.u32 %v375, 7
    %v377 = vsub.s32 0, %v376
    %v378 = vrot.slane %v372, %v377
    %380 = vbcast.lane.b32.xlu0 %v378, 256
    %v381 = vpop.permute.xlu0 %380
    %v382 = vlaneseq
    %v383 = vshrl.u32 %v382, 7
    %v384 = vsub.s32 1, %v383
    %v385 = vrot.slane %v372, %v384
    %387 = vbcast.lane.b32.xlu0 %v385, 256
    %v388 = vpop.permute.xlu0 %387
    %vm389 = vcmp.eq.s32.totalorder %v381, %v374
    %vm390 = vcmp.eq.s32.totalorder %v388, %v374
    %v391 = vsel %vm389, 1.0, 0.0
    %v392 = vsel %vm390, 1.0, 0.0
    %v393 = vpack.c.bf16 %v391, %v391
    %v394 = vpack.c.bf16 %v392, %v392
    %v395 = vld [vmem:[#allocation8] sm:$0xf]
    %v396 = vld [vmem:[#allocation8 + $0x4] sm:$0xf]
    %v397 = vld [vmem:[#allocation8 + $0x8] sm:$0xf]
    %v398 = vld [vmem:[#allocation8 + $0xc] sm:$0xf]
    %v399 = vld [vmem:[#allocation8 + $0x10] sm:$0xf]
    %v400 = vld [vmem:[#allocation8 + $0x14] sm:$0xf]
    %v401 = vld [vmem:[#allocation8 + $0x18] sm:$0xf]
    %v402 = vld [vmem:[#allocation8 + $0x1c] sm:$0xf]
    %v403 = vld [vmem:[#allocation8 + $0x20] sm:$0xf]
    %v404 = vld [vmem:[#allocation8 + $0x24] sm:$0xf]
    %v405 = vld [vmem:[#allocation8 + $0x28] sm:$0xf]
    %v406 = vld [vmem:[#allocation8 + $0x2c] sm:$0xf]
    %v407 = vld [vmem:[#allocation8 + $0x30] sm:$0xf]
    %v408 = vld [vmem:[#allocation8 + $0x34] sm:$0xf]
    %v409 = vld [vmem:[#allocation8 + $0x38] sm:$0xf]
    %v410 = vld [vmem:[#allocation8 + $0x3c] sm:$0xf]
    %v411 = vld [vmem:[%s9] sm:$0xff]
    %v414 = vunpack.c.l.b16 %v393
    %v415 = vunpack.c.l.b16 %v394
    %v416 = vpack.c.b16 %v415, %v414
    %v434 = vunpack.c.l.b16 %v395
    %v435 = vunpack.c.l.b16 %v396
    %v436 = vunpack.c.l.b16 %v397
    %v437 = vunpack.c.l.b16 %v398
    %v438 = vunpack.c.l.b16 %v399
    %v439 = vunpack.c.l.b16 %v400
    %v440 = vunpack.c.l.b16 %v401
    %v441 = vunpack.c.l.b16 %v402
    %v442 = vunpack.c.l.b16 %v403
    %v443 = vunpack.c.l.b16 %v404
    %v444 = vunpack.c.l.b16 %v405
    %v445 = vunpack.c.l.b16 %v406
    %v446 = vunpack.c.l.b16 %v407
    %v447 = vunpack.c.l.b16 %v408
    %v448 = vunpack.c.l.b16 %v409
    %v449 = vunpack.c.l.b16 %v410
    %v450 = vpack.c.b16 %v435, %v434
    %v451 = vpack.c.b16 %v437, %v436
    %v452 = vpack.c.b16 %v439, %v438
    %v453 = vpack.c.b16 %v441, %v440
    %v454 = vpack.c.b16 %v443, %v442
    %v455 = vpack.c.b16 %v445, %v444
    %v456 = vpack.c.b16 %v447, %v446
    %v457 = vpack.c.b16 %v449, %v448
    %466 = vmatprep.subr.bf16.mxu0 0
    %467 = vmatpush1.bf16.msra.mxu0 %v450
    %468 = vmatprep.subr.bf16.mxu0 0
    %469 = vmatpush1.bf16.msra.mxu0 %v451
    %470 = vmatprep.subr.bf16.mxu0 0
    %471 = vmatpush1.bf16.msra.mxu0 %v452
    %472 = vmatprep.subr.bf16.mxu0 0
    %473 = vmatpush1.bf16.msra.mxu0 %v453
    %474 = vmatprep.subr.bf16.mxu0 0
    %475 = vmatpush1.bf16.msra.mxu0 %v454
    %476 = vmatprep.subr.bf16.mxu0 0
    %477 = vmatpush1.bf16.msra.mxu0 %v455
    %478 = vmatprep.subr.bf16.mxu0 0
    %479 = vmatpush1.bf16.msra.mxu0 %v456
    %480 = vmatprep.subr.bf16.mxu0 0
    %481 = vmatpush1.bf16.msra.mxu0 %v457
    %482 = vmatprep.subr.bf16.mxu0 0
    %483 = vmatpush1.bf16.msra.mxu0 0
    %484 = vmatprep.subr.bf16.mxu0 0
    %485 = vmatpush1.bf16.msra.mxu0 0
    %486 = vmatprep.subr.bf16.mxu0 0
    %487 = vmatpush1.bf16.msra.mxu0 0
    %488 = vmatprep.subr.bf16.mxu0 0
    %489 = vmatpush1.bf16.msra.mxu0 0
    %490 = vmatprep.subr.bf16.mxu0 0
    %491 = vmatpush1.bf16.msra.mxu0 0
    %492 = vmatprep.subr.bf16.mxu0 0
    %493 = vmatpush1.bf16.msra.mxu0 0
    %494 = vmatprep.subr.bf16.mxu0 0
    %495 = vmatpush1.bf16.msra.mxu0 0
    %496 = vmatprep.subr.bf16.mxu0 0
    %497 = vmatpush1.bf16.msra.mxu0 0
    %498 = vmatprep.mubr.bf16.mxu0 0
    %499 = vmatmul.mubr.bf16.gmra.mrb[0].mxu0 %v416
    %v500 = vpop.f32.mrb[0].mxu0
    %v501 = vadd.f32 %v411, %v500
    %v502 = vpop.f32.mrb[0].mxu0
    %v503 = vpop.f32.mrb[0].mxu0
    %v504 = vadd.f32 %v411, %v503
    %v505 = vpop.f32.mrb[0].mxu0
    %506 = vdwg.mxu0
    %v507 = vld [vmem:[%s11] sm:$0x1]
    %v509 = vlaneseq
    %v510 = vshrl.u32 %v509, 7
    %v511 = vsub.s32 0, %v510
    %v512 = vrot.slane %v507, %v511
    %v514 = vadd.f32 %v501, %v512
    %v515 = vadd.f32 %v504, %v512
    %v516 = vld [vmem:[#allocation9] sm:$0x1]
    %v517 = vld [vmem:[#allocation11] sm:$0x1]
    %518 = vadd.xlane.f32.xlu0 %v514
    %v519 = vpop.xlane.xlu0 %518
    %520 = vadd.xlane.f32.xlu0 %v515
    %v521 = vpop.xlane.xlu0 %520
    %v522 = vmul.f32 %v519, 0.015625
    %v523 = vmul.f32 %v521, 0.015625
    %v524 = vmul.f32 %v514, %v514
    %v525 = vmul.f32 %v515, %v515
    %526 = vadd.xlane.f32.xlu0 %v524
    %v527 = vpop.xlane.xlu0 %526
    %528 = vadd.xlane.f32.xlu0 %v525
    %v529 = vpop.xlane.xlu0 %528
    %v530 = vmul.f32 %v527, 0.015625
    %v531 = vmul.f32 %v529, 0.015625
    %v532 = vmul.f32 %v522, %v522
    %v533 = vmul.f32 %v523, %v523
    %v534 = vsub.f32 %v530, %v532
    %v535 = vsub.f32 %v531, %v533
    %v536 = vmax.f32 %v534, 0.0
    %v537 = vmax.f32 %v535, 0.0
    %v538 = vsub.f32 %v514, %v522
    %v539 = vsub.f32 %v515, %v523
    %v540 = vadd.f32 %v536, 1e-12
    %v541 = vadd.f32 %v537, 1e-12
    %v542 = vrsqrt.pop %v540
    %v543 = vrsqrt.pop %v541
    %v544 = vmul.f32 %v538, %v542
    %v545 = vmul.f32 %v539, %v543
    %v547 = vlaneseq
    %v548 = vshrl.u32 %v547, 7
    %v549 = vsub.s32 0, %v548
    %v550 = vrot.slane %v516, %v549
    %v552 = vmul.f32 %v544, %v550
    %v553 = vmul.f32 %v545, %v550
    %v555 = vlaneseq
    %v556 = vshrl.u32 %v555, 7
    %v557 = vsub.s32 0, %v556
    %v558 = vrot.slane %v517, %v557
    %v560 = vadd.f32 %v552, %v558
    %v561 = vadd.f32 %v553, %v558
    %v562 = vld [vmem:[#allocation6] sm:$0x3]
    %v563 = vsub.f32 1.0, %v562
    %v564 = vmul.f32 %v563, -1e+09
    %v565 = vpack.c.bf16 %v560, %v560
    %v566 = vpack.c.bf16 %v561, %v561
    %v567 = vld [vmem:[#allocation12] sm:$0xff]
    %v568 = vld [vmem:[#allocation12 + $0x8] sm:$0xf]
    %v569 = vld [vmem:[#allocation12 + $0xc] sm:$0xff]
    %v570 = vld [vmem:[#allocation12 + $0x14] sm:$0xf]
    %v571 = vld [vmem:[#allocation12 + $0x18] sm:$0xff]
    %v572 = vld [vmem:[#allocation12 + $0x20] sm:$0xf]
    %v573 = vld [vmem:[#allocation12 + $0x24] sm:$0xff]
    %v574 = vld [vmem:[#allocation12 + $0x2c] sm:$0xf]
    %v575 = vld [vmem:[#allocation12 + $0x30] sm:$0xff]
    %v576 = vld [vmem:[#allocation12 + $0x38] sm:$0xf]
    %v577 = vld [vmem:[#allocation12 + $0x3c] sm:$0xff]
    %v578 = vld [vmem:[#allocation12 + $0x44] sm:$0xf]
    %v579 = vld [vmem:[#allocation12 + $0x48] sm:$0xff]
    %v580 = vld [vmem:[#allocation12 + $0x50] sm:$0xf]
    %v581 = vld [vmem:[#allocation12 + $0x54] sm:$0xff]
    %v582 = vld [vmem:[#allocation12 + $0x5c] sm:$0xf]
    %v583 = vld [vmem:[#allocation12 + $0x60] sm:$0xff]
    %v584 = vld [vmem:[#allocation12 + $0x68] sm:$0xf]
    %v585 = vld [vmem:[#allocation12 + $0x6c] sm:$0xff]
    %v586 = vld [vmem:[#allocation12 + $0x74] sm:$0xf]
    %v587 = vld [vmem:[#allocation12 + $0x78] sm:$0xff]
    %v588 = vld [vmem:[#allocation12 + $0x80] sm:$0xf]
    %v589 = vld [vmem:[#allocation12 + $0x84] sm:$0xff]
    %v590 = vld [vmem:[#allocation12 + $0x8c] sm:$0xf]
    %v591 = vld [vmem:[#allocation12 + $0x90] sm:$0xff]
    %v592 = vld [vmem:[#allocation12 + $0x98] sm:$0xf]
    %v593 = vld [vmem:[#allocation12 + $0x9c] sm:$0xff]
    %v594 = vld [vmem:[#allocation12 + $0xa4] sm:$0xf]
    %v595 = vld [vmem:[#allocation12 + $0xa8] sm:$0xff]
    %v596 = vld [vmem:[#allocation12 + $0xb0] sm:$0xf]
    %v597 = vld [vmem:[#allocation12 + $0xb4] sm:$0xff]
    %v598 = vld [vmem:[#allocation12 + $0xbc] sm:$0xf]
    %v599 = vld [vmem:[%s19] sm:$0x7]
    %v601 = vlaneseq
    %v602 = vshrl.u32 %v601, 7
    %v603 = vsub.s32 0, %v602
    %v604 = vrot.slane %v599, %v603
    %v605 = vlaneseq
    %v606 = vshrl.u32 %v605, 7
    %v607 = vsub.s32 1, %v606
    %v608 = vrot.slane %v599, %v607
    %v609 = vlaneseq
    %v610 = vshrl.u32 %v609, 7
    %v611 = vsub.s32 2, %v610
    %v612 = vrot.slane %v599, %v611
    %v618 = vunpack.c.l.b16 %v565
    %v619 = vunpack.c.l.b16 %v566
    %v620 = vpack.c.b16 %v619, %v618
    %v654 = vunpack.c.l.b16 %v567
    %v655 = vunpack.c.h.b16 %v567
    %v656 = vunpack.c.l.b16 %v568
    %v657 = vunpack.c.l.b16 %v569
    %v658 = vunpack.c.h.b16 %v569
    %v659 = vunpack.c.l.b16 %v570
    %v660 = vunpack.c.l.b16 %v571
    %v661 = vunpack.c.h.b16 %v571
    %v662 = vunpack.c.l.b16 %v572
    %v663 = vunpack.c.l.b16 %v573
    %v664 = vunpack.c.h.b16 %v573
    %v665 = vunpack.c.l.b16 %v574
    %v666 = vunpack.c.l.b16 %v575
    %v667 = vunpack.c.h.b16 %v575
    %v668 = vunpack.c.l.b16 %v576
    %v669 = vunpack.c.l.b16 %v577
    %v670 = vunpack.c.h.b16 %v577
    %v671 = vunpack.c.l.b16 %v578
    %v672 = vunpack.c.l.b16 %v579
    %v673 = vunpack.c.h.b16 %v579
    %v674 = vunpack.c.l.b16 %v580
    %v675 = vunpack.c.l.b16 %v581
    %v676 = vunpack.c.h.b16 %v581
    %v677 = vunpack.c.l.b16 %v582
    %v678 = vunpack.c.l.b16 %v583
    %v679 = vunpack.c.h.b16 %v583
    %v680 = vunpack.c.l.b16 %v584
    %v681 = vunpack.c.l.b16 %v585
    %v682 = vunpack.c.h.b16 %v585
    %v683 = vunpack.c.l.b16 %v586
    %v684 = vunpack.c.l.b16 %v587
    %v685 = vunpack.c.h.b16 %v587
    %v686 = vunpack.c.l.b16 %v588
    %v687 = vunpack.c.l.b16 %v589
    %v688 = vunpack.c.h.b16 %v589
    %v689 = vunpack.c.l.b16 %v590
    %v690 = vunpack.c.l.b16 %v591
    %v691 = vunpack.c.h.b16 %v591
    %v692 = vunpack.c.l.b16 %v592
    %v693 = vunpack.c.l.b16 %v593
    %v694 = vunpack.c.h.b16 %v593
    %v695 = vunpack.c.l.b16 %v594
    %v696 = vunpack.c.l.b16 %v595
    %v697 = vunpack.c.h.b16 %v595
    %v698 = vunpack.c.l.b16 %v596
    %v699 = vunpack.c.l.b16 %v597
    %v700 = vunpack.c.h.b16 %v597
    %v701 = vunpack.c.l.b16 %v598
    %v702 = vpack.c.b16 %v657, %v654
    %v703 = vpack.c.b16 %v658, %v655
    %v704 = vpack.c.b16 %v659, %v656
    %v705 = vpack.c.b16 %v663, %v660
    %v706 = vpack.c.b16 %v664, %v661
    %v707 = vpack.c.b16 %v665, %v662
    %v708 = vpack.c.b16 %v669, %v666
    %v709 = vpack.c.b16 %v670, %v667
    %v710 = vpack.c.b16 %v671, %v668
    %v711 = vpack.c.b16 %v675, %v672
    %v712 = vpack.c.b16 %v676, %v673
    %v713 = vpack.c.b16 %v677, %v674
    %v714 = vpack.c.b16 %v681, %v678
    %v715 = vpack.c.b16 %v682, %v679
    %v716 = vpack.c.b16 %v683, %v680
    %v717 = vpack.c.b16 %v687, %v684
    %v718 = vpack.c.b16 %v688, %v685
    %v719 = vpack.c.b16 %v689, %v686
    %v720 = vpack.c.b16 %v693, %v690
    %v721 = vpack.c.b16 %v694, %v691
    %v722 = vpack.c.b16 %v695, %v692
    %v723 = vpack.c.b16 %v699, %v696
    %v724 = vpack.c.b16 %v700, %v697
    %v725 = vpack.c.b16 %v701, %v698
    %750 = vmatprep.subr.bf16.mxu0 %v703
    %751 = vmatpush1.bf16.msra.mxu0 %v702
    %752 = vmatprep.subr.bf16.mxu0 %v706
    %753 = vmatpush1.bf16.msra.mxu0 %v705
    %754 = vmatprep.subr.bf16.mxu0 %v709
    %755 = vmatpush1.bf16.msra.mxu0 %v708
    %756 = vmatprep.subr.bf16.mxu0 %v712
    %757 = vmatpush1.bf16.msra.mxu0 %v711
    %758 = vmatprep.subr.bf16.mxu0 %v715
    %759 = vmatpush1.bf16.msra.mxu0 %v714
    %760 = vmatprep.subr.bf16.mxu0 %v718
    %761 = vmatpush1.bf16.msra.mxu0 %v717
    %762 = vmatprep.subr.bf16.mxu0 %v721
    %763 = vmatpush1.bf16.msra.mxu0 %v720
    %764 = vmatprep.subr.bf16.mxu0 %v724
    %765 = vmatpush1.bf16.msra.mxu0 %v723
    %766 = vmatprep.subr.bf16.mxu0 0
    %767 = vmatpush1.bf16.msra.mxu0 0
    %768 = vmatprep.subr.bf16.mxu0 0
    %769 = vmatpush1.bf16.msra.mxu0 0
    %770 = vmatprep.subr.bf16.mxu0 0
    %771 = vmatpush1.bf16.msra.mxu0 0
    %772 = vmatprep.subr.bf16.mxu0 0
    %773 = vmatpush1.bf16.msra.mxu0 0
    %774 = vmatprep.subr.bf16.mxu0 0
    %775 = vmatpush1.bf16.msra.mxu0 0
    %776 = vmatprep.subr.bf16.mxu0 0
    %777 = vmatpush1.bf16.msra.mxu0 0
    %778 = vmatprep.subr.bf16.mxu0 0
    %779 = vmatpush1.bf16.msra.mxu0 0
    %780 = vmatprep.subr.bf16.mxu0 0
    %781 = vmatpush1.bf16.msra.mxu0 0
    %782 = vmatprep.mubr.bf16.mxu0 0
    %783 = vmatmul.mubr.bf16.gmra.mrb[0].mxu0 %v620
    %v784 = vpop.f32.mrb[0].mxu0
    %v785 = vadd.f32 %v604, %v784
    %v786 = vpop.f32.mrb[0].mxu0
    %v787 = vadd.f32 %v608, %v786
    %v788 = vpop.f32.mrb[0].mxu0
    %v789 = vadd.f32 %v604, %v788
    %v790 = vpop.f32.mrb[0].mxu0
    %v791 = vadd.f32 %v608, %v790
    %792 = vdwg.mxu0
    %793 = vmatprep.subr.bf16.mxu0 0
    %794 = vmatpush1.bf16.msra.mxu0 %v704
    %795 = vmatprep.subr.bf16.mxu0 0
    %796 = vmatpush1.bf16.msra.mxu0 %v707
    %797 = vmatprep.subr.bf16.mxu0 0
    %798 = vmatpush1.bf16.msra.mxu0 %v710
    %799 = vmatprep.subr.bf16.mxu0 0
    %800 = vmatpush1.bf16.msra.mxu0 %v713
    %801 = vmatprep.subr.bf16.mxu0 0
    %802 = vmatpush1.bf16.msra.mxu0 %v716
    %803 = vmatprep.subr.bf16.mxu0 0
    %804 = vmatpush1.bf16.msra.mxu0 %v719
    %805 = vmatprep.subr.bf16.mxu0 0
    %806 = vmatpush1.bf16.msra.mxu0 %v722
    %807 = vmatprep.subr.bf16.mxu0 0
    %808 = vmatpush1.bf16.msra.mxu0 %v725
    %809 = vmatprep.subr.bf16.mxu0 0
    %810 = vmatpush1.bf16.msra.mxu0 0
    %811 = vmatprep.subr.bf16.mxu0 0
    %812 = vmatpush1.bf16.msra.mxu0 0
    %813 = vmatprep.subr.bf16.mxu0 0
    %814 = vmatpush1.bf16.msra.mxu0 0
    %815 = vmatprep.subr.bf16.mxu0 0
    %816 = vmatpush1.bf16.msra.mxu0 0
    %817 = vmatprep.subr.bf16.mxu0 0
    %818 = vmatpush1.bf16.msra.mxu0 0
    %819 = vmatprep.subr.bf16.mxu0 0
    %820 = vmatpush1.bf16.msra.mxu0 0
    %821 = vmatprep.subr.bf16.mxu0 0
    %822 = vmatpush1.bf16.msra.mxu0 0
    %823 = vmatprep.subr.bf16.mxu0 0
    %824 = vmatpush1.bf16.msra.mxu0 0
    %825 = vmatprep.mubr.bf16.mxu0 0
    %826 = vmatmul.mubr.bf16.gmra.mrb[0].mxu0 %v620
    %v827 = vpop.f32.mrb[0].mxu0
    %v828 = vadd.f32 %v612, %v827
    %v829 = vpop.f32.mrb[0].mxu0
    %v830 = vpop.f32.mrb[0].mxu0
    %v831 = vadd.f32 %v612, %v830
    %v832 = vpop.f32.mrb[0].mxu0
    %833 = vdwg.mxu0
    %v834 = vld [vmem:[#allocation14] sm:$0xf]
    %v835 = vld [vmem:[#allocation14 + $0x4] sm:$0xf]
    %v836 = vld [vmem:[#allocation14 + $0x8] sm:$0xf]
    %v837 = vld [vmem:[#allocation14 + $0xc] sm:$0xf]
    %v838 = vld [vmem:[#allocation14 + $0x10] sm:$0xf]
    %v839 = vld [vmem:[#allocation14 + $0x14] sm:$0xf]
    %v840 = vld [vmem:[#allocation14 + $0x18] sm:$0xf]
    %v841 = vld [vmem:[#allocation14 + $0x1c] sm:$0xf]
    %v842 = vpack.c.bf16 %v785, %v785
    %v843 = vpack.c.bf16 %v789, %v789
    %v844 = vpack.c.bf16 %v787, %v787
    %v845 = vpack.c.bf16 %v791, %v791
    %vm846 = vcmask 130048
    %v848 = vsel %vm846, %v842, 0
    %v851 = vsel %vm846, %v844, 0
    %853 = vmatprep.subr.bf16.mxu0 0
    %854 = vmatpush1.bf16.xpose.msra.mxu0 %v851
    %855 = vmatprep.subr.bf16.mxu0 0
    %856 = vmatpush1.bf16.xpose.msra.mxu0 0
    %857 = vmatprep.subr.bf16.mxu0 0
    %858 = vmatpush1.bf16.xpose.msra.mxu0 0
    %859 = vmatprep.subr.bf16.mxu0 0
    %860 = vmatpush1.bf16.xpose.msra.mxu0 0
    %861 = vmatprep.subr.bf16.mxu0 0
    %862 = vmatpush1.bf16.xpose.msra.mxu0 0
    %863 = vmatprep.subr.bf16.mxu0 0
    %864 = vmatpush1.bf16.xpose.msra.mxu0 0
    %865 = vmatprep.subr.bf16.mxu0 0
    %866 = vmatpush1.bf16.xpose.msra.mxu0 0
    %867 = vmatprep.subr.bf16.mxu0 0
    %868 = vmatpush1.bf16.xpose.msra.mxu0 0
    %869 = vmatprep.subr.bf16.mxu0 0
    %870 = vmatpush1.bf16.xpose.msra.mxu0 0
    %871 = vmatprep.subr.bf16.mxu0 0
    %872 = vmatpush1.bf16.xpose.msra.mxu0 0
    %873 = vmatprep.subr.bf16.mxu0 0
    %874 = vmatpush1.bf16.xpose.msra.mxu0 0
    %875 = vmatprep.subr.bf16.mxu0 0
    %876 = vmatpush1.bf16.xpose.msra.mxu0 0
    %877 = vmatprep.subr.bf16.mxu0 0
    %878 = vmatpush1.bf16.xpose.msra.mxu0 0
    %879 = vmatprep.subr.bf16.mxu0 0
    %880 = vmatpush1.bf16.xpose.msra.mxu0 0
    %881 = vmatprep.subr.bf16.mxu0 0
    %882 = vmatpush1.bf16.xpose.msra.mxu0 0
    %883 = vmatprep.subr.bf16.mxu0 0
    %884 = vmatpush1.bf16.xpose.msra.mxu0 0
    %885 = vmatprep.mubr.bf16.mxu0 0
    %886 = vmatmul.mubr.bf16.gmra.mrb[0].mxu0 %v848
    %v887 = vpop.f32.mrb[0].mxu0
    %v888 = vadd.f32 0.0, %v887
    %v889 = vpop.f32.mrb[0].mxu0
    %v890 = vpop.f32.mrb[0].mxu0
    %v891 = vpop.f32.mrb[0].mxu0
    %892 = vdwg.mxu0
    %v894 = vsel %vm846, %v843, 0
    %v897 = vsel %vm846, %v845, 0
    %899 = vmatprep.subr.bf16.mxu0 0
    %900 = vmatpush1.bf16.xpose.msra.mxu0 %v897
    %901 = vmatprep.subr.bf16.mxu0 0
    %902 = vmatpush1.bf16.xpose.msra.mxu0 0
    %903 = vmatprep.subr.bf16.mxu0 0
    %904 = vmatpush1.bf16.xpose.msra.mxu0 0
    %905 = vmatprep.subr.bf16.mxu0 0
    %906 = vmatpush1.bf16.xpose.msra.mxu0 0
    %907 = vmatprep.subr.bf16.mxu0 0
    %908 = vmatpush1.bf16.xpose.msra.mxu0 0
    %909 = vmatprep.subr.bf16.mxu0 0
    %910 = vmatpush1.bf16.xpose.msra.mxu0 0
    %911 = vmatprep.subr.bf16.mxu0 0
    %912 = vmatpush1.bf16.xpose.msra.mxu0 0
    %913 = vmatprep.subr.bf16.mxu0 0
    %914 = vmatpush1.bf16.xpose.msra.mxu0 0
    %915 = vmatprep.subr.bf16.mxu0 0
    %916 = vmatpush1.bf16.xpose.msra.mxu0 0
    %917 = vmatprep.subr.bf16.mxu0 0
    %918 = vmatpush1.bf16.xpose.msra.mxu0 0
    %919 = vmatprep.subr.bf16.mxu0 0
    %920 = vmatpush1.bf16.xpose.msra.mxu0 0
    %921 = vmatprep.subr.bf16.mxu0 0
    %922 = vmatpush1.bf16.xpose.msra.mxu0 0
    %923 = vmatprep.subr.bf16.mxu0 0
    %924 = vmatpush1.bf16.xpose.msra.mxu0 0
    %925 = vmatprep.subr.bf16.mxu0 0
    %926 = vmatpush1.bf16.xpose.msra.mxu0 0
    %927 = vmatprep.subr.bf16.mxu0 0
    %928 = vmatpush1.bf16.xpose.msra.mxu0 0
    %929 = vmatprep.subr.bf16.mxu0 0
    %930 = vmatpush1.bf16.xpose.msra.mxu0 0
    %931 = vmatprep.mubr.bf16.mxu0 0
    %932 = vmatmul.mubr.bf16.gmra.mrb[0].mxu0 %v894
    %v933 = vpop.f32.mrb[0].mxu0
    %v934 = vadd.f32 0.0, %v933
    %v935 = vpop.f32.mrb[0].mxu0
    %v936 = vpop.f32.mrb[0].mxu0
    %v937 = vpop.f32.mrb[0].mxu0
    %938 = vdwg.mxu0
    %v939 = vmul.f32 %v888, 0.25
    %v940 = vmul.f32 %v934, 0.25
    %v943 = vunpack.c.l.s4 1966171168
    %v944 = vunpack.c.0.s8 %v943
    %v945 = vlaneseq
    %v946 = vshrl.u32 %v945, 7
    %v947 = vsub.s32 %v944, %v946
    %v948 = vrot.slane %v564, %v947
    %v949 = vcombine.high %v948, %v948
    %v951 = vunpack.c.l.s4 1966171168
    %v952 = vunpack.c.0.s8 %v951
    %v953 = vlaneseq
    %v954 = vshrl.u32 %v953, 7
    %v955 = vsub.s32 %v952, %v954
    %v956 = vrot.slane %v948, %v955
    %v958 = vunpack.c.l.s4 1966171168
    %v959 = vunpack.c.0.s8 %v958
    %v960 = vlaneseq
    %v961 = vshrl.u32 %v960, 7
    %v962 = vsub.s32 %v959, %v961
    %v963 = vrot.slane %v949, %v962
    %v964 = vlaneseq
    %v965 = vshrl.u32 %v964, 7
    %v966 = vsub.s32 0, %v965
    %v967 = vrot.slane %v956, %v966
    %v968 = vlaneseq
    %v969 = vshrl.u32 %v968, 7
    %v970 = vsub.s32 0, %v969
    %v971 = vrot.slane %v963, %v970
    %v974 = vadd.f32 %v939, %v967
    %v975 = vadd.f32 %v940, %v971
    %vm976 = vcmask 64512
    %v977 = vsel %vm976, %v974, -inf
    %978 = vmax.xlane.f32.xlu0 %v977
    %v979 = vpop.xlane.xlu0 %978
    %v980 = vsel %vm976, %v975, -inf
    %981 = vmax.xlane.f32.xlu0 %v980
    %v982 = vpop.xlane.xlu0 %981
    %v983 = vsub.f32 %v974, %v979
    %v984 = vsub.f32 %v975, %v982
    %v985 = vmul.f32 %v983, 1.442695
    %v986 = vpow.pop %v985
    %v987 = vmul.f32 %v984, 1.442695
    %v988 = vpow.pop %v987
    %v989 = vsel %vm976, %v986, 0.0
    %990 = vadd.xlane.f32.xlu0 %v989
    %v991 = vpop.xlane.xlu0 %990
    %v992 = vsel %vm976, %v988, 0.0
    %993 = vadd.xlane.f32.xlu0 %v992
    %v994 = vpop.xlane.xlu0 %993
    %v995 = vrcp.pop %v991
    %v996 = vrcp.pop %v994
    %v997 = vmul.f32 %v986, %v995
    %v998 = vmul.f32 %v988, %v996
    %v999 = vpack.c.bf16 %v997, %v997
    %v1000 = vpack.c.bf16 %v998, %v998
    %v1001 = vpack.c.bf16 %v828, %v828
    %v1002 = vpack.c.bf16 %v831, %v831
    %v1004 = vsel %vm976, %v999, 0
    %vm1006 = vcmask 1043456
    %v1008 = vsel %vm1006, %v1001, 0
    %1010 = vmatprep.subr.bf16.mxu0 0
    %1011 = vmatpush1.bf16.msra.mxu0 %v1008
    %1012 = vmatprep.subr.bf16.mxu0 0
    %1013 = vmatpush1.bf16.msra.mxu0 0
    %1014 = vmatprep.subr.bf16.mxu0 0
    %1015 = vmatpush1.bf16.msra.mxu0 0
    %1016 = vmatprep.subr.bf16.mxu0 0
    %1017 = vmatpush1.bf16.msra.mxu0 0
    %1018 = vmatprep.subr.bf16.mxu0 0
    %1019 = vmatpush1.bf16.msra.mxu0 0
    %1020 = vmatprep.subr.bf16.mxu0 0
    %1021 = vmatpush1.bf16.msra.mxu0 0
    %1022 = vmatprep.subr.bf16.mxu0 0
    %1023 = vmatpush1.bf16.msra.mxu0 0
    %1024 = vmatprep.subr.bf16.mxu0 0
    %1025 = vmatpush1.bf16.msra.mxu0 0
    %1026 = vmatprep.subr.bf16.mxu0 0
    %1027 = vmatpush1.bf16.msra.mxu0 0
    %1028 = vmatprep.subr.bf16.mxu0 0
    %1029 = vmatpush1.bf16.msra.mxu0 0
    %1030 = vmatprep.subr.bf16.mxu0 0
    %1031 = vmatpush1.bf16.msra.mxu0 0
    %1032 = vmatprep.subr.bf16.mxu0 0
    %1033 = vmatpush1.bf16.msra.mxu0 0
    %1034 = vmatprep.subr.bf16.mxu0 0
    %1035 = vmatpush1.bf16.msra.mxu0 0
    %1036 = vmatprep.subr.bf16.mxu0 0
    %1037 = vmatpush1.bf16.msra.mxu0 0
    %1038 = vmatprep.subr.bf16.mxu0 0
    %1039 = vmatpush1.bf16.msra.mxu0 0
    %1040 = vmatprep.subr.bf16.mxu0 0
    %1041 = vmatpush1.bf16.msra.mxu0 0
    %1042 = vmatprep.mubr.bf16.mxu0 0
    %1043 = vmatmul.mubr.bf16.gmra.mrb[0].mxu0 %v1004
    %v1044 = vpop.f32.mrb[0].mxu0
    %v1045 = vadd.f32 0.0, %v1044
    %v1046 = vpop.f32.mrb[0].mxu0
    %v1047 = vpop.f32.mrb[0].mxu0
    %v1048 = vpop.f32.mrb[0].mxu0
    %1049 = vdwg.mxu0
    %v1051 = vsel %vm976, %v1000, 0
    %v1054 = vsel %vm1006, %v1002, 0
    %1056 = vmatprep.subr.bf16.mxu0 0
    %1057 = vmatpush1.bf16.msra.mxu0 %v1054
    %1058 = vmatprep.subr.bf16.mxu0 0
    %1059 = vmatpush1.bf16.msra.mxu0 0
    %1060 = vmatprep.subr.bf16.mxu0 0
    %1061 = vmatpush1.bf16.msra.mxu0 0
    %1062 = vmatprep.subr.bf16.mxu0 0
    %1063 = vmatpush1.bf16.msra.mxu0 0
    %1064 = vmatprep.subr.bf16.mxu0 0
    %1065 = vmatpush1.bf16.msra.mxu0 0
    %1066 = vmatprep.subr.bf16.mxu0 0
    %1067 = vmatpush1.bf16.msra.mxu0 0
    %1068 = vmatprep.subr.bf16.mxu0 0
    %1069 = vmatpush1.bf16.msra.mxu0 0
    %1070 = vmatprep.subr.bf16.mxu0 0
    %1071 = vmatpush1.bf16.msra.mxu0 0
    %1072 = vmatprep.subr.bf16.mxu0 0
    %1073 = vmatpush1.bf16.msra.mxu0 0
    %1074 = vmatprep.subr.bf16.mxu0 0
    %1075 = vmatpush1.bf16.msra.mxu0 0
    %1076 = vmatprep.subr.bf16.mxu0 0
    %1077 = vmatpush1.bf16.msra.mxu0 0
    %1078 = vmatprep.subr.bf16.mxu0 0
    %1079 = vmatpush1.bf16.msra.mxu0 0
    %1080 = vmatprep.subr.bf16.mxu0 0
    %1081 = vmatpush1.bf16.msra.mxu0 0
    %1082 = vmatprep.subr.bf16.mxu0 0
    %1083 = vmatpush1.bf16.msra.mxu0 0
    %1084 = vmatprep.subr.bf16.mxu0 0
    %1085 = vmatpush1.bf16.msra.mxu0 0
    %1086 = vmatprep.subr.bf16.mxu0 0
    %1087 = vmatpush1.bf16.msra.mxu0 0
    %1088 = vmatprep.mubr.bf16.mxu0 0
    %1089 = vmatmul.mubr.bf16.gmra.mrb[0].mxu0 %v1051
    %v1090 = vpop.f32.mrb[0].mxu0
    %v1091 = vadd.f32 0.0, %v1090
    %v1092 = vpop.f32.mrb[0].mxu0
    %v1093 = vpop.f32.mrb[0].mxu0
    %v1094 = vpop.f32.mrb[0].mxu0
    %1095 = vdwg.mxu0
    %v1096 = vpack.c.bf16 %v1045, %v1045
    %v1097 = vpack.c.bf16 %v1091, %v1091
    %1099 = vrot.lane.b32.xlu0 %v842, 112
    %v1100 = vpop.permute.xlu0 %1099
    %1102 = vrot.lane.b32.xlu0 %v844, 112
    %v1103 = vpop.permute.xlu0 %1102
    %v1105 = vsel %vm846, %v1100, 0
    %v1108 = vsel %vm846, %v1103, 0
    %1110 = vmatprep.subr.bf16.mxu0 0
    %1111 = vmatpush1.bf16.xpose.msra.mxu0 %v1108
    %1112 = vmatprep.subr.bf16.mxu0 0
    %1113 = vmatpush1.bf16.xpose.msra.mxu0 0
    %1114 = vmatprep.subr.bf16.mxu0 0
    %1115 = vmatpush1.bf16.xpose.msra.mxu0 0
    %1116 = vmatprep.subr.bf16.mxu0 0
    %1117 = vmatpush1.bf16.xpose.msra.mxu0 0
    %1118 = vmatprep.subr.bf16.mxu0 0
    %1119 = vmatpush1.bf16.xpose.msra.mxu0 0
    %1120 = vmatprep.subr.bf16.mxu0 0
    %1121 = vmatpush1.bf16.xpose.msra.mxu0 0
    %1122 = vmatprep.subr.bf16.mxu0 0
    %1123 = vmatpush1.bf16.xpose.msra.mxu0 0
    %1124 = vmatprep.subr.bf16.mxu0 0
    %1125 = vmatpush1.bf16.xpose.msra.mxu0 0
    %1126 = vmatprep.subr.bf16.mxu0 0
    %1127 = vmatpush1.bf16.xpose.msra.mxu0 0
    %1128 = vmatprep.subr.bf16.mxu0 0
    %1129 = vmatpush1.bf16.xpose.msra.mxu0 0
    %1130 = vmatprep.subr.bf16.mxu0 0
    %1131 = vmatpush1.bf16.xpose.msra.mxu0 0
    %1132 = vmatprep.subr.bf16.mxu0 0
    %1133 = vmatpush1.bf16.xpose.msra.mxu0 0
    %1134 = vmatprep.subr.bf16.mxu0 0
    %1135 = vmatpush1.bf16.xpose.msra.mxu0 0
    %1136 = vmatprep.subr.bf16.mxu0 0
    %1137 = vmatpush1.bf16.xpose.msra.mxu0 0
    %1138 = vmatprep.subr.bf16.mxu0 0
    %1139 = vmatpush1.bf16.xpose.msra.mxu0 0
    %1140 = vmatprep.subr.bf16.mxu0 0
    %1141 = vmatpush1.bf16.xpose.msra.mxu0 0
    %1142 = vmatprep.mubr.bf16.mxu0 0
    %1143 = vmatmul.mubr.bf16.gmra.mrb[0].mxu0 %v1105
    %v1144 = vpop.f32.mrb[0].mxu0
    %v1145 = vadd.f32 0.0, %v1144
    %v1146 = vpop.f32.mrb[0].mxu0
    %v1147 = vpop.f32.mrb[0].mxu0
    %v1148 = vpop.f32.mrb[0].mxu0
    %1149 = vdwg.mxu0
    %1151 = vrot.lane.b32.xlu0 %v843, 112
    %v1152 = vpop.permute.xlu0 %1151
    %1154 = vrot.lane.b32.xlu0 %v845, 112
    %v1155 = vpop.permute.xlu0 %1154
    %v1157 = vsel %vm846, %v1152, 0
    %v1160 = vsel %vm846, %v1155, 0
    %1162 = vmatprep.subr.bf16.mxu0 0
    %1163 = vmatpush1.bf16.xpose.msra.mxu0 %v1160
    %1164 = vmatprep.subr.bf16.mxu0 0
    %1165 = vmatpush1.bf16.xpose.msra.mxu0 0
    %1166 = vmatprep.subr.bf16.mxu0 0
    %1167 = vmatpush1.bf16.xpose.msra.mxu0 0
    %1168 = vmatprep.subr.bf16.mxu0 0
    %1169 = vmatpush1.bf16.xpose.msra.mxu0 0
    %1170 = vmatprep.subr.bf16.mxu0 0
    %1171 = vmatpush1.bf16.xpose.msra.mxu0 0
    %1172 = vmatprep.subr.bf16.mxu0 0
    %1173 = vmatpush1.bf16.xpose.msra.mxu0 0
    %1174 = vmatprep.subr.bf16.mxu0 0
    %1175 = vmatpush1.bf16.xpose.msra.mxu0 0
    %1176 = vmatprep.subr.bf16.mxu0 0
    %1177 = vmatpush1.bf16.xpose.msra.mxu0 0
    %1178 = vmatprep.subr.bf16.mxu0 0
    %1179 = vmatpush1.bf16.xpose.msra.mxu0 0
    %1180 = vmatprep.subr.bf16.mxu0 0
    %1181 = vmatpush1.bf16.xpose.msra.mxu0 0
    %1182 = vmatprep.subr.bf16.mxu0 0
    %1183 = vmatpush1.bf16.xpose.msra.mxu0 0
    %1184 = vmatprep.subr.bf16.mxu0 0
    %1185 = vmatpush1.bf16.xpose.msra.mxu0 0
    %1186 = vmatprep.subr.bf16.mxu0 0
    %1187 = vmatpush1.bf16.xpose.msra.mxu0 0
    %1188 = vmatprep.subr.bf16.mxu0 0
    %1189 = vmatpush1.bf16.xpose.msra.mxu0 0
    %1190 = vmatprep.subr.bf16.mxu0 0
    %1191 = vmatpush1.bf16.xpose.msra.mxu0 0
    %1192 = vmatprep.subr.bf16.mxu0 0
    %1193 = vmatpush1.bf16.xpose.msra.mxu0 0
    %1194 = vmatprep.mubr.bf16.mxu0 0
    %1195 = vmatmul.mubr.bf16.gmra.mrb[0].mxu0 %v1157
    %v1196 = vpop.f32.mrb[0].mxu0
    %v1197 = vadd.f32 0.0, %v1196
    %v1198 = vpop.f32.mrb[0].mxu0
    %v1199 = vpop.f32.mrb[0].mxu0
    %v1200 = vpop.f32.mrb[0].mxu0
    %1201 = vdwg.mxu0
    %v1202 = vmul.f32 %v1145, 0.25
    %v1203 = vmul.f32 %v1197, 0.25
    %v1204 = vadd.f32 %v1202, %v967
    %v1205 = vadd.f32 %v1203, %v971
    %v1206 = vsel %vm976, %v1204, -inf
    %1207 = vmax.xlane.f32.xlu0 %v1206
    %v1208 = vpop.xlane.xlu0 %1207
    %v1209 = vsel %vm976, %v1205, -inf
    %1210 = vmax.xlane.f32.xlu0 %v1209
    %v1211 = vpop.xlane.xlu0 %1210
    %v1212 = vsub.f32 %v1204, %v1208
    %v1213 = vsub.f32 %v1205, %v1211
    %v1214 = vmul.f32 %v1212, 1.442695
    %v1215 = vpow.pop %v1214
    %v1216 = vmul.f32 %v1213, 1.442695
    %v1217 = vpow.pop %v1216
    %v1218 = vsel %vm976, %v1215, 0.0
    %1219 = vadd.xlane.f32.xlu0 %v1218
    %v1220 = vpop.xlane.xlu0 %1219
    %v1221 = vsel %vm976, %v1217, 0.0
    %1222 = vadd.xlane.f32.xlu0 %v1221
    %v1223 = vpop.xlane.xlu0 %1222
    %v1224 = vrcp.pop %v1220
    %v1225 = vrcp.pop %v1223
    %v1226 = vmul.f32 %v1215, %v1224
    %v1227 = vmul.f32 %v1217, %v1225
    %v1228 = vpack.c.bf16 %v1226, %v1226
    %v1229 = vpack.c.bf16 %v1227, %v1227
    %1231 = vrot.lane.b32.xlu0 %v1001, 112
    %v1232 = vpop.permute.xlu0 %1231
    %v1234 = vsel %vm976, %v1228, 0
    %v1237 = vsel %vm1006, %v1232, 0
    %1239 = vmatprep.subr.bf16.mxu0 0
    %1240 = vmatpush1.bf16.msra.mxu0 %v1237
    %1241 = vmatprep.subr.bf16.mxu0 0
    %1242 = vmatpush1.bf16.msra.mxu0 0
    %1243 = vmatprep.subr.bf16.mxu0 0
    %1244 = vmatpush1.bf16.msra.mxu0 0
    %1245 = vmatprep.subr.bf16.mxu0 0
    %1246 = vmatpush1.bf16.msra.mxu0 0
    %1247 = vmatprep.subr.bf16.mxu0 0
    %1248 = vmatpush1.bf16.msra.mxu0 0
    %1249 = vmatprep.subr.bf16.mxu0 0
    %1250 = vmatpush1.bf16.msra.mxu0 0
    %1251 = vmatprep.subr.bf16.mxu0 0
    %1252 = vmatpush1.bf16.msra.mxu0 0
    %1253 = vmatprep.subr.bf16.mxu0 0
    %1254 = vmatpush1.bf16.msra.mxu0 0
    %1255 = vmatprep.subr.bf16.mxu0 0
    %1256 = vmatpush1.bf16.msra.mxu0 0
    %1257 = vmatprep.subr.bf16.mxu0 0
    %1258 = vmatpush1.bf16.msra.mxu0 0
    %1259 = vmatprep.subr.bf16.mxu0 0
    %1260 = vmatpush1.bf16.msra.mxu0 0
    %1261 = vmatprep.subr.bf16.mxu0 0
    %1262 = vmatpush1.bf16.msra.mxu0 0
    %1263 = vmatprep.subr.bf16.mxu0 0
    %1264 = vmatpush1.bf16.msra.mxu0 0
    %1265 = vmatprep.subr.bf16.mxu0 0
    %1266 = vmatpush1.bf16.msra.mxu0 0
    %1267 = vmatprep.subr.bf16.mxu0 0
    %1268 = vmatpush1.bf16.msra.mxu0 0
    %1269 = vmatprep.subr.bf16.mxu0 0
    %1270 = vmatpush1.bf16.msra.mxu0 0
    %1271 = vmatprep.mubr.bf16.mxu0 0
    %1272 = vmatmul.mubr.bf16.gmra.mrb[0].mxu0 %v1234
    %v1273 = vpop.f32.mrb[0].mxu0
    %v1274 = vadd.f32 0.0, %v1273
    %v1275 = vpop.f32.mrb[0].mxu0
    %v1276 = vpop.f32.mrb[0].mxu0
    %v1277 = vpop.f32.mrb[0].mxu0
    %1278 = vdwg.mxu0
    %1280 = vrot.lane.b32.xlu0 %v1002, 112
    %v1281 = vpop.permute.xlu0 %1280
    %v1283 = vsel %vm976, %v1229, 0
    %v1286 = vsel %vm1006, %v1281, 0
    %1288 = vmatprep.subr.bf16.mxu0 0
    %1289 = vmatpush1.bf16.msra.mxu0 %v1286
    %1290 = vmatprep.subr.bf16.mxu0 0
    %1291 = vmatpush1.bf16.msra.mxu0 0
    %1292 = vmatprep.subr.bf16.mxu0 0
    %1293 = vmatpush1.bf16.msra.mxu0 0
    %1294 = vmatprep.subr.bf16.mxu0 0
    %1295 = vmatpush1.bf16.msra.mxu0 0
    %1296 = vmatprep.subr.bf16.mxu0 0
    %1297 = vmatpush1.bf16.msra.mxu0 0
    %1298 = vmatprep.subr.bf16.mxu0 0
    %1299 = vmatpush1.bf16.msra.mxu0 0
    %1300 = vmatprep.subr.bf16.mxu0 0
    %1301 = vmatpush1.bf16.msra.mxu0 0
    %1302 = vmatprep.subr.bf16.mxu0 0
    %1303 = vmatpush1.bf16.msra.mxu0 0
    %1304 = vmatprep.subr.bf16.mxu0 0
    %1305 = vmatpush1.bf16.msra.mxu0 0
    %1306 = vmatprep.subr.bf16.mxu0 0
    %1307 = vmatpush1.bf16.msra.mxu0 0
    %1308 = vmatprep.subr.bf16.mxu0 0
    %1309 = vmatpush1.bf16.msra.mxu0 0
    %1310 = vmatprep.subr.bf16.mxu0 0
    %1311 = vmatpush1.bf16.msra.mxu0 0
    %1312 = vmatprep.subr.bf16.mxu0 0
    %1313 = vmatpush1.bf16.msra.mxu0 0
    %1314 = vmatprep.subr.bf16.mxu0 0
    %1315 = vmatpush1.bf16.msra.mxu0 0
    %1316 = vmatprep.subr.bf16.mxu0 0
    %1317 = vmatpush1.bf16.msra.mxu0 0
    %1318 = vmatprep.subr.bf16.mxu0 0
    %1319 = vmatpush1.bf16.msra.mxu0 0
    %1320 = vmatprep.mubr.bf16.mxu0 0
    %1321 = vmatmul.mubr.bf16.gmra.mrb[0].mxu0 %v1283
    %v1322 = vpop.f32.mrb[0].mxu0
    %v1323 = vadd.f32 0.0, %v1322
    %v1324 = vpop.f32.mrb[0].mxu0
    %v1325 = vpop.f32.mrb[0].mxu0
    %v1326 = vpop.f32.mrb[0].mxu0
    %1327 = vdwg.mxu0
    %v1328 = vpack.c.bf16 %v1274, %v1274
    %v1329 = vpack.c.bf16 %v1323, %v1323
    %v1332 = vunpack.c.l.b16 %v1328
    %v1333 = vunpack.c.l.b16 %v1329
    %v1334 = vpack.c.b16 %v1333, %v1332
    %v1337 = vunpack.c.l.b16 %v836
    %v1338 = vunpack.c.l.b16 %v837
    %v1339 = vpack.c.b16 %v1338, %v1337
    %v1342 = vsel %vm846, %v1334, 0
    %1344 = vmatprep.subr.bf16.mxu0 0
    %1345 = vmatpush1.bf16.msra.mxu0 %v1339
    %1346 = vmatprep.subr.bf16.mxu0 0
    %1347 = vmatpush1.bf16.msra.mxu0 0
    %1348 = vmatprep.subr.bf16.mxu0 0
    %1349 = vmatpush1.bf16.msra.mxu0 0
    %1350 = vmatprep.subr.bf16.mxu0 0
    %1351 = vmatpush1.bf16.msra.mxu0 0
    %1352 = vmatprep.subr.bf16.mxu0 0
    %1353 = vmatpush1.bf16.msra.mxu0 0
    %1354 = vmatprep.subr.bf16.mxu0 0
    %1355 = vmatpush1.bf16.msra.mxu0 0
    %1356 = vmatprep.subr.bf16.mxu0 0
    %1357 = vmatpush1.bf16.msra.mxu0 0
    %1358 = vmatprep.subr.bf16.mxu0 0
    %1359 = vmatpush1.bf16.msra.mxu0 0
    %1360 = vmatprep.subr.bf16.mxu0 0
    %1361 = vmatpush1.bf16.msra.mxu0 0
    %1362 = vmatprep.subr.bf16.mxu0 0
    %1363 = vmatpush1.bf16.msra.mxu0 0
    %1364 = vmatprep.subr.bf16.mxu0 0
    %1365 = vmatpush1.bf16.msra.mxu0 0
    %1366 = vmatprep.subr.bf16.mxu0 0
    %1367 = vmatpush1.bf16.msra.mxu0 0
    %1368 = vmatprep.subr.bf16.mxu0 0
    %1369 = vmatpush1.bf16.msra.mxu0 0
    %1370 = vmatprep.subr.bf16.mxu0 0
    %1371 = vmatpush1.bf16.msra.mxu0 0
    %1372 = vmatprep.subr.bf16.mxu0 0
    %1373 = vmatpush1.bf16.msra.mxu0 0
    %1374 = vmatprep.subr.bf16.mxu0 0
    %1375 = vmatpush1.bf16.msra.mxu0 0
    %1376 = vmatprep.mubr.bf16.mxu0 0
    %1377 = vmatmul.mubr.bf16.gmra.mrb[0].mxu0 %v1342
    %v1378 = vpop.f32.mrb[0].mxu0
    %v1379 = vadd.f32 0.0, %v1378
    %v1380 = vpop.f32.mrb[0].mxu0
    %v1381 = vpop.f32.mrb[0].mxu0
    %v1382 = vadd.f32 0.0, %v1381
    %v1383 = vpop.f32.mrb[0].mxu0
    %1384 = vdwg.mxu0
    %1385 = vrot.lane.b32.xlu0 %v842, 96
    %v1386 = vpop.permute.xlu0 %1385
    %1387 = vrot.lane.b32.xlu0 %v844, 96
    %v1388 = vpop.permute.xlu0 %1387
    %v1390 = vsel %vm846, %v1386, 0
    %v1393 = vsel %vm846, %v1388, 0
    %1395 = vmatprep.subr.bf16.mxu0 0
    %1396 = vmatpush1.bf16.xpose.msra.mxu0 %v1393
    %1397 = vmatprep.subr.bf16.mxu0 0
    %1398 = vmatpush1.bf16.xpose.msra.mxu0 0
    %1399 = vmatprep.subr.bf16.mxu0 0
    %1400 = vmatpush1.bf16.xpose.msra.mxu0 0
    %1401 = vmatprep.subr.bf16.mxu0 0
    %1402 = vmatpush1.bf16.xpose.msra.mxu0 0
    %1403 = vmatprep.subr.bf16.mxu0 0
    %1404 = vmatpush1.bf16.xpose.msra.mxu0 0
    %1405 = vmatprep.subr.bf16.mxu0 0
    %1406 = vmatpush1.bf16.xpose.msra.mxu0 0
    %1407 = vmatprep.subr.bf16.mxu0 0
    %1408 = vmatpush1.bf16.xpose.msra.mxu0 0
    %1409 = vmatprep.subr.bf16.mxu0 0
    %1410 = vmatpush1.bf16.xpose.msra.mxu0 0
    %1411 = vmatprep.subr.bf16.mxu0 0
    %1412 = vmatpush1.bf16.xpose.msra.mxu0 0
    %1413 = vmatprep.subr.bf16.mxu0 0
    %1414 = vmatpush1.bf16.xpose.msra.mxu0 0
    %1415 = vmatprep.subr.bf16.mxu0 0
    %1416 = vmatpush1.bf16.xpose.msra.mxu0 0
    %1417 = vmatprep.subr.bf16.mxu0 0
    %1418 = vmatpush1.bf16.xpose.msra.mxu0 0
    %1419 = vmatprep.subr.bf16.mxu0 0
    %1420 = vmatpush1.bf16.xpose.msra.mxu0 0
    %1421 = vmatprep.subr.bf16.mxu0 0
    %1422 = vmatpush1.bf16.xpose.msra.mxu0 0
    %1423 = vmatprep.subr.bf16.mxu0 0
    %1424 = vmatpush1.bf16.xpose.msra.mxu0 0
    %1425 = vmatprep.subr.bf16.mxu0 0
    %1426 = vmatpush1.bf16.xpose.msra.mxu0 0
    %1427 = vmatprep.mubr.bf16.mxu0 0
    %1428 = vmatmul.mubr.bf16.gmra.mrb[0].mxu0 %v1390
    %v1429 = vpop.f32.mrb[0].mxu0
    %v1430 = vadd.f32 0.0, %v1429
    %v1431 = vpop.f32.mrb[0].mxu0
    %v1432 = vpop.f32.mrb[0].mxu0
    %v1433 = vpop.f32.mrb[0].mxu0
    %1434 = vdwg.mxu0
    %1435 = vrot.lane.b32.xlu0 %v843, 96
    %v1436 = vpop.permute.xlu0 %1435
    %1437 = vrot.lane.b32.xlu0 %v845, 96
    %v1438 = vpop.permute.xlu0 %1437
    %v1440 = vsel %vm846, %v1436, 0
    %v1443 = vsel %vm846, %v1438, 0
    %1445 = vmatprep.subr.bf16.mxu0 0
    %1446 = vmatpush1.bf16.xpose.msra.mxu0 %v1443
    %1447 = vmatprep.subr.bf16.mxu0 0
    %1448 = vmatpush1.bf16.xpose.msra.mxu0 0
    %1449 = vmatprep.subr.bf16.mxu0 0
    %1450 = vmatpush1.bf16.xpose.msra.mxu0 0
    %1451 = vmatprep.subr.bf16.mxu0 0
    %1452 = vmatpush1.bf16.xpose.msra.mxu0 0
    %1453 = vmatprep.subr.bf16.mxu0 0
    %1454 = vmatpush1.bf16.xpose.msra.mxu0 0
    %1455 = vmatprep.subr.bf16.mxu0 0
    %1456 = vmatpush1.bf16.xpose.msra.mxu0 0
    %1457 = vmatprep.subr.bf16.mxu0 0
    %1458 = vmatpush1.bf16.xpose.msra.mxu0 0
    %1459 = vmatprep.subr.bf16.mxu0 0
    %1460 = vmatpush1.bf16.xpose.msra.mxu0 0
    %1461 = vmatprep.subr.bf16.mxu0 0
    %1462 = vmatpush1.bf16.xpose.msra.mxu0 0
    %1463 = vmatprep.subr.bf16.mxu0 0
    %1464 = vmatpush1.bf16.xpose.msra.mxu0 0
    %1465 = vmatprep.subr.bf16.mxu0 0
    %1466 = vmatpush1.bf16.xpose.msra.mxu0 0
    %1467 = vmatprep.subr.bf16.mxu0 0
    %1468 = vmatpush1.bf16.xpose.msra.mxu0 0
    %1469 = vmatprep.subr.bf16.mxu0 0
    %1470 = vmatpush1.bf16.xpose.msra.mxu0 0
    %1471 = vmatprep.subr.bf16.mxu0 0
    %1472 = vmatpush1.bf16.xpose.msra.mxu0 0
    %1473 = vmatprep.subr.bf16.mxu0 0
    %1474 = vmatpush1.bf16.xpose.msra.mxu0 0
    %1475 = vmatprep.subr.bf16.mxu0 0
    %1476 = vmatpush1.bf16.xpose.msra.mxu0 0
    %1477 = vmatprep.mubr.bf16.mxu0 0
    %1478 = vmatmul.mubr.bf16.gmra.mrb[0].mxu0 %v1440
    %v1479 = vpop.f32.mrb[0].mxu0
    %v1480 = vadd.f32 0.0, %v1479
    %v1481 = vpop.f32.mrb[0].mxu0
    %v1482 = vpop.f32.mrb[0].mxu0
    %v1483 = vpop.f32.mrb[0].mxu0
    %1484 = vdwg.mxu0
    %v1485 = vmul.f32 %v1430, 0.25
    %v1486 = vmul.f32 %v1480, 0.25
    %v1487 = vadd.f32 %v1485, %v967
    %v1488 = vadd.f32 %v1486, %v971
    %v1489 = vsel %vm976, %v1487, -inf
    %1490 = vmax.xlane.f32.xlu0 %v1489
    %v1491 = vpop.xlane.xlu0 %1490
    %v1492 = vsel %vm976, %v1488, -inf
    %1493 = vmax.xlane.f32.xlu0 %v1492
    %v1494 = vpop.xlane.xlu0 %1493
    %v1495 = vsub.f32 %v1487, %v1491
    %v1496 = vsub.f32 %v1488, %v1494
    %v1497 = vmul.f32 %v1495, 1.442695
    %v1498 = vpow.pop %v1497
    %v1499 = vmul.f32 %v1496, 1.442695
    %v1500 = vpow.pop %v1499
    %v1501 = vsel %vm976, %v1498, 0.0
    %1502 = vadd.xlane.f32.xlu0 %v1501
    %v1503 = vpop.xlane.xlu0 %1502
    %v1504 = vsel %vm976, %v1500, 0.0
    %1505 = vadd.xlane.f32.xlu0 %v1504
    %v1506 = vpop.xlane.xlu0 %1505
    %v1507 = vrcp.pop %v1503
    %v1508 = vrcp.pop %v1506
    %v1509 = vmul.f32 %v1498, %v1507
    %v1510 = vmul.f32 %v1500, %v1508
    %v1511 = vpack.c.bf16 %v1509, %v1509
    %v1512 = vpack.c.bf16 %v1510, %v1510
    %1513 = vrot.lane.b32.xlu0 %v1001, 96
    %v1514 = vpop.permute.xlu0 %1513
    %v1516 = vsel %vm976, %v1511, 0
    %v1519 = vsel %vm1006, %v1514, 0
    %1521 = vmatprep.subr.bf16.mxu0 0
    %1522 = vmatpush1.bf16.msra.mxu0 %v1519
    %1523 = vmatprep.subr.bf16.mxu0 0
    %1524 = vmatpush1.bf16.msra.mxu0 0
    %1525 = vmatprep.subr.bf16.mxu0 0
    %1526 = vmatpush1.bf16.msra.mxu0 0
    %1527 = vmatprep.subr.bf16.mxu0 0
    %1528 = vmatpush1.bf16.msra.mxu0 0
    %1529 = vmatprep.subr.bf16.mxu0 0
    %1530 = vmatpush1.bf16.msra.mxu0 0
    %1531 = vmatprep.subr.bf16.mxu0 0
    %1532 = vmatpush1.bf16.msra.mxu0 0
    %1533 = vmatprep.subr.bf16.mxu0 0
    %1534 = vmatpush1.bf16.msra.mxu0 0
    %1535 = vmatprep.subr.bf16.mxu0 0
    %1536 = vmatpush1.bf16.msra.mxu0 0
    %1537 = vmatprep.subr.bf16.mxu0 0
    %1538 = vmatpush1.bf16.msra.mxu0 0
    %1539 = vmatprep.subr.bf16.mxu0 0
    %1540 = vmatpush1.bf16.msra.mxu0 0
    %1541 = vmatprep.subr.bf16.mxu0 0
    %1542 = vmatpush1.bf16.msra.mxu0 0
    %1543 = vmatprep.subr.bf16.mxu0 0
    %1544 = vmatpush1.bf16.msra.mxu0 0
    %1545 = vmatprep.subr.bf16.mxu0 0
    %1546 = vmatpush1.bf16.msra.mxu0 0
    %1547 = vmatprep.subr.bf16.mxu0 0
    %1548 = vmatpush1.bf16.msra.mxu0 0
    %1549 = vmatprep.subr.bf16.mxu0 0
    %1550 = vmatpush1.bf16.msra.mxu0 0
    %1551 = vmatprep.subr.bf16.mxu0 0
    %1552 = vmatpush1.bf16.msra.mxu0 0
    %1553 = vmatprep.mubr.bf16.mxu0 0
    %1554 = vmatmul.mubr.bf16.gmra.mrb[0].mxu0 %v1516
    %v1555 = vpop.f32.mrb[0].mxu0
    %v1556 = vadd.f32 0.0, %v1555
    %v1557 = vpop.f32.mrb[0].mxu0
    %v1558 = vpop.f32.mrb[0].mxu0
    %v1559 = vpop.f32.mrb[0].mxu0
    %1560 = vdwg.mxu0
    %1561 = vrot.lane.b32.xlu0 %v1002, 96
    %v1562 = vpop.permute.xlu0 %1561
    %v1564 = vsel %vm976, %v1512, 0
    %v1567 = vsel %vm1006, %v1562, 0
    %1569 = vmatprep.subr.bf16.mxu0 0
    %1570 = vmatpush1.bf16.msra.mxu0 %v1567
    %1571 = vmatprep.subr.bf16.mxu0 0
    %1572 = vmatpush1.bf16.msra.mxu0 0
    %1573 = vmatprep.subr.bf16.mxu0 0
    %1574 = vmatpush1.bf16.msra.mxu0 0
    %1575 = vmatprep.subr.bf16.mxu0 0
    %1576 = vmatpush1.bf16.msra.mxu0 0
    %1577 = vmatprep.subr.bf16.mxu0 0
    %1578 = vmatpush1.bf16.msra.mxu0 0
    %1579 = vmatprep.subr.bf16.mxu0 0
    %1580 = vmatpush1.bf16.msra.mxu0 0
    %1581 = vmatprep.subr.bf16.mxu0 0
    %1582 = vmatpush1.bf16.msra.mxu0 0
    %1583 = vmatprep.subr.bf16.mxu0 0
    %1584 = vmatpush1.bf16.msra.mxu0 0
    %1585 = vmatprep.subr.bf16.mxu0 0
    %1586 = vmatpush1.bf16.msra.mxu0 0
    %1587 = vmatprep.subr.bf16.mxu0 0
    %1588 = vmatpush1.bf16.msra.mxu0 0
    %1589 = vmatprep.subr.bf16.mxu0 0
    %1590 = vmatpush1.bf16.msra.mxu0 0
    %1591 = vmatprep.subr.bf16.mxu0 0
    %1592 = vmatpush1.bf16.msra.mxu0 0
    %1593 = vmatprep.subr.bf16.mxu0 0
    %1594 = vmatpush1.bf16.msra.mxu0 0
    %1595 = vmatprep.subr.bf16.mxu0 0
    %1596 = vmatpush1.bf16.msra.mxu0 0
    %1597 = vmatprep.subr.bf16.mxu0 0
    %1598 = vmatpush1.bf16.msra.mxu0 0
    %1599 = vmatprep.subr.bf16.mxu0 0
    %1600 = vmatpush1.bf16.msra.mxu0 0
    %1601 = vmatprep.mubr.bf16.mxu0 0
    %1602 = vmatmul.mubr.bf16.gmra.mrb[0].mxu0 %v1564
    %v1603 = vpop.f32.mrb[0].mxu0
    %v1604 = vadd.f32 0.0, %v1603
    %v1605 = vpop.f32.mrb[0].mxu0
    %v1606 = vpop.f32.mrb[0].mxu0
    %v1607 = vpop.f32.mrb[0].mxu0
    %1608 = vdwg.mxu0
    %v1609 = vpack.c.bf16 %v1556, %v1556
    %v1610 = vpack.c.bf16 %v1604, %v1604
    %1611 = vrot.lane.b32.xlu0 %v842, 80
    %v1612 = vpop.permute.xlu0 %1611
    %1613 = vrot.lane.b32.xlu0 %v844, 80
    %v1614 = vpop.permute.xlu0 %1613
    %v1616 = vsel %vm846, %v1612, 0
    %v1619 = vsel %vm846, %v1614, 0
    %1621 = vmatprep.subr.bf16.mxu0 0
    %1622 = vmatpush1.bf16.xpose.msra.mxu0 %v1619
    %1623 = vmatprep.subr.bf16.mxu0 0
    %1624 = vmatpush1.bf16.xpose.msra.mxu0 0
    %1625 = vmatprep.subr.bf16.mxu0 0
    %1626 = vmatpush1.bf16.xpose.msra.mxu0 0
    %1627 = vmatprep.subr.bf16.mxu0 0
    %1628 = vmatpush1.bf16.xpose.msra.mxu0 0
    %1629 = vmatprep.subr.bf16.mxu0 0
    %1630 = vmatpush1.bf16.xpose.msra.mxu0 0
    %1631 = vmatprep.subr.bf16.mxu0 0
    %1632 = vmatpush1.bf16.xpose.msra.mxu0 0
    %1633 = vmatprep.subr.bf16.mxu0 0
    %1634 = vmatpush1.bf16.xpose.msra.mxu0 0
    %1635 = vmatprep.subr.bf16.mxu0 0
    %1636 = vmatpush1.bf16.xpose.msra.mxu0 0
    %1637 = vmatprep.subr.bf16.mxu0 0
    %1638 = vmatpush1.bf16.xpose.msra.mxu0 0
    %1639 = vmatprep.subr.bf16.mxu0 0
    %1640 = vmatpush1.bf16.xpose.msra.mxu0 0
    %1641 = vmatprep.subr.bf16.mxu0 0
    %1642 = vmatpush1.bf16.xpose.msra.mxu0 0
    %1643 = vmatprep.subr.bf16.mxu0 0
    %1644 = vmatpush1.bf16.xpose.msra.mxu0 0
    %1645 = vmatprep.subr.bf16.mxu0 0
    %1646 = vmatpush1.bf16.xpose.msra.mxu0 0
    %1647 = vmatprep.subr.bf16.mxu0 0
    %1648 = vmatpush1.bf16.xpose.msra.mxu0 0
    %1649 = vmatprep.subr.bf16.mxu0 0
    %1650 = vmatpush1.bf16.xpose.msra.mxu0 0
    %1651 = vmatprep.subr.bf16.mxu0 0
    %1652 = vmatpush1.bf16.xpose.msra.mxu0 0
    %1653 = vmatprep.mubr.bf16.mxu0 0
    %1654 = vmatmul.mubr.bf16.gmra.mrb[0].mxu0 %v1616
    %v1655 = vpop.f32.mrb[0].mxu0
    %v1656 = vadd.f32 0.0, %v1655
    %v1657 = vpop.f32.mrb[0].mxu0
    %v1658 = vpop.f32.mrb[0].mxu0
    %v1659 = vpop.f32.mrb[0].mxu0
    %1660 = vdwg.mxu0
    %1661 = vrot.lane.b32.xlu0 %v843, 80
    %v1662 = vpop.permute.xlu0 %1661
    %1663 = vrot.lane.b32.xlu0 %v845, 80
    %v1664 = vpop.permute.xlu0 %1663
    %v1666 = vsel %vm846, %v1662, 0
    %v1669 = vsel %vm846, %v1664, 0
    %1671 = vmatprep.subr.bf16.mxu0 0
    %1672 = vmatpush1.bf16.xpose.msra.mxu0 %v1669
    %1673 = vmatprep.subr.bf16.mxu0 0
    %1674 = vmatpush1.bf16.xpose.msra.mxu0 0
    %1675 = vmatprep.subr.bf16.mxu0 0
    %1676 = vmatpush1.bf16.xpose.msra.mxu0 0
    %1677 = vmatprep.subr.bf16.mxu0 0
    %1678 = vmatpush1.bf16.xpose.msra.mxu0 0
    %1679 = vmatprep.subr.bf16.mxu0 0
    %1680 = vmatpush1.bf16.xpose.msra.mxu0 0
    %1681 = vmatprep.subr.bf16.mxu0 0
    %1682 = vmatpush1.bf16.xpose.msra.mxu0 0
    %1683 = vmatprep.subr.bf16.mxu0 0
    %1684 = vmatpush1.bf16.xpose.msra.mxu0 0
    %1685 = vmatprep.subr.bf16.mxu0 0
    %1686 = vmatpush1.bf16.xpose.msra.mxu0 0
    %1687 = vmatprep.subr.bf16.mxu0 0
    %1688 = vmatpush1.bf16.xpose.msra.mxu0 0
    %1689 = vmatprep.subr.bf16.mxu0 0
    %1690 = vmatpush1.bf16.xpose.msra.mxu0 0
    %1691 = vmatprep.subr.bf16.mxu0 0
    %1692 = vmatpush1.bf16.xpose.msra.mxu0 0
    %1693 = vmatprep.subr.bf16.mxu0 0
    %1694 = vmatpush1.bf16.xpose.msra.mxu0 0
    %1695 = vmatprep.subr.bf16.mxu0 0
    %1696 = vmatpush1.bf16.xpose.msra.mxu0 0
    %1697 = vmatprep.subr.bf16.mxu0 0
    %1698 = vmatpush1.bf16.xpose.msra.mxu0 0
    %1699 = vmatprep.subr.bf16.mxu0 0
    %1700 = vmatpush1.bf16.xpose.msra.mxu0 0
    %1701 = vmatprep.subr.bf16.mxu0 0
    %1702 = vmatpush1.bf16.xpose.msra.mxu0 0
    %1703 = vmatprep.mubr.bf16.mxu0 0
    %1704 = vmatmul.mubr.bf16.gmra.mrb[0].mxu0 %v1666
    %v1705 = vpop.f32.mrb[0].mxu0
    %v1706 = vadd.f32 0.0, %v1705
    %v1707 = vpop.f32.mrb[0].mxu0
    %v1708 = vpop.f32.mrb[0].mxu0
    %v1709 = vpop.f32.mrb[0].mxu0
    %1710 = vdwg.mxu0
    %v1711 = vmul.f32 %v1656, 0.25
    %v1712 = vmul.f32 %v1706, 0.25
    %v1713 = vadd.f32 %v1711, %v967
    %v1714 = vadd.f32 %v1712, %v971
    %v1715 = vsel %vm976, %v1713, -inf
    %1716 = vmax.xlane.f32.xlu0 %v1715
    %v1717 = vpop.xlane.xlu0 %1716
    %v1718 = vsel %vm976, %v1714, -inf
    %1719 = vmax.xlane.f32.xlu0 %v1718
    %v1720 = vpop.xlane.xlu0 %1719
    %v1721 = vsub.f32 %v1713, %v1717
    %v1722 = vsub.f32 %v1714, %v1720
    %v1723 = vmul.f32 %v1721, 1.442695
    %v1724 = vpow.pop %v1723
    %v1725 = vmul.f32 %v1722, 1.442695
    %v1726 = vpow.pop %v1725
    %v1727 = vsel %vm976, %v1724, 0.0
    %1728 = vadd.xlane.f32.xlu0 %v1727
    %v1729 = vpop.xlane.xlu0 %1728
    %v1730 = vsel %vm976, %v1726, 0.0
    %1731 = vadd.xlane.f32.xlu0 %v1730
    %v1732 = vpop.xlane.xlu0 %1731
    %v1733 = vrcp.pop %v1729
    %v1734 = vrcp.pop %v1732
    %v1735 = vmul.f32 %v1724, %v1733
    %v1736 = vmul.f32 %v1726, %v1734
    %v1737 = vpack.c.bf16 %v1735, %v1735
    %v1738 = vpack.c.bf16 %v1736, %v1736
    %1739 = vrot.lane.b32.xlu0 %v1001, 80
    %v1740 = vpop.permute.xlu0 %1739
    %v1742 = vsel %vm976, %v1737, 0
    %v1745 = vsel %vm1006, %v1740, 0
    %1747 = vmatprep.subr.bf16.mxu0 0
    %1748 = vmatpush1.bf16.msra.mxu0 %v1745
    %1749 = vmatprep.subr.bf16.mxu0 0
    %1750 = vmatpush1.bf16.msra.mxu0 0
    %1751 = vmatprep.subr.bf16.mxu0 0
    %1752 = vmatpush1.bf16.msra.mxu0 0
    %1753 = vmatprep.subr.bf16.mxu0 0
    %1754 = vmatpush1.bf16.msra.mxu0 0
    %1755 = vmatprep.subr.bf16.mxu0 0
    %1756 = vmatpush1.bf16.msra.mxu0 0
    %1757 = vmatprep.subr.bf16.mxu0 0
    %1758 = vmatpush1.bf16.msra.mxu0 0
    %1759 = vmatprep.subr.bf16.mxu0 0
    %1760 = vmatpush1.bf16.msra.mxu0 0
    %1761 = vmatprep.subr.bf16.mxu0 0
    %1762 = vmatpush1.bf16.msra.mxu0 0
    %1763 = vmatprep.subr.bf16.mxu0 0
    %1764 = vmatpush1.bf16.msra.mxu0 0
    %1765 = vmatprep.subr.bf16.mxu0 0
    %1766 = vmatpush1.bf16.msra.mxu0 0
    %1767 = vmatprep.subr.bf16.mxu0 0
    %1768 = vmatpush1.bf16.msra.mxu0 0
    %1769 = vmatprep.subr.bf16.mxu0 0
    %1770 = vmatpush1.bf16.msra.mxu0 0
    %1771 = vmatprep.subr.bf16.mxu0 0
    %1772 = vmatpush1.bf16.msra.mxu0 0
    %1773 = vmatprep.subr.bf16.mxu0 0
    %1774 = vmatpush1.bf16.msra.mxu0 0
    %1775 = vmatprep.subr.bf16.mxu0 0
    %1776 = vmatpush1.bf16.msra.mxu0 0
    %1777 = vmatprep.subr.bf16.mxu0 0
    %1778 = vmatpush1.bf16.msra.mxu0 0
    %1779 = vmatprep.mubr.bf16.mxu0 0
    %1780 = vmatmul.mubr.bf16.gmra.mrb[0].mxu0 %v1742
    %v1781 = vpop.f32.mrb[0].mxu0
    %v1782 = vadd.f32 0.0, %v1781
    %v1783 = vpop.f32.mrb[0].mxu0
    %v1784 = vpop.f32.mrb[0].mxu0
    %v1785 = vpop.f32.mrb[0].mxu0
    %1786 = vdwg.mxu0
    %1787 = vrot.lane.b32.xlu0 %v1002, 80
    %v1788 = vpop.permute.xlu0 %1787
    %v1790 = vsel %vm976, %v1738, 0
    %v1793 = vsel %vm1006, %v1788, 0
    %1795 = vmatprep.subr.bf16.mxu0 0
    %1796 = vmatpush1.bf16.msra.mxu0 %v1793
    %1797 = vmatprep.subr.bf16.mxu0 0
    %1798 = vmatpush1.bf16.msra.mxu0 0
    %1799 = vmatprep.subr.bf16.mxu0 0
    %1800 = vmatpush1.bf16.msra.mxu0 0
    %1801 = vmatprep.subr.bf16.mxu0 0
    %1802 = vmatpush1.bf16.msra.mxu0 0
    %1803 = vmatprep.subr.bf16.mxu0 0
    %1804 = vmatpush1.bf16.msra.mxu0 0
    %1805 = vmatprep.subr.bf16.mxu0 0
    %1806 = vmatpush1.bf16.msra.mxu0 0
    %1807 = vmatprep.subr.bf16.mxu0 0
    %1808 = vmatpush1.bf16.msra.mxu0 0
    %1809 = vmatprep.subr.bf16.mxu0 0
    %1810 = vmatpush1.bf16.msra.mxu0 0
    %1811 = vmatprep.subr.bf16.mxu0 0
    %1812 = vmatpush1.bf16.msra.mxu0 0
    %1813 = vmatprep.subr.bf16.mxu0 0
    %1814 = vmatpush1.bf16.msra.mxu0 0
    %1815 = vmatprep.subr.bf16.mxu0 0
    %1816 = vmatpush1.bf16.msra.mxu0 0
    %1817 = vmatprep.subr.bf16.mxu0 0
    %1818 = vmatpush1.bf16.msra.mxu0 0
    %1819 = vmatprep.subr.bf16.mxu0 0
    %1820 = vmatpush1.bf16.msra.mxu0 0
    %1821 = vmatprep.subr.bf16.mxu0 0
    %1822 = vmatpush1.bf16.msra.mxu0 0
    %1823 = vmatprep.subr.bf16.mxu0 0
    %1824 = vmatpush1.bf16.msra.mxu0 0
    %1825 = vmatprep.subr.bf16.mxu0 0
    %1826 = vmatpush1.bf16.msra.mxu0 0
    %1827 = vmatprep.mubr.bf16.mxu0 0
    %1828 = vmatmul.mubr.bf16.gmra.mrb[0].mxu0 %v1790
    %v1829 = vpop.f32.mrb[0].mxu0
    %v1830 = vadd.f32 0.0, %v1829
    %v1831 = vpop.f32.mrb[0].mxu0
    %v1832 = vpop.f32.mrb[0].mxu0
    %v1833 = vpop.f32.mrb[0].mxu0
    %1834 = vdwg.mxu0
    %v1835 = vpack.c.bf16 %v1782, %v1782
    %v1836 = vpack.c.bf16 %v1830, %v1830
    %v1839 = vunpack.c.l.b16 %v1835
    %v1840 = vunpack.c.l.b16 %v1836
    %v1841 = vpack.c.b16 %v1840, %v1839
    %v1844 = vunpack.c.l.b16 %v840
    %v1845 = vunpack.c.l.b16 %v841
    %v1846 = vpack.c.b16 %v1845, %v1844
    %v1849 = vsel %vm846, %v1841, 0
    %1851 = vmatprep.subr.bf16.mxu0 0
    %1852 = vmatpush1.bf16.msra.mxu0 %v1846
    %1853 = vmatprep.subr.bf16.mxu0 0
    %1854 = vmatpush1.bf16.msra.mxu0 0
    %1855 = vmatprep.subr.bf16.mxu0 0
    %1856 = vmatpush1.bf16.msra.mxu0 0
    %1857 = vmatprep.subr.bf16.mxu0 0
    %1858 = vmatpush1.bf16.msra.mxu0 0
    %1859 = vmatprep.subr.bf16.mxu0 0
    %1860 = vmatpush1.bf16.msra.mxu0 0
    %1861 = vmatprep.subr.bf16.mxu0 0
    %1862 = vmatpush1.bf16.msra.mxu0 0
    %1863 = vmatprep.subr.bf16.mxu0 0
    %1864 = vmatpush1.bf16.msra.mxu0 0
    %1865 = vmatprep.subr.bf16.mxu0 0
    %1866 = vmatpush1.bf16.msra.mxu0 0
    %1867 = vmatprep.subr.bf16.mxu0 0
    %1868 = vmatpush1.bf16.msra.mxu0 0
    %1869 = vmatprep.subr.bf16.mxu0 0
    %1870 = vmatpush1.bf16.msra.mxu0 0
    %1871 = vmatprep.subr.bf16.mxu0 0
    %1872 = vmatpush1.bf16.msra.mxu0 0
    %1873 = vmatprep.subr.bf16.mxu0 0
    %1874 = vmatpush1.bf16.msra.mxu0 0
    %1875 = vmatprep.subr.bf16.mxu0 0
    %1876 = vmatpush1.bf16.msra.mxu0 0
    %1877 = vmatprep.subr.bf16.mxu0 0
    %1878 = vmatpush1.bf16.msra.mxu0 0
    %1879 = vmatprep.subr.bf16.mxu0 0
    %1880 = vmatpush1.bf16.msra.mxu0 0
    %1881 = vmatprep.subr.bf16.mxu0 0
    %1882 = vmatpush1.bf16.msra.mxu0 0
    %1883 = vmatprep.mubr.bf16.mxu0 0
    %1884 = vmatmul.mubr.bf16.gmra.mrb[0].mxu0 %v1849
    %v1885 = vpop.f32.mrb[0].mxu0
    %v1886 = vadd.f32 0.0, %v1885
    %v1887 = vpop.f32.mrb[0].mxu0
    %v1888 = vpop.f32.mrb[0].mxu0
    %v1889 = vadd.f32 0.0, %v1888
    %v1890 = vpop.f32.mrb[0].mxu0
    %1891 = vdwg.mxu0
    %v1894 = vunpack.c.l.b16 %v1096
    %v1895 = vunpack.c.l.b16 %v1097
    %v1896 = vpack.c.b16 %v1895, %v1894
    %v1899 = vunpack.c.l.b16 %v834
    %v1900 = vunpack.c.l.b16 %v835
    %v1901 = vpack.c.b16 %v1900, %v1899
    %v1904 = vsel %vm846, %v1896, 0
    %1906 = vmatprep.subr.bf16.mxu0 0
    %1907 = vmatpush1.bf16.msra.mxu0 %v1901
    %1908 = vmatprep.subr.bf16.mxu0 0
    %1909 = vmatpush1.bf16.msra.mxu0 0
    %1910 = vmatprep.subr.bf16.mxu0 0
    %1911 = vmatpush1.bf16.msra.mxu0 0
    %1912 = vmatprep.subr.bf16.mxu0 0
    %1913 = vmatpush1.bf16.msra.mxu0 0
    %1914 = vmatprep.subr.bf16.mxu0 0
    %1915 = vmatpush1.bf16.msra.mxu0 0
    %1916 = vmatprep.subr.bf16.mxu0 0
    %1917 = vmatpush1.bf16.msra.mxu0 0
    %1918 = vmatprep.subr.bf16.mxu0 0
    %1919 = vmatpush1.bf16.msra.mxu0 0
    %1920 = vmatprep.subr.bf16.mxu0 0
    %1921 = vmatpush1.bf16.msra.mxu0 0
    %1922 = vmatprep.subr.bf16.mxu0 0
    %1923 = vmatpush1.bf16.msra.mxu0 0
    %1924 = vmatprep.subr.bf16.mxu0 0
    %1925 = vmatpush1.bf16.msra.mxu0 0
    %1926 = vmatprep.subr.bf16.mxu0 0
    %1927 = vmatpush1.bf16.msra.mxu0 0
    %1928 = vmatprep.subr.bf16.mxu0 0
    %1929 = vmatpush1.bf16.msra.mxu0 0
    %1930 = vmatprep.subr.bf16.mxu0 0
    %1931 = vmatpush1.bf16.msra.mxu0 0
    %1932 = vmatprep.subr.bf16.mxu0 0
    %1933 = vmatpush1.bf16.msra.mxu0 0
    %1934 = vmatprep.subr.bf16.mxu0 0
    %1935 = vmatpush1.bf16.msra.mxu0 0
    %1936 = vmatprep.subr.bf16.mxu0 0
    %1937 = vmatpush1.bf16.msra.mxu0 0
    %1938 = vmatprep.mubr.bf16.mxu0 0
    %1939 = vmatmul.mubr.bf16.gmra.mrb[0].mxu0 %v1904
    %v1940 = vpop.f32.mrb[0].mxu0
    %v1941 = vadd.f32 %v1379, %v1940
    %v1942 = vpop.f32.mrb[0].mxu0
    %v1943 = vpop.f32.mrb[0].mxu0
    %v1944 = vadd.f32 %v1382, %v1943
    %v1945 = vpop.f32.mrb[0].mxu0
    %1946 = vdwg.mxu0
    %v1949 = vunpack.c.l.b16 %v1609
    %v1950 = vunpack.c.l.b16 %v1610
    %v1951 = vpack.c.b16 %v1950, %v1949
    %v1954 = vunpack.c.l.b16 %v838
    %v1955 = vunpack.c.l.b16 %v839
    %v1956 = vpack.c.b16 %v1955, %v1954
    %v1959 = vsel %vm846, %v1951, 0
    %1961 = vmatprep.subr.bf16.mxu0 0
    %1962 = vmatpush1.bf16.msra.mxu0 %v1956
    %1963 = vmatprep.subr.bf16.mxu0 0
    %1964 = vmatpush1.bf16.msra.mxu0 0
    %1965 = vmatprep.subr.bf16.mxu0 0
    %1966 = vmatpush1.bf16.msra.mxu0 0
    %1967 = vmatprep.subr.bf16.mxu0 0
    %1968 = vmatpush1.bf16.msra.mxu0 0
    %1969 = vmatprep.subr.bf16.mxu0 0
    %1970 = vmatpush1.bf16.msra.mxu0 0
    %1971 = vmatprep.subr.bf16.mxu0 0
    %1972 = vmatpush1.bf16.msra.mxu0 0
    %1973 = vmatprep.subr.bf16.mxu0 0
    %1974 = vmatpush1.bf16.msra.mxu0 0
    %1975 = vmatprep.subr.bf16.mxu0 0
    %1976 = vmatpush1.bf16.msra.mxu0 0
    %1977 = vmatprep.subr.bf16.mxu0 0
    %1978 = vmatpush1.bf16.msra.mxu0 0
    %1979 = vmatprep.subr.bf16.mxu0 0
    %1980 = vmatpush1.bf16.msra.mxu0 0
    %1981 = vmatprep.subr.bf16.mxu0 0
    %1982 = vmatpush1.bf16.msra.mxu0 0
    %1983 = vmatprep.subr.bf16.mxu0 0
    %1984 = vmatpush1.bf16.msra.mxu0 0
    %1985 = vmatprep.subr.bf16.mxu0 0
    %1986 = vmatpush1.bf16.msra.mxu0 0
    %1987 = vmatprep.subr.bf16.mxu0 0
    %1988 = vmatpush1.bf16.msra.mxu0 0
    %1989 = vmatprep.subr.bf16.mxu0 0
    %1990 = vmatpush1.bf16.msra.mxu0 0
    %1991 = vmatprep.subr.bf16.mxu0 0
    %1992 = vmatpush1.bf16.msra.mxu0 0
    %1993 = vmatprep.mubr.bf16.mxu0 0
    %1994 = vmatmul.mubr.bf16.gmra.mrb[0].mxu0 %v1959
    %v1995 = vpop.f32.mrb[0].mxu0
    %v1996 = vadd.f32 %v1886, %v1995
    %v1997 = vpop.f32.mrb[0].mxu0
    %v1998 = vpop.f32.mrb[0].mxu0
    %v1999 = vadd.f32 %v1889, %v1998
    %v2000 = vpop.f32.mrb[0].mxu0
    %2001 = vdwg.mxu0
    %v2002 = vadd.f32 %v1941, %v1996
    %v2003 = vadd.f32 %v1944, %v1999
    %v2004 = vld [vmem:[#allocation15] sm:$0x1]
    %v2006 = vlaneseq
    %v2007 = vshrl.u32 %v2006, 7
    %v2008 = vsub.s32 0, %v2007
    %v2009 = vrot.slane %v2004, %v2008
    %v2011 = vadd.f32 %v2002, %v2009
    %v2012 = vadd.f32 %v2003, %v2009
    %v2013 = vadd.f32 %v560, %v2011
    %v2014 = vadd.f32 %v561, %v2012
    %v2015 = vld [vmem:[#allocation17] sm:$0x1]
    %v2016 = vld [vmem:[#allocation18] sm:$0x1]
    %2017 = vadd.xlane.f32.xlu0 %v2013
    %v2018 = vpop.xlane.xlu0 %2017
    %2019 = vadd.xlane.f32.xlu0 %v2014
    %v2020 = vpop.xlane.xlu0 %2019
    %v2021 = vmul.f32 %v2018, 0.015625
    %v2022 = vmul.f32 %v2020, 0.015625
    %v2023 = vmul.f32 %v2013, %v2013
    %v2024 = vmul.f32 %v2014, %v2014
    %2025 = vadd.xlane.f32.xlu0 %v2023
    %v2026 = vpop.xlane.xlu0 %2025
    %2027 = vadd.xlane.f32.xlu0 %v2024
    %v2028 = vpop.xlane.xlu0 %2027
    %v2029 = vmul.f32 %v2026, 0.015625
    %v2030 = vmul.f32 %v2028, 0.015625
    %v2031 = vmul.f32 %v2021, %v2021
    %v2032 = vmul.f32 %v2022, %v2022
    %v2033 = vsub.f32 %v2029, %v2031
    %v2034 = vsub.f32 %v2030, %v2032
    %v2035 = vmax.f32 %v2033, 0.0
    %v2036 = vmax.f32 %v2034, 0.0
    %v2037 = vsub.f32 %v2013, %v2021
    %v2038 = vsub.f32 %v2014, %v2022
    %v2039 = vadd.f32 %v2035, 1e-12
    %v2040 = vadd.f32 %v2036, 1e-12
    %v2041 = vrsqrt.pop %v2039
    %v2042 = vrsqrt.pop %v2040
    %v2043 = vmul.f32 %v2037, %v2041
    %v2044 = vmul.f32 %v2038, %v2042
    %v2046 = vlaneseq
    %v2047 = vshrl.u32 %v2046, 7
    %v2048 = vsub.s32 0, %v2047
    %v2049 = vrot.slane %v2015, %v2048
    %v2051 = vmul.f32 %v2043, %v2049
    %v2052 = vmul.f32 %v2044, %v2049
    %v2054 = vlaneseq
    %v2055 = vshrl.u32 %v2054, 7
    %v2056 = vsub.s32 0, %v2055
    %v2057 = vrot.slane %v2016, %v2056
    %v2059 = vadd.f32 %v2051, %v2057
    %v2060 = vadd.f32 %v2052, %v2057
    %v2061 = vpack.c.bf16 %v2059, %v2059
    %v2062 = vpack.c.bf16 %v2060, %v2060
    %v2063 = vld [vmem:[#allocation20] sm:$0xff]
    %v2064 = vld [vmem:[#allocation20 + $0x8] sm:$0xff]
    %v2065 = vld [vmem:[#allocation20 + $0x10] sm:$0xff]
    %v2066 = vld [vmem:[#allocation20 + $0x18] sm:$0xff]
    %v2067 = vld [vmem:[#allocation20 + $0x20] sm:$0xff]
    %v2068 = vld [vmem:[#allocation20 + $0x28] sm:$0xff]
    %v2069 = vld [vmem:[#allocation20 + $0x30] sm:$0xff]
    %v2070 = vld [vmem:[#allocation20 + $0x38] sm:$0xff]
    %v2071 = vld [vmem:[#allocation20 + $0x40] sm:$0xff]
    %v2072 = vld [vmem:[#allocation20 + $0x48] sm:$0xff]
    %v2073 = vld [vmem:[#allocation20 + $0x50] sm:$0xff]
    %v2074 = vld [vmem:[#allocation20 + $0x58] sm:$0xff]
    %v2075 = vld [vmem:[#allocation20 + $0x60] sm:$0xff]
    %v2076 = vld [vmem:[#allocation20 + $0x68] sm:$0xff]
    %v2077 = vld [vmem:[#allocation20 + $0x70] sm:$0xff]
    %v2078 = vld [vmem:[#allocation20 + $0x78] sm:$0xff]
    %v2079 = vld [vmem:[%s31] sm:$0x3]
    %v2081 = vlaneseq
    %v2082 = vshrl.u32 %v2081, 7
    %v2083 = vsub.s32 0, %v2082
    %v2084 = vrot.slane %v2079, %v2083
    %v2085 = vlaneseq
    %v2086 = vshrl.u32 %v2085, 7
    %v2087 = vsub.s32 1, %v2086
    %v2088 = vrot.slane %v2079, %v2087
    %v2093 = vunpack.c.l.b16 %v2061
    %v2094 = vunpack.c.l.b16 %v2062
    %v2095 = vpack.c.b16 %v2094, %v2093
    %v2113 = vunpack.c.l.b16 %v2063
    %v2114 = vunpack.c.h.b16 %v2063
    %v2115 = vunpack.c.l.b16 %v2064
    %v2116 = vunpack.c.h.b16 %v2064
    %v2117 = vunpack.c.l.b16 %v2065
    %v2118 = vunpack.c.h.b16 %v2065
    %v2119 = vunpack.c.l.b16 %v2066
    %v2120 = vunpack.c.h.b16 %v2066
    %v2121 = vunpack.c.l.b16 %v2067
    %v2122 = vunpack.c.h.b16 %v2067
    %v2123 = vunpack.c.l.b16 %v2068
    %v2124 = vunpack.c.h.b16 %v2068
    %v2125 = vunpack.c.l.b16 %v2069
    %v2126 = vunpack.c.h.b16 %v2069
    %v2127 = vunpack.c.l.b16 %v2070
    %v2128 = vunpack.c.h.b16 %v2070
    %v2129 = vunpack.c.l.b16 %v2071
    %v2130 = vunpack.c.h.b16 %v2071
    %v2131 = vunpack.c.l.b16 %v2072
    %v2132 = vunpack.c.h.b16 %v2072
    %v2133 = vunpack.c.l.b16 %v2073
    %v2134 = vunpack.c.h.b16 %v2073
    %v2135 = vunpack.c.l.b16 %v2074
    %v2136 = vunpack.c.h.b16 %v2074
    %v2137 = vunpack.c.l.b16 %v2075
    %v2138 = vunpack.c.h.b16 %v2075
    %v2139 = vunpack.c.l.b16 %v2076
    %v2140 = vunpack.c.h.b16 %v2076
    %v2141 = vunpack.c.l.b16 %v2077
    %v2142 = vunpack.c.h.b16 %v2077
    %v2143 = vunpack.c.l.b16 %v2078
    %v2144 = vunpack.c.h.b16 %v2078
    %v2145 = vpack.c.b16 %v2115, %v2113
    %v2146 = vpack.c.b16 %v2116, %v2114
    %v2147 = vpack.c.b16 %v2119, %v2117
    %v2148 = vpack.c.b16 %v2120, %v2118
    %v2149 = vpack.c.b16 %v2123, %v2121
    %v2150 = vpack.c.b16 %v2124, %v2122
    %v2151 = vpack.c.b16 %v2127, %v2125
    %v2152 = vpack.c.b16 %v2128, %v2126
    %v2153 = vpack.c.b16 %v2131, %v2129
    %v2154 = vpack.c.b16 %v2132, %v2130
    %v2155 = vpack.c.b16 %v2135, %v2133
    %v2156 = vpack.c.b16 %v2136, %v2134
    %v2157 = vpack.c.b16 %v2139, %v2137
    %v2158 = vpack.c.b16 %v2140, %v2138
    %v2159 = vpack.c.b16 %v2143, %v2141
    %v2160 = vpack.c.b16 %v2144, %v2142
    %2177 = vmatprep.subr.bf16.mxu0 %v2146
    %2178 = vmatpush1.bf16.msra.mxu0 %v2145
    %2179 = vmatprep.subr.bf16.mxu0 %v2148
    %2180 = vmatpush1.bf16.msra.mxu0 %v2147
    %2181 = vmatprep.subr.bf16.mxu0 %v2150
    %2182 = vmatpush1.bf16.msra.mxu0 %v2149
    %2183 = vmatprep.subr.bf16.mxu0 %v2152
    %2184 = vmatpush1.bf16.msra.mxu0 %v2151
    %2185 = vmatprep.subr.bf16.mxu0 %v2154
    %2186 = vmatpush1.bf16.msra.mxu0 %v2153
    %2187 = vmatprep.subr.bf16.mxu0 %v2156
    %2188 = vmatpush1.bf16.msra.mxu0 %v2155
    %2189 = vmatprep.subr.bf16.mxu0 %v2158
    %2190 = vmatpush1.bf16.msra.mxu0 %v2157
    %2191 = vmatprep.subr.bf16.mxu0 %v2160
    %2192 = vmatpush1.bf16.msra.mxu0 %v2159
    %2193 = vmatprep.subr.bf16.mxu0 0
    %2194 = vmatpush1.bf16.msra.mxu0 0
    %2195 = vmatprep.subr.bf16.mxu0 0
    %2196 = vmatpush1.bf16.msra.mxu0 0
    %2197 = vmatprep.subr.bf16.mxu0 0
    %2198 = vmatpush1.bf16.msra.mxu0 0
    %2199 = vmatprep.subr.bf16.mxu0 0
    %2200 = vmatpush1.bf16.msra.mxu0 0
    %2201 = vmatprep.subr.bf16.mxu0 0
    %2202 = vmatpush1.bf16.msra.mxu0 0
    %2203 = vmatprep.subr.bf16.mxu0 0
    %2204 = vmatpush1.bf16.msra.mxu0 0
    %2205 = vmatprep.subr.bf16.mxu0 0
    %2206 = vmatpush1.bf16.msra.mxu0 0
    %2207 = vmatprep.subr.bf16.mxu0 0
    %2208 = vmatpush1.bf16.msra.mxu0 0
    %2209 = vmatprep.mubr.bf16.mxu0 0
    %2210 = vmatmul.mubr.bf16.gmra.mrb[0].mxu0 %v2095
    %v2211 = vpop.f32.mrb[0].mxu0
    %v2212 = vadd.f32 %v2084, %v2211
    %v2213 = vpop.f32.mrb[0].mxu0
    %v2214 = vadd.f32 %v2088, %v2213
    %v2215 = vpop.f32.mrb[0].mxu0
    %v2216 = vadd.f32 %v2084, %v2215
    %v2217 = vpop.f32.mrb[0].mxu0
    %v2218 = vadd.f32 %v2088, %v2217
    %2219 = vdwg.mxu0
    %v2220 = vmul.f32 %v2212, %v2212
    %v2221 = vmul.f32 %v2214, %v2214
    %v2222 = vmul.f32 %v2216, %v2216
    %v2223 = vmul.f32 %v2218, %v2218
    %v2224 = vmul.f32 %v2212, %v2220
    %v2225 = vmul.f32 %v2214, %v2221
    %v2226 = vmul.f32 %v2216, %v2222
    %v2227 = vmul.f32 %v2218, %v2223
    %v2228 = vmul.f32 %v2224, 0.044715
    %v2229 = vmul.f32 %v2225, 0.044715
    %v2230 = vmul.f32 %v2226, 0.044715
    %v2231 = vmul.f32 %v2227, 0.044715
    %v2232 = vadd.f32 %v2212, %v2228
    %v2233 = vadd.f32 %v2214, %v2229
    %v2234 = vadd.f32 %v2216, %v2230
    %v2235 = vadd.f32 %v2218, %v2231
    %v2236 = vmul.f32 %v2232, 0.7978846
    %v2237 = vmul.f32 %v2233, 0.7978846
    %v2238 = vmul.f32 %v2234, 0.7978846
    %v2239 = vmul.f32 %v2235, 0.7978846
    %v2240 = vtanh.pop %v2236
    %v2241 = vtanh.pop %v2237
    %v2242 = vtanh.pop %v2238
    %v2243 = vtanh.pop %v2239
    %v2244 = vadd.f32 %v2240, 1.0
    %v2245 = vadd.f32 %v2241, 1.0
    %v2246 = vadd.f32 %v2242, 1.0
    %v2247 = vadd.f32 %v2243, 1.0
    %v2248 = vmul.f32 %v2244, 0.5
    %v2249 = vmul.f32 %v2245, 0.5
    %v2250 = vmul.f32 %v2246, 0.5
    %v2251 = vmul.f32 %v2247, 0.5
    %v2252 = vmul.f32 %v2212, %v2248
    %v2253 = vmul.f32 %v2214, %v2249
    %v2254 = vmul.f32 %v2216, %v2250
    %v2255 = vmul.f32 %v2218, %v2251
    %v2256 = vpack.c.bf16 %v2252, %v2252
    %v2257 = vpack.c.bf16 %v2253, %v2253
    %v2258 = vpack.c.bf16 %v2254, %v2254
    %v2259 = vpack.c.bf16 %v2255, %v2255
    %v2260 = vld [vmem:[#allocation21] sm:$0xf]
    %v2261 = vld [vmem:[#allocation21 + $0x4] sm:$0xf]
    %v2262 = vld [vmem:[#allocation21 + $0x8] sm:$0xf]
    %v2263 = vld [vmem:[#allocation21 + $0xc] sm:$0xf]
    %v2264 = vld [vmem:[#allocation21 + $0x10] sm:$0xf]
    %v2265 = vld [vmem:[#allocation21 + $0x14] sm:$0xf]
    %v2266 = vld [vmem:[#allocation21 + $0x18] sm:$0xf]
    %v2267 = vld [vmem:[#allocation21 + $0x1c] sm:$0xf]
    %v2268 = vld [vmem:[#allocation21 + $0x20] sm:$0xf]
    %v2269 = vld [vmem:[#allocation21 + $0x24] sm:$0xf]
    %v2270 = vld [vmem:[#allocation21 + $0x28] sm:$0xf]
    %v2271 = vld [vmem:[#allocation21 + $0x2c] sm:$0xf]
    %v2272 = vld [vmem:[#allocation21 + $0x30] sm:$0xf]
    %v2273 = vld [vmem:[#allocation21 + $0x34] sm:$0xf]
    %v2274 = vld [vmem:[#allocation21 + $0x38] sm:$0xf]
    %v2275 = vld [vmem:[#allocation21 + $0x3c] sm:$0xf]
    %v2276 = vld [vmem:[#allocation21 + $0x40] sm:$0xf]
    %v2277 = vld [vmem:[#allocation21 + $0x44] sm:$0xf]
    %v2278 = vld [vmem:[#allocation21 + $0x48] sm:$0xf]
    %v2279 = vld [vmem:[#allocation21 + $0x4c] sm:$0xf]
    %v2280 = vld [vmem:[#allocation21 + $0x50] sm:$0xf]
    %v2281 = vld [vmem:[#allocation21 + $0x54] sm:$0xf]
    %v2282 = vld [vmem:[#allocation21 + $0x58] sm:$0xf]
    %v2283 = vld [vmem:[#allocation21 + $0x5c] sm:$0xf]
    %v2284 = vld [vmem:[#allocation21 + $0x60] sm:$0xf]
    %v2285 = vld [vmem:[#allocation21 + $0x64] sm:$0xf]
    %v2286 = vld [vmem:[#allocation21 + $0x68] sm:$0xf]
    %v2287 = vld [vmem:[#allocation21 + $0x6c] sm:$0xf]
    %v2288 = vld [vmem:[#allocation21 + $0x70] sm:$0xf]
    %v2289 = vld [vmem:[#allocation21 + $0x74] sm:$0xf]
    %v2290 = vld [vmem:[#allocation21 + $0x78] sm:$0xf]
    %v2291 = vld [vmem:[#allocation21 + $0x7c] sm:$0xf]
    %v2292 = vld [vmem:[#allocation23] sm:$0x1]
    %v2294 = vlaneseq
    %v2295 = vshrl.u32 %v2294, 7
    %v2296 = vsub.s32 0, %v2295
    %v2297 = vrot.slane %v2292, %v2296
    %v2303 = vunpack.c.l.b16 %v2256
    %v2304 = vunpack.c.l.b16 %v2257
    %v2305 = vunpack.c.l.b16 %v2258
    %v2306 = vunpack.c.l.b16 %v2259
    %v2307 = vpack.c.b16 %v2305, %v2303
    %v2308 = vpack.c.b16 %v2306, %v2304
    %v2343 = vunpack.c.l.b16 %v2260
    %v2344 = vunpack.c.l.b16 %v2261
    %v2345 = vunpack.c.l.b16 %v2262
    %v2346 = vunpack.c.l.b16 %v2263
    %v2347 = vunpack.c.l.b16 %v2264
    %v2348 = vunpack.c.l.b16 %v2265
    %v2349 = vunpack.c.l.b16 %v2266
    %v2350 = vunpack.c.l.b16 %v2267
    %v2351 = vunpack.c.l.b16 %v2268
    %v2352 = vunpack.c.l.b16 %v2269
    %v2353 = vunpack.c.l.b16 %v2270
    %v2354 = vunpack.c.l.b16 %v2271
    %v2355 = vunpack.c.l.b16 %v2272
    %v2356 = vunpack.c.l.b16 %v2273
    %v2357 = vunpack.c.l.b16 %v2274
    %v2358 = vunpack.c.l.b16 %v2275
    %v2359 = vunpack.c.l.b16 %v2276
    %v2360 = vunpack.c.l.b16 %v2277
    %v2361 = vunpack.c.l.b16 %v2278
    %v2362 = vunpack.c.l.b16 %v2279
    %v2363 = vunpack.c.l.b16 %v2280
    %v2364 = vunpack.c.l.b16 %v2281
    %v2365 = vunpack.c.l.b16 %v2282
    %v2366 = vunpack.c.l.b16 %v2283
    %v2367 = vunpack.c.l.b16 %v2284
    %v2368 = vunpack.c.l.b16 %v2285
    %v2369 = vunpack.c.l.b16 %v2286
    %v2370 = vunpack.c.l.b16 %v2287
    %v2371 = vunpack.c.l.b16 %v2288
    %v2372 = vunpack.c.l.b16 %v2289
    %v2373 = vunpack.c.l.b16 %v2290
    %v2374 = vunpack.c.l.b16 %v2291
    %v2375 = vpack.c.b16 %v2344, %v2343
    %v2376 = vpack.c.b16 %v2346, %v2345
    %v2377 = vpack.c.b16 %v2348, %v2347
    %v2378 = vpack.c.b16 %v2350, %v2349
    %v2379 = vpack.c.b16 %v2352, %v2351
    %v2380 = vpack.c.b16 %v2354, %v2353
    %v2381 = vpack.c.b16 %v2356, %v2355
    %v2382 = vpack.c.b16 %v2358, %v2357
    %v2383 = vpack.c.b16 %v2360, %v2359
    %v2384 = vpack.c.b16 %v2362, %v2361
    %v2385 = vpack.c.b16 %v2364, %v2363
    %v2386 = vpack.c.b16 %v2366, %v2365
    %v2387 = vpack.c.b16 %v2368, %v2367
    %v2388 = vpack.c.b16 %v2370, %v2369
    %v2389 = vpack.c.b16 %v2372, %v2371
    %v2390 = vpack.c.b16 %v2374, %v2373
    %2407 = vmatprep.subr.bf16.mxu0 0
    %2408 = vmatpush1.bf16.msra.mxu0 %v2375
    %2409 = vmatprep.subr.bf16.mxu0 0
    %2410 = vmatpush1.bf16.msra.mxu0 %v2376
    %2411 = vmatprep.subr.bf16.mxu0 0
    %2412 = vmatpush1.bf16.msra.mxu0 %v2377
    %2413 = vmatprep.subr.bf16.mxu0 0
    %2414 = vmatpush1.bf16.msra.mxu0 %v2378
    %2415 = vmatprep.subr.bf16.mxu0 0
    %2416 = vmatpush1.bf16.msra.mxu0 %v2379
    %2417 = vmatprep.subr.bf16.mxu0 0
    %2418 = vmatpush1.bf16.msra.mxu0 %v2380
    %2419 = vmatprep.subr.bf16.mxu0 0
    %2420 = vmatpush1.bf16.msra.mxu0 %v2381
    %2421 = vmatprep.subr.bf16.mxu0 0
    %2422 = vmatpush1.bf16.msra.mxu0 %v2382
    %2423 = vmatprep.subr.bf16.mxu0 0
    %2424 = vmatpush1.bf16.msra.mxu0 %v2383
    %2425 = vmatprep.subr.bf16.mxu0 0
    %2426 = vmatpush1.bf16.msra.mxu0 %v2384
    %2427 = vmatprep.subr.bf16.mxu0 0
    %2428 = vmatpush1.bf16.msra.mxu0 %v2385
    %2429 = vmatprep.subr.bf16.mxu0 0
    %2430 = vmatpush1.bf16.msra.mxu0 %v2386
    %2431 = vmatprep.subr.bf16.mxu0 0
    %2432 = vmatpush1.bf16.msra.mxu0 %v2387
    %2433 = vmatprep.subr.bf16.mxu0 0
    %2434 = vmatpush1.bf16.msra.mxu0 %v2388
    %2435 = vmatprep.subr.bf16.mxu0 0
    %2436 = vmatpush1.bf16.msra.mxu0 %v2389
    %2437 = vmatprep.subr.bf16.mxu0 0
    %2438 = vmatpush1.bf16.msra.mxu0 %v2390
    %2439 = vmatprep.mubr.bf16.mxu0 %v2308
    %2440 = vmatmul.mubr.bf16.gmra.mrb[0].mxu0 %v2307
    %v2441 = vpop.f32.mrb[0].mxu0
    %v2442 = vadd.f32 %v2297, %v2441
    %v2443 = vpop.f32.mrb[0].mxu0
    %v2444 = vpop.f32.mrb[0].mxu0
    %v2445 = vadd.f32 %v2297, %v2444
    %v2446 = vpop.f32.mrb[0].mxu0
    %2447 = vdwg.mxu0
    %v2448 = vadd.f32 %v2059, %v2442
    %v2449 = vadd.f32 %v2060, %v2445
    %v2450 = vld [vmem:[#allocation24] sm:$0x1]
    %v2451 = vld [vmem:[#allocation26] sm:$0x1]
    %2452 = vadd.xlane.f32.xlu0 %v2448
    %v2453 = vpop.xlane.xlu0 %2452
    %2454 = vadd.xlane.f32.xlu0 %v2449
    %v2455 = vpop.xlane.xlu0 %2454
    %v2456 = vmul.f32 %v2453, 0.015625
    %v2457 = vmul.f32 %v2455, 0.015625
    %v2458 = vmul.f32 %v2448, %v2448
    %v2459 = vmul.f32 %v2449, %v2449
    %2460 = vadd.xlane.f32.xlu0 %v2458
    %v2461 = vpop.xlane.xlu0 %2460
    %2462 = vadd.xlane.f32.xlu0 %v2459
    %v2463 = vpop.xlane.xlu0 %2462
    %v2464 = vmul.f32 %v2461, 0.015625
    %v2465 = vmul.f32 %v2463, 0.015625
    %v2466 = vmul.f32 %v2456, %v2456
    %v2467 = vmul.f32 %v2457, %v2457
    %v2468 = vsub.f32 %v2464, %v2466
    %v2469 = vsub.f32 %v2465, %v2467
    %v2470 = vmax.f32 %v2468, 0.0
    %v2471 = vmax.f32 %v2469, 0.0
    %v2472 = vsub.f32 %v2448, %v2456
    %v2473 = vsub.f32 %v2449, %v2457
    %v2474 = vadd.f32 %v2470, 1e-12
    %v2475 = vadd.f32 %v2471, 1e-12
    %v2476 = vrsqrt.pop %v2474
    %v2477 = vrsqrt.pop %v2475
    %v2478 = vmul.f32 %v2472, %v2476
    %v2479 = vmul.f32 %v2473, %v2477
    %v2481 = vlaneseq
    %v2482 = vshrl.u32 %v2481, 7
    %v2483 = vsub.s32 0, %v2482
    %v2484 = vrot.slane %v2450, %v2483
    %v2486 = vmul.f32 %v2478, %v2484
    %v2487 = vmul.f32 %v2479, %v2484
    %v2489 = vlaneseq
    %v2490 = vshrl.u32 %v2489, 7
    %v2491 = vsub.s32 0, %v2490
    %v2492 = vrot.slane %v2451, %v2491
    %v2494 = vadd.f32 %v2486, %v2492
    %v2495 = vadd.f32 %v2487, %v2492
    %v2496 = vpack.c.bf16 %v2494, %v2494
    %v2497 = vpack.c.bf16 %v2495, %v2495
    %s2498 = scalar_lea.vmem [#allocation12], 192
    %v2499 = vld [vmem:[%s2498] sm:$0xff]
    %v2500 = vld [vmem:[%s2498 + $0x8] sm:$0xf]
    %v2501 = vld [vmem:[%s2498 + $0xc] sm:$0xff]
    %v2502 = vld [vmem:[%s2498 + $0x14] sm:$0xf]
    %v2503 = vld [vmem:[%s2498 + $0x18] sm:$0xff]
    %v2504 = vld [vmem:[%s2498 + $0x20] sm:$0xf]
    %v2505 = vld [vmem:[%s2498 + $0x24] sm:$0xff]
    %v2506 = vld [vmem:[%s2498 + $0x2c] sm:$0xf]
    %v2507 = vld [vmem:[%s2498 + $0x30] sm:$0xff]
    %v2508 = vld [vmem:[%s2498 + $0x38] sm:$0xf]
    %v2509 = vld [vmem:[%s2498 + $0x3c] sm:$0xff]
    %v2510 = vld [vmem:[%s2498 + $0x44] sm:$0xf]
    %v2511 = vld [vmem:[%s2498 + $0x48] sm:$0xff]
    %v2512 = vld [vmem:[%s2498 + $0x50] sm:$0xf]
    %v2513 = vld [vmem:[%s2498 + $0x54] sm:$0xff]
    %v2514 = vld [vmem:[%s2498 + $0x5c] sm:$0xf]
    %v2515 = vld [vmem:[%s2498 + $0x60] sm:$0xff]
    %v2516 = vld [vmem:[%s2498 + $0x68] sm:$0xf]
    %v2517 = vld [vmem:[%s2498 + $0x6c] sm:$0xff]
    %v2518 = vld [vmem:[%s2498 + $0x74] sm:$0xf]
    %v2519 = vld [vmem:[%s2498 + $0x78] sm:$0xff]
    %v2520 = vld [vmem:[%s2498 + $0x80] sm:$0xf]
    %v2521 = vld [vmem:[%s2498 + $0x84] sm:$0xff]
    %v2522 = vld [vmem:[%s2498 + $0x8c] sm:$0xf]
    %v2523 = vld [vmem:[%s2498 + $0x90] sm:$0xff]
    %v2524 = vld [vmem:[%s2498 + $0x98] sm:$0xf]
    %v2525 = vld [vmem:[%s2498 + $0x9c] sm:$0xff]
    %v2526 = vld [vmem:[%s2498 + $0xa4] sm:$0xf]
    %v2527 = vld [vmem:[%s2498 + $0xa8] sm:$0xff]
    %v2528 = vld [vmem:[%s2498 + $0xb0] sm:$0xf]
    %v2529 = vld [vmem:[%s2498 + $0xb4] sm:$0xff]
    %v2530 = vld [vmem:[%s2498 + $0xbc] sm:$0xf]
    %s2531 = scalar_lea.vmem %s19, 3
    %v2532 = vld [vmem:[%s2531] sm:$0x7]
    %v2534 = vlaneseq
    %v2535 = vshrl.u32 %v2534, 7
    %v2536 = vsub.s32 0, %v2535
    %v2537 = vrot.slane %v2532, %v2536
    %v2538 = vlaneseq
    %v2539 = vshrl.u32 %v2538, 7
    %v2540 = vsub.s32 1, %v2539
    %v2541 = vrot.slane %v2532, %v2540
    %v2542 = vlaneseq
    %v2543 = vshrl.u32 %v2542, 7
    %v2544 = vsub.s32 2, %v2543
    %v2545 = vrot.slane %v2532, %v2544
    %v2551 = vunpack.c.l.b16 %v2496
    %v2552 = vunpack.c.l.b16 %v2497
    %v2553 = vpack.c.b16 %v2552, %v2551
    %v2587 = vunpack.c.l.b16 %v2499
    %v2588 = vunpack.c.h.b16 %v2499
    %v2589 = vunpack.c.l.b16 %v2500
    %v2590 = vunpack.c.l.b16 %v2501
    %v2591 = vunpack.c.h.b16 %v2501
    %v2592 = vunpack.c.l.b16 %v2502
    %v2593 = vunpack.c.l.b16 %v2503
    %v2594 = vunpack.c.h.b16 %v2503
    %v2595 = vunpack.c.l.b16 %v2504
    %v2596 = vunpack.c.l.b16 %v2505
    %v2597 = vunpack.c.h.b16 %v2505
    %v2598 = vunpack.c.l.b16 %v2506
    %v2599 = vunpack.c.l.b16 %v2507
    %v2600 = vunpack.c.h.b16 %v2507
    %v2601 = vunpack.c.l.b16 %v2508
    %v2602 = vunpack.c.l.b16 %v2509
    %v2603 = vunpack.c.h.b16 %v2509
    %v2604 = vunpack.c.l.b16 %v2510
    %v2605 = vunpack.c.l.b16 %v2511
    %v2606 = vunpack.c.h.b16 %v2511
    %v2607 = vunpack.c.l.b16 %v2512
    %v2608 = vunpack.c.l.b16 %v2513
    %v2609 = vunpack.c.h.b16 %v2513
    %v2610 = vunpack.c.l.b16 %v2514
    %v2611 = vunpack.c.l.b16 %v2515
    %v2612 = vunpack.c.h.b16 %v2515
    %v2613 = vunpack.c.l.b16 %v2516
    %v2614 = vunpack.c.l.b16 %v2517
    %v2615 = vunpack.c.h.b16 %v2517
    %v2616 = vunpack.c.l.b16 %v2518
    %v2617 = vunpack.c.l.b16 %v2519
    %v2618 = vunpack.c.h.b16 %v2519
    %v2619 = vunpack.c.l.b16 %v2520
    %v2620 = vunpack.c.l.b16 %v2521
    %v2621 = vunpack.c.h.b16 %v2521
    %v2622 = vunpack.c.l.b16 %v2522
    %v2623 = vunpack.c.l.b16 %v2523
    %v2624 = vunpack.c.h.b16 %v2523
    %v2625 = vunpack.c.l.b16 %v2524
    %v2626 = vunpack.c.l.b16 %v2525
    %v2627 = vunpack.c.h.b16 %v2525
    %v2628 = vunpack.c.l.b16 %v2526
    %v2629 = vunpack.c.l.b16 %v2527
    %v2630 = vunpack.c.h.b16 %v2527
    %v2631 = vunpack.c.l.b16 %v2528
    %v2632 = vunpack.c.l.b16 %v2529
    %v2633 = vunpack.c.h.b16 %v2529
    %v2634 = vunpack.c.l.b16 %v2530
    %v2635 = vpack.c.b16 %v2590, %v2587
    %v2636 = vpack.c.b16 %v2591, %v2588
    %v2637 = vpack.c.b16 %v2592, %v2589
    %v2638 = vpack.c.b16 %v2596, %v2593
    %v2639 = vpack.c.b16 %v2597, %v2594
    %v2640 = vpack.c.b16 %v2598, %v2595
    %v2641 = vpack.c.b16 %v2602, %v2599
    %v2642 = vpack.c.b16 %v2603, %v2600
    %v2643 = vpack.c.b16 %v2604, %v2601
    %v2644 = vpack.c.b16 %v2608, %v2605
    %v2645 = vpack.c.b16 %v2609, %v2606
    %v2646 = vpack.c.b16 %v2610, %v2607
    %v2647 = vpack.c.b16 %v2614, %v2611
    %v2648 = vpack.c.b16 %v2615, %v2612
    %v2649 = vpack.c.b16 %v2616, %v2613
    %v2650 = vpack.c.b16 %v2620, %v2617
    %v2651 = vpack.c.b16 %v2621, %v2618
    %v2652 = vpack.c.b16 %v2622, %v2619
    %v2653 = vpack.c.b16 %v2626, %v2623
    %v2654 = vpack.c.b16 %v2627, %v2624
    %v2655 = vpack.c.b16 %v2628, %v2625
    %v2656 = vpack.c.b16 %v2632, %v2629
    %v2657 = vpack.c.b16 %v2633, %v2630
    %v2658 = vpack.c.b16 %v2634, %v2631
    %2683 = vmatprep.subr.bf16.mxu0 %v2636
    %2684 = vmatpush1.bf16.msra.mxu0 %v2635
    %2685 = vmatprep.subr.bf16.mxu0 %v2639
    %2686 = vmatpush1.bf16.msra.mxu0 %v2638
    %2687 = vmatprep.subr.bf16.mxu0 %v2642
    %2688 = vmatpush1.bf16.msra.mxu0 %v2641
    %2689 = vmatprep.subr.bf16.mxu0 %v2645
    %2690 = vmatpush1.bf16.msra.mxu0 %v2644
    %2691 = vmatprep.subr.bf16.mxu0 %v2648
    %2692 = vmatpush1.bf16.msra.mxu0 %v2647
    %2693 = vmatprep.subr.bf16.mxu0 %v2651
    %2694 = vmatpush1.bf16.msra.mxu0 %v2650
    %2695 = vmatprep.subr.bf16.mxu0 %v2654
    %2696 = vmatpush1.bf16.msra.mxu0 %v2653
    %2697 = vmatprep.subr.bf16.mxu0 %v2657
    %2698 = vmatpush1.bf16.msra.mxu0 %v2656
    %2699 = vmatprep.subr.bf16.mxu0 0
    %2700 = vmatpush1.bf16.msra.mxu0 0
    %2701 = vmatprep.subr.bf16.mxu0 0
    %2702 = vmatpush1.bf16.msra.mxu0 0
    %2703 = vmatprep.subr.bf16.mxu0 0
    %2704 = vmatpush1.bf16.msra.mxu0 0
    %2705 = vmatprep.subr.bf16.mxu0 0
    %2706 = vmatpush1.bf16.msra.mxu0 0
    %2707 = vmatprep.subr.bf16.mxu0 0
    %2708 = vmatpush1.bf16.msra.mxu0 0
    %2709 = vmatprep.subr.bf16.mxu0 0
    %2710 = vmatpush1.bf16.msra.mxu0 0
    %2711 = vmatprep.subr.bf16.mxu0 0
    %2712 = vmatpush1.bf16.msra.mxu0 0
    %2713 = vmatprep.subr.bf16.mxu0 0
    %2714 = vmatpush1.bf16.msra.mxu0 0
    %2715 = vmatprep.mubr.bf16.mxu0 0
    %2716 = vmatmul.mubr.bf16.gmra.mrb[0].mxu0 %v2553
    %v2717 = vpop.f32.mrb[0].mxu0
    %v2718 = vadd.f32 %v2537, %v2717
    %v2719 = vpop.f32.mrb[0].mxu0
    %v2720 = vadd.f32 %v2541, %v2719
    %v2721 = vpop.f32.mrb[0].mxu0
    %v2722 = vadd.f32 %v2537, %v2721
    %v2723 = vpop.f32.mrb[0].mxu0
    %v2724 = vadd.f32 %v2541, %v2723
    %2725 = vdwg.mxu0
    %2726 = vmatprep.subr.bf16.mxu0 0
    %2727 = vmatpush1.bf16.msra.mxu0 %v2637
    %2728 = vmatprep.subr.bf16.mxu0 0
    %2729 = vmatpush1.bf16.msra.mxu0 %v2640
    %2730 = vmatprep.subr.bf16.mxu0 0
    %2731 = vmatpush1.bf16.msra.mxu0 %v2643
    %2732 = vmatprep.subr.bf16.mxu0 0
    %2733 = vmatpush1.bf16.msra.mxu0 %v2646
    %2734 = vmatprep.subr.bf16.mxu0 0
    %2735 = vmatpush1.bf16.msra.mxu0 %v2649
    %2736 = vmatprep.subr.bf16.mxu0 0
    %2737 = vmatpush1.bf16.msra.mxu0 %v2652
    %2738 = vmatprep.subr.bf16.mxu0 0
    %2739 = vmatpush1.bf16.msra.mxu0 %v2655
    %2740 = vmatprep.subr.bf16.mxu0 0
    %2741 = vmatpush1.bf16.msra.mxu0 %v2658
    %2742 = vmatprep.subr.bf16.mxu0 0
    %2743 = vmatpush1.bf16.msra.mxu0 0
    %2744 = vmatprep.subr.bf16.mxu0 0
    %2745 = vmatpush1.bf16.msra.mxu0 0
    %2746 = vmatprep.subr.bf16.mxu0 0
    %2747 = vmatpush1.bf16.msra.mxu0 0
    %2748 = vmatprep.subr.bf16.mxu0 0
    %2749 = vmatpush1.bf16.msra.mxu0 0
    %2750 = vmatprep.subr.bf16.mxu0 0
    %2751 = vmatpush1.bf16.msra.mxu0 0
    %2752 = vmatprep.subr.bf16.mxu0 0
    %2753 = vmatpush1.bf16.msra.mxu0 0
    %2754 = vmatprep.subr.bf16.mxu0 0
    %2755 = vmatpush1.bf16.msra.mxu0 0
    %2756 = vmatprep.subr.bf16.mxu0 0
    %2757 = vmatpush1.bf16.msra.mxu0 0
    %2758 = vmatprep.mubr.bf16.mxu0 0
    %2759 = vmatmul.mubr.bf16.gmra.mrb[0].mxu0 %v2553
    %v2760 = vpop.f32.mrb[0].mxu0
    %v2761 = vadd.f32 %v2545, %v2760
    %v2762 = vpop.f32.mrb[0].mxu0
    %v2763 = vpop.f32.mrb[0].mxu0
    %v2764 = vadd.f32 %v2545, %v2763
    %v2765 = vpop.f32.mrb[0].mxu0
    %2766 = vdwg.mxu0
    %s2767 = scalar_lea.vmem [#allocation14], 32
    %v2768 = vld [vmem:[%s2767] sm:$0xf]
    %v2769 = vld [vmem:[%s2767 + $0x4] sm:$0xf]
    %v2770 = vld [vmem:[%s2767 + $0x8] sm:$0xf]
    %v2771 = vld [vmem:[%s2767 + $0xc] sm:$0xf]
    %v2772 = vld [vmem:[%s2767 + $0x10] sm:$0xf]
    %v2773 = vld [vmem:[%s2767 + $0x14] sm:$0xf]
    %v2774 = vld [vmem:[%s2767 + $0x18] sm:$0xf]
    %v2775 = vld [vmem:[%s2767 + $0x1c] sm:$0xf]
    %v2776 = vpack.c.bf16 %v2718, %v2718
    %v2777 = vpack.c.bf16 %v2722, %v2722
    %v2778 = vpack.c.bf16 %v2720, %v2720
    %v2779 = vpack.c.bf16 %v2724, %v2724
    %v2781 = vsel %vm846, %v2776, 0
    %v2784 = vsel %vm846, %v2778, 0
    %2786 = vmatprep.subr.bf16.mxu0 0
    %2787 = vmatpush1.bf16.xpose.msra.mxu0 %v2784
    %2788 = vmatprep.subr.bf16.mxu0 0
    %2789 = vmatpush1.bf16.xpose.msra.mxu0 0
    %2790 = vmatprep.subr.bf16.mxu0 0
    %2791 = vmatpush1.bf16.xpose.msra.mxu0 0
    %2792 = vmatprep.subr.bf16.mxu0 0
    %2793 = vmatpush1.bf16.xpose.msra.mxu0 0
    %2794 = vmatprep.subr.bf16.mxu0 0
    %2795 = vmatpush1.bf16.xpose.msra.mxu0 0
    %2796 = vmatprep.subr.bf16.mxu0 0
    %2797 = vmatpush1.bf16.xpose.msra.mxu0 0
    %2798 = vmatprep.subr.bf16.mxu0 0
    %2799 = vmatpush1.bf16.xpose.msra.mxu0 0
    %2800 = vmatprep.subr.bf16.mxu0 0
    %2801 = vmatpush1.bf16.xpose.msra.mxu0 0
    %2802 = vmatprep.subr.bf16.mxu0 0
    %2803 = vmatpush1.bf16.xpose.msra.mxu0 0
    %2804 = vmatprep.subr.bf16.mxu0 0
    %2805 = vmatpush1.bf16.xpose.msra.mxu0 0
    %2806 = vmatprep.subr.bf16.mxu0 0
    %2807 = vmatpush1.bf16.xpose.msra.mxu0 0
    %2808 = vmatprep.subr.bf16.mxu0 0
    %2809 = vmatpush1.bf16.xpose.msra.mxu0 0
    %2810 = vmatprep.subr.bf16.mxu0 0
    %2811 = vmatpush1.bf16.xpose.msra.mxu0 0
    %2812 = vmatprep.subr.bf16.mxu0 0
    %2813 = vmatpush1.bf16.xpose.msra.mxu0 0
    %2814 = vmatprep.subr.bf16.mxu0 0
    %2815 = vmatpush1.bf16.xpose.msra.mxu0 0
    %2816 = vmatprep.subr.bf16.mxu0 0
    %2817 = vmatpush1.bf16.xpose.msra.mxu0 0
    %2818 = vmatprep.mubr.bf16.mxu0 0
    %2819 = vmatmul.mubr.bf16.gmra.mrb[0].mxu0 %v2781
    %v2820 = vpop.f32.mrb[0].mxu0
    %v2821 = vadd.f32 0.0, %v2820
    %v2822 = vpop.f32.mrb[0].mxu0
    %v2823 = vpop.f32.mrb[0].mxu0
    %v2824 = vpop.f32.mrb[0].mxu0
    %2825 = vdwg.mxu0
    %v2827 = vsel %vm846, %v2777, 0
    %v2830 = vsel %vm846, %v2779, 0
    %2832 = vmatprep.subr.bf16.mxu0 0
    %2833 = vmatpush1.bf16.xpose.msra.mxu0 %v2830
    %2834 = vmatprep.subr.bf16.mxu0 0
    %2835 = vmatpush1.bf16.xpose.msra.mxu0 0
    %2836 = vmatprep.subr.bf16.mxu0 0
    %2837 = vmatpush1.bf16.xpose.msra.mxu0 0
    %2838 = vmatprep.subr.bf16.mxu0 0
    %2839 = vmatpush1.bf16.xpose.msra.mxu0 0
    %2840 = vmatprep.subr.bf16.mxu0 0
    %2841 = vmatpush1.bf16.xpose.msra.mxu0 0
    %2842 = vmatprep.subr.bf16.mxu0 0
    %2843 = vmatpush1.bf16.xpose.msra.mxu0 0
    %2844 = vmatprep.subr.bf16.mxu0 0
    %2845 = vmatpush1.bf16.xpose.msra.mxu0 0
    %2846 = vmatprep.subr.bf16.mxu0 0
    %2847 = vmatpush1.bf16.xpose.msra.mxu0 0
    %2848 = vmatprep.subr.bf16.mxu0 0
    %2849 = vmatpush1.bf16.xpose.msra.mxu0 0
    %2850 = vmatprep.subr.bf16.mxu0 0
    %2851 = vmatpush1.bf16.xpose.msra.mxu0 0
    %2852 = vmatprep.subr.bf16.mxu0 0
    %2853 = vmatpush1.bf16.xpose.msra.mxu0 0
    %2854 = vmatprep.subr.bf16.mxu0 0
    %2855 = vmatpush1.bf16.xpose.msra.mxu0 0
    %2856 = vmatprep.subr.bf16.mxu0 0
    %2857 = vmatpush1.bf16.xpose.msra.mxu0 0
    %2858 = vmatprep.subr.bf16.mxu0 0
    %2859 = vmatpush1.bf16.xpose.msra.mxu0 0
    %2860 = vmatprep.subr.bf16.mxu0 0
    %2861 = vmatpush1.bf16.xpose.msra.mxu0 0
    %2862 = vmatprep.subr.bf16.mxu0 0
    %2863 = vmatpush1.bf16.xpose.msra.mxu0 0
    %2864 = vmatprep.mubr.bf16.mxu0 0
    %2865 = vmatmul.mubr.bf16.gmra.mrb[0].mxu0 %v2827
    %v2866 = vpop.f32.mrb[0].mxu0
    %v2867 = vadd.f32 0.0, %v2866
    %v2868 = vpop.f32.mrb[0].mxu0
    %v2869 = vpop.f32.mrb[0].mxu0
    %v2870 = vpop.f32.mrb[0].mxu0
    %2871 = vdwg.mxu0
    %v2872 = vmul.f32 %v2821, 0.25
    %v2873 = vmul.f32 %v2867, 0.25
    %v2874 = vadd.f32 %v2872, %v967
    %v2875 = vadd.f32 %v2873, %v971
    %v2876 = vsel %vm976, %v2874, -inf
    %2877 = vmax.xlane.f32.xlu0 %v2876
    %v2878 = vpop.xlane.xlu0 %2877
    %v2879 = vsel %vm976, %v2875, -inf
    %2880 = vmax.xlane.f32.xlu0 %v2879
    %v2881 = vpop.xlane.xlu0 %2880
    %v2882 = vsub.f32 %v2874, %v2878
    %v2883 = vsub.f32 %v2875, %v2881
    %v2884 = vmul.f32 %v2882, 1.442695
    %v2885 = vpow.pop %v2884
    %v2886 = vmul.f32 %v2883, 1.442695
    %v2887 = vpow.pop %v2886
    %v2888 = vsel %vm976, %v2885, 0.0
    %2889 = vadd.xlane.f32.xlu0 %v2888
    %v2890 = vpop.xlane.xlu0 %2889
    %v2891 = vsel %vm976, %v2887, 0.0
    %2892 = vadd.xlane.f32.xlu0 %v2891
    %v2893 = vpop.xlane.xlu0 %2892
    %v2894 = vrcp.pop %v2890
    %v2895 = vrcp.pop %v2893
    %v2896 = vmul.f32 %v2885, %v2894
    %v2897 = vmul.f32 %v2887, %v2895
    %v2898 = vpack.c.bf16 %v2896, %v2896
    %v2899 = vpack.c.bf16 %v2897, %v2897
    %v2900 = vpack.c.bf16 %v2761, %v2761
    %v2901 = vpack.c.bf16 %v2764, %v2764
    %v2903 = vsel %vm976, %v2898, 0
    %v2906 = vsel %vm1006, %v2900, 0
    %2908 = vmatprep.subr.bf16.mxu0 0
    %2909 = vmatpush1.bf16.msra.mxu0 %v2906
    %2910 = vmatprep.subr.bf16.mxu0 0
    %2911 = vmatpush1.bf16.msra.mxu0 0
    %2912 = vmatprep.subr.bf16.mxu0 0
    %2913 = vmatpush1.bf16.msra.mxu0 0
    %2914 = vmatprep.subr.bf16.mxu0 0
    %2915 = vmatpush1.bf16.msra.mxu0 0
    %2916 = vmatprep.subr.bf16.mxu0 0
    %2917 = vmatpush1.bf16.msra.mxu0 0
    %2918 = vmatprep.subr.bf16.mxu0 0
    %2919 = vmatpush1.bf16.msra.mxu0 0
    %2920 = vmatprep.subr.bf16.mxu0 0
    %2921 = vmatpush1.bf16.msra.mxu0 0
    %2922 = vmatprep.subr.bf16.mxu0 0
    %2923 = vmatpush1.bf16.msra.mxu0 0
    %2924 = vmatprep.subr.bf16.mxu0 0
    %2925 = vmatpush1.bf16.msra.mxu0 0
    %2926 = vmatprep.subr.bf16.mxu0 0
    %2927 = vmatpush1.bf16.msra.mxu0 0
    %2928 = vmatprep.subr.bf16.mxu0 0
    %2929 = vmatpush1.bf16.msra.mxu0 0
    %2930 = vmatprep.subr.bf16.mxu0 0
    %2931 = vmatpush1.bf16.msra.mxu0 0
    %2932 = vmatprep.subr.bf16.mxu0 0
    %2933 = vmatpush1.bf16.msra.mxu0 0
    %2934 = vmatprep.subr.bf16.mxu0 0
    %2935 = vmatpush1.bf16.msra.mxu0 0
    %2936 = vmatprep.subr.bf16.mxu0 0
    %2937 = vmatpush1.bf16.msra.mxu0 0
    %2938 = vmatprep.subr.bf16.mxu0 0
    %2939 = vmatpush1.bf16.msra.mxu0 0
    %2940 = vmatprep.mubr.bf16.mxu0 0
    %2941 = vmatmul.mubr.bf16.gmra.mrb[0].mxu0 %v2903
    %v2942 = vpop.f32.mrb[0].mxu0
    %v2943 = vadd.f32 0.0, %v2942
    %v2944 = vpop.f32.mrb[0].mxu0
    %v2945 = vpop.f32.mrb[0].mxu0
    %v2946 = vpop.f32.mrb[0].mxu0
    %2947 = vdwg.mxu0
    %v2949 = vsel %vm976, %v2899, 0
    %v2952 = vsel %vm1006, %v2901, 0
    %2954 = vmatprep.subr.bf16.mxu0 0
    %2955 = vmatpush1.bf16.msra.mxu0 %v2952
    %2956 = vmatprep.subr.bf16.mxu0 0
    %2957 = vmatpush1.bf16.msra.mxu0 0
    %2958 = vmatprep.subr.bf16.mxu0 0
    %2959 = vmatpush1.bf16.msra.mxu0 0
    %2960 = vmatprep.subr.bf16.mxu0 0
    %2961 = vmatpush1.bf16.msra.mxu0 0
    %2962 = vmatprep.subr.bf16.mxu0 0
    %2963 = vmatpush1.bf16.msra.mxu0 0
    %2964 = vmatprep.subr.bf16.mxu0 0
    %2965 = vmatpush1.bf16.msra.mxu0 0
    %2966 = vmatprep.subr.bf16.mxu0 0
    %2967 = vmatpush1.bf16.msra.mxu0 0
    %2968 = vmatprep.subr.bf16.mxu0 0
    %2969 = vmatpush1.bf16.msra.mxu0 0
    %2970 = vmatprep.subr.bf16.mxu0 0
    %2971 = vmatpush1.bf16.msra.mxu0 0
    %2972 = vmatprep.subr.bf16.mxu0 0
    %2973 = vmatpush1.bf16.msra.mxu0 0
    %2974 = vmatprep.subr.bf16.mxu0 0
    %2975 = vmatpush1.bf16.msra.mxu0 0
    %2976 = vmatprep.subr.bf16.mxu0 0
    %2977 = vmatpush1.bf16.msra.mxu0 0
    %2978 = vmatprep.subr.bf16.mxu0 0
    %2979 = vmatpush1.bf16.msra.mxu0 0
    %2980 = vmatprep.subr.bf16.mxu0 0
    %2981 = vmatpush1.bf16.msra.mxu0 0
    %2982 = vmatprep.subr.bf16.mxu0 0
    %2983 = vmatpush1.bf16.msra.mxu0 0
    %2984 = vmatprep.subr.bf16.mxu0 0
    %2985 = vmatpush1.bf16.msra.mxu0 0
    %2986 = vmatprep.mubr.bf16.mxu0 0
    %2987 = vmatmul.mubr.bf16.gmra.mrb[0].mxu0 %v2949
    %v2988 = vpop.f32.mrb[0].mxu0
    %v2989 = vadd.f32 0.0, %v2988
    %v2990 = vpop.f32.mrb[0].mxu0
    %v2991 = vpop.f32.mrb[0].mxu0
    %v2992 = vpop.f32.mrb[0].mxu0
    %2993 = vdwg.mxu0
    %v2994 = vpack.c.bf16 %v2943, %v2943
    %v2995 = vpack.c.bf16 %v2989, %v2989
    %2997 = vrot.lane.b32.xlu0 %v2776, 112
    %v2998 = vpop.permute.xlu0 %2997
    %3000 = vrot.lane.b32.xlu0 %v2778, 112
    %v3001 = vpop.permute.xlu0 %3000
    %v3003 = vsel %vm846, %v2998, 0
    %v3006 = vsel %vm846, %v3001, 0
    %3008 = vmatprep.subr.bf16.mxu0 0
    %3009 = vmatpush1.bf16.xpose.msra.mxu0 %v3006
    %3010 = vmatprep.subr.bf16.mxu0 0
    %3011 = vmatpush1.bf16.xpose.msra.mxu0 0
    %3012 = vmatprep.subr.bf16.mxu0 0
    %3013 = vmatpush1.bf16.xpose.msra.mxu0 0
    %3014 = vmatprep.subr.bf16.mxu0 0
    %3015 = vmatpush1.bf16.xpose.msra.mxu0 0
    %3016 = vmatprep.subr.bf16.mxu0 0
    %3017 = vmatpush1.bf16.xpose.msra.mxu0 0
    %3018 = vmatprep.subr.bf16.mxu0 0
    %3019 = vmatpush1.bf16.xpose.msra.mxu0 0
    %3020 = vmatprep.subr.bf16.mxu0 0
    %3021 = vmatpush1.bf16.xpose.msra.mxu0 0
    %3022 = vmatprep.subr.bf16.mxu0 0
    %3023 = vmatpush1.bf16.xpose.msra.mxu0 0
    %3024 = vmatprep.subr.bf16.mxu0 0
    %3025 = vmatpush1.bf16.xpose.msra.mxu0 0
    %3026 = vmatprep.subr.bf16.mxu0 0
    %3027 = vmatpush1.bf16.xpose.msra.mxu0 0
    %3028 = vmatprep.subr.bf16.mxu0 0
    %3029 = vmatpush1.bf16.xpose.msra.mxu0 0
    %3030 = vmatprep.subr.bf16.mxu0 0
    %3031 = vmatpush1.bf16.xpose.msra.mxu0 0
    %3032 = vmatprep.subr.bf16.mxu0 0
    %3033 = vmatpush1.bf16.xpose.msra.mxu0 0
    %3034 = vmatprep.subr.bf16.mxu0 0
    %3035 = vmatpush1.bf16.xpose.msra.mxu0 0
    %3036 = vmatprep.subr.bf16.mxu0 0
    %3037 = vmatpush1.bf16.xpose.msra.mxu0 0
    %3038 = vmatprep.subr.bf16.mxu0 0
    %3039 = vmatpush1.bf16.xpose.msra.mxu0 0
    %3040 = vmatprep.mubr.bf16.mxu0 0
    %3041 = vmatmul.mubr.bf16.gmra.mrb[0].mxu0 %v3003
    %v3042 = vpop.f32.mrb[0].mxu0
    %v3043 = vadd.f32 0.0, %v3042
    %v3044 = vpop.f32.mrb[0].mxu0
    %v3045 = vpop.f32.mrb[0].mxu0
    %v3046 = vpop.f32.mrb[0].mxu0
    %3047 = vdwg.mxu0
    %3049 = vrot.lane.b32.xlu0 %v2777, 112
    %v3050 = vpop.permute.xlu0 %3049
    %3052 = vrot.lane.b32.xlu0 %v2779, 112
    %v3053 = vpop.permute.xlu0 %3052
    %v3055 = vsel %vm846, %v3050, 0
    %v3058 = vsel %vm846, %v3053, 0
    %3060 = vmatprep.subr.bf16.mxu0 0
    %3061 = vmatpush1.bf16.xpose.msra.mxu0 %v3058
    %3062 = vmatprep.subr.bf16.mxu0 0
    %3063 = vmatpush1.bf16.xpose.msra.mxu0 0
    %3064 = vmatprep.subr.bf16.mxu0 0
    %3065 = vmatpush1.bf16.xpose.msra.mxu0 0
    %3066 = vmatprep.subr.bf16.mxu0 0
    %3067 = vmatpush1.bf16.xpose.msra.mxu0 0
    %3068 = vmatprep.subr.bf16.mxu0 0
    %3069 = vmatpush1.bf16.xpose.msra.mxu0 0
    %3070 = vmatprep.subr.bf16.mxu0 0
    %3071 = vmatpush1.bf16.xpose.msra.mxu0 0
    %3072 = vmatprep.subr.bf16.mxu0 0
    %3073 = vmatpush1.bf16.xpose.msra.mxu0 0
    %3074 = vmatprep.subr.bf16.mxu0 0
    %3075 = vmatpush1.bf16.xpose.msra.mxu0 0
    %3076 = vmatprep.subr.bf16.mxu0 0
    %3077 = vmatpush1.bf16.xpose.msra.mxu0 0
    %3078 = vmatprep.subr.bf16.mxu0 0
    %3079 = vmatpush1.bf16.xpose.msra.mxu0 0
    %3080 = vmatprep.subr.bf16.mxu0 0
    %3081 = vmatpush1.bf16.xpose.msra.mxu0 0
    %3082 = vmatprep.subr.bf16.mxu0 0
    %3083 = vmatpush1.bf16.xpose.msra.mxu0 0
    %3084 = vmatprep.subr.bf16.mxu0 0
    %3085 = vmatpush1.bf16.xpose.msra.mxu0 0
    %3086 = vmatprep.subr.bf16.mxu0 0
    %3087 = vmatpush1.bf16.xpose.msra.mxu0 0
    %3088 = vmatprep.subr.bf16.mxu0 0
    %3089 = vmatpush1.bf16.xpose.msra.mxu0 0
    %3090 = vmatprep.subr.bf16.mxu0 0
    %3091 = vmatpush1.bf16.xpose.msra.mxu0 0
    %3092 = vmatprep.mubr.bf16.mxu0 0
    %3093 = vmatmul.mubr.bf16.gmra.mrb[0].mxu0 %v3055
    %v3094 = vpop.f32.mrb[0].mxu0
    %v3095 = vadd.f32 0.0, %v3094
    %v3096 = vpop.f32.mrb[0].mxu0
    %v3097 = vpop.f32.mrb[0].mxu0
    %v3098 = vpop.f32.mrb[0].mxu0
    %3099 = vdwg.mxu0
    %v3100 = vmul.f32 %v3043, 0.25
    %v3101 = vmul.f32 %v3095, 0.25
    %v3102 = vadd.f32 %v3100, %v967
    %v3103 = vadd.f32 %v3101, %v971
    %v3104 = vsel %vm976, %v3102, -inf
    %3105 = vmax.xlane.f32.xlu0 %v3104
    %v3106 = vpop.xlane.xlu0 %3105
    %v3107 = vsel %vm976, %v3103, -inf
    %3108 = vmax.xlane.f32.xlu0 %v3107
    %v3109 = vpop.xlane.xlu0 %3108
    %v3110 = vsub.f32 %v3102, %v3106
    %v3111 = vsub.f32 %v3103, %v3109
    %v3112 = vmul.f32 %v3110, 1.442695
    %v3113 = vpow.pop %v3112
    %v3114 = vmul.f32 %v3111, 1.442695
    %v3115 = vpow.pop %v3114
    %v3116 = vsel %vm976, %v3113, 0.0
    %3117 = vadd.xlane.f32.xlu0 %v3116
    %v3118 = vpop.xlane.xlu0 %3117
    %v3119 = vsel %vm976, %v3115, 0.0
    %3120 = vadd.xlane.f32.xlu0 %v3119
    %v3121 = vpop.xlane.xlu0 %3120
    %v3122 = vrcp.pop %v3118
    %v3123 = vrcp.pop %v3121
    %v3124 = vmul.f32 %v3113, %v3122
    %v3125 = vmul.f32 %v3115, %v3123
    %v3126 = vpack.c.bf16 %v3124, %v3124
    %v3127 = vpack.c.bf16 %v3125, %v3125
    %3129 = vrot.lane.b32.xlu0 %v2900, 112
    %v3130 = vpop.permute.xlu0 %3129
    %v3132 = vsel %vm976, %v3126, 0
    %v3135 = vsel %vm1006, %v3130, 0
    %3137 = vmatprep.subr.bf16.mxu0 0
    %3138 = vmatpush1.bf16.msra.mxu0 %v3135
    %3139 = vmatprep.subr.bf16.mxu0 0
    %3140 = vmatpush1.bf16.msra.mxu0 0
    %3141 = vmatprep.subr.bf16.mxu0 0
    %3142 = vmatpush1.bf16.msra.mxu0 0
    %3143 = vmatprep.subr.bf16.mxu0 0
    %3144 = vmatpush1.bf16.msra.mxu0 0
    %3145 = vmatprep.subr.bf16.mxu0 0
    %3146 = vmatpush1.bf16.msra.mxu0 0
    %3147 = vmatprep.subr.bf16.mxu0 0
    %3148 = vmatpush1.bf16.msra.mxu0 0
    %3149 = vmatprep.subr.bf16.mxu0 0
    %3150 = vmatpush1.bf16.msra.mxu0 0
    %3151 = vmatprep.subr.bf16.mxu0 0
    %3152 = vmatpush1.bf16.msra.mxu0 0
    %3153 = vmatprep.subr.bf16.mxu0 0
    %3154 = vmatpush1.bf16.msra.mxu0 0
    %3155 = vmatprep.subr.bf16.mxu0 0
    %3156 = vmatpush1.bf16.msra.mxu0 0
    %3157 = vmatprep.subr.bf16.mxu0 0
    %3158 = vmatpush1.bf16.msra.mxu0 0
    %3159 = vmatprep.subr.bf16.mxu0 0
    %3160 = vmatpush1.bf16.msra.mxu0 0
    %3161 = vmatprep.subr.bf16.mxu0 0
    %3162 = vmatpush1.bf16.msra.mxu0 0
    %3163 = vmatprep.subr.bf16.mxu0 0
    %3164 = vmatpush1.bf16.msra.mxu0 0
    %3165 = vmatprep.subr.bf16.mxu0 0
    %3166 = vmatpush1.bf16.msra.mxu0 0
    %3167 = vmatprep.subr.bf16.mxu0 0
    %3168 = vmatpush1.bf16.msra.mxu0 0
    %3169 = vmatprep.mubr.bf16.mxu0 0
    %3170 = vmatmul.mubr.bf16.gmra.mrb[0].mxu0 %v3132
    %v3171 = vpop.f32.mrb[0].mxu0
    %v3172 = vadd.f32 0.0, %v3171
    %v3173 = vpop.f32.mrb[0].mxu0
    %v3174 = vpop.f32.mrb[0].mxu0
    %v3175 = vpop.f32.mrb[0].mxu0
    %3176 = vdwg.mxu0
    %3178 = vrot.lane.b32.xlu0 %v2901, 112
    %v3179 = vpop.permute.xlu0 %3178
    %v3181 = vsel %vm976, %v3127, 0
    %v3184 = vsel %vm1006, %v3179, 0
    %3186 = vmatprep.subr.bf16.mxu0 0
    %3187 = vmatpush1.bf16.msra.mxu0 %v3184
    %3188 = vmatprep.subr.bf16.mxu0 0
    %3189 = vmatpush1.bf16.msra.mxu0 0
    %3190 = vmatprep.subr.bf16.mxu0 0
    %3191 = vmatpush1.bf16.msra.mxu0 0
    %3192 = vmatprep.subr.bf16.mxu0 0
    %3193 = vmatpush1.bf16.msra.mxu0 0
    %3194 = vmatprep.subr.bf16.mxu0 0
    %3195 = vmatpush1.bf16.msra.mxu0 0
    %3196 = vmatprep.subr.bf16.mxu0 0
    %3197 = vmatpush1.bf16.msra.mxu0 0
    %3198 = vmatprep.subr.bf16.mxu0 0
    %3199 = vmatpush1.bf16.msra.mxu0 0
    %3200 = vmatprep.subr.bf16.mxu0 0
    %3201 = vmatpush1.bf16.msra.mxu0 0
    %3202 = vmatprep.subr.bf16.mxu0 0
    %3203 = vmatpush1.bf16.msra.mxu0 0
    %3204 = vmatprep.subr.bf16.mxu0 0
    %3205 = vmatpush1.bf16.msra.mxu0 0
    %3206 = vmatprep.subr.bf16.mxu0 0
    %3207 = vmatpush1.bf16.msra.mxu0 0
    %3208 = vmatprep.subr.bf16.mxu0 0
    %3209 = vmatpush1.bf16.msra.mxu0 0
    %3210 = vmatprep.subr.bf16.mxu0 0
    %3211 = vmatpush1.bf16.msra.mxu0 0
    %3212 = vmatprep.subr.bf16.mxu0 0
    %3213 = vmatpush1.bf16.msra.mxu0 0
    %3214 = vmatprep.subr.bf16.mxu0 0
    %3215 = vmatpush1.bf16.msra.mxu0 0
    %3216 = vmatprep.subr.bf16.mxu0 0
    %3217 = vmatpush1.bf16.msra.mxu0 0
    %3218 = vmatprep.mubr.bf16.mxu0 0
    %3219 = vmatmul.mubr.bf16.gmra.mrb[0].mxu0 %v3181
    %v3220 = vpop.f32.mrb[0].mxu0
    %v3221 = vadd.f32 0.0, %v3220
    %v3222 = vpop.f32.mrb[0].mxu0
    %v3223 = vpop.f32.mrb[0].mxu0
    %v3224 = vpop.f32.mrb[0].mxu0
    %3225 = vdwg.mxu0
    %v3226 = vpack.c.bf16 %v3172, %v3172
    %v3227 = vpack.c.bf16 %v3221, %v3221
    %v3230 = vunpack.c.l.b16 %v3226
    %v3231 = vunpack.c.l.b16 %v3227
    %v3232 = vpack.c.b16 %v3231, %v3230
    %v3235 = vunpack.c.l.b16 %v2770
    %v3236 = vunpack.c.l.b16 %v2771
    %v3237 = vpack.c.b16 %v3236, %v3235
    %v3240 = vsel %vm846, %v3232, 0
    %3242 = vmatprep.subr.bf16.mxu0 0
    %3243 = vmatpush1.bf16.msra.mxu0 %v3237
    %3244 = vmatprep.subr.bf16.mxu0 0
    %3245 = vmatpush1.bf16.msra.mxu0 0
    %3246 = vmatprep.subr.bf16.mxu0 0
    %3247 = vmatpush1.bf16.msra.mxu0 0
    %3248 = vmatprep.subr.bf16.mxu0 0
    %3249 = vmatpush1.bf16.msra.mxu0 0
    %3250 = vmatprep.subr.bf16.mxu0 0
    %3251 = vmatpush1.bf16.msra.mxu0 0
    %3252 = vmatprep.subr.bf16.mxu0 0
    %3253 = vmatpush1.bf16.msra.mxu0 0
    %3254 = vmatprep.subr.bf16.mxu0 0
    %3255 = vmatpush1.bf16.msra.mxu0 0
    %3256 = vmatprep.subr.bf16.mxu0 0
    %3257 = vmatpush1.bf16.msra.mxu0 0
    %3258 = vmatprep.subr.bf16.mxu0 0
    %3259 = vmatpush1.bf16.msra.mxu0 0
    %3260 = vmatprep.subr.bf16.mxu0 0
    %3261 = vmatpush1.bf16.msra.mxu0 0
    %3262 = vmatprep.subr.bf16.mxu0 0
    %3263 = vmatpush1.bf16.msra.mxu0 0
    %3264 = vmatprep.subr.bf16.mxu0 0
    %3265 = vmatpush1.bf16.msra.mxu0 0
    %3266 = vmatprep.subr.bf16.mxu0 0
    %3267 = vmatpush1.bf16.msra.mxu0 0
    %3268 = vmatprep.subr.bf16.mxu0 0
    %3269 = vmatpush1.bf16.msra.mxu0 0
    %3270 = vmatprep.subr.bf16.mxu0 0
    %3271 = vmatpush1.bf16.msra.mxu0 0
    %3272 = vmatprep.subr.bf16.mxu0 0
    %3273 = vmatpush1.bf16.msra.mxu0 0
    %3274 = vmatprep.mubr.bf16.mxu0 0
    %3275 = vmatmul.mubr.bf16.gmra.mrb[0].mxu0 %v3240
    %v3276 = vpop.f32.mrb[0].mxu0
    %v3277 = vadd.f32 0.0, %v3276
    %v3278 = vpop.f32.mrb[0].mxu0
    %v3279 = vpop.f32.mrb[0].mxu0
    %v3280 = vadd.f32 0.0, %v3279
    %v3281 = vpop.f32.mrb[0].mxu0
    %3282 = vdwg.mxu0
    %3283 = vrot.lane.b32.xlu0 %v2776, 96
    %v3284 = vpop.permute.xlu0 %3283
    %3285 = vrot.lane.b32.xlu0 %v2778, 96
    %v3286 = vpop.permute.xlu0 %3285
    %v3288 = vsel %vm846, %v3284, 0
    %v3291 = vsel %vm846, %v3286, 0
    %3293 = vmatprep.subr.bf16.mxu0 0
    %3294 = vmatpush1.bf16.xpose.msra.mxu0 %v3291
    %3295 = vmatprep.subr.bf16.mxu0 0
    %3296 = vmatpush1.bf16.xpose.msra.mxu0 0
    %3297 = vmatprep.subr.bf16.mxu0 0
    %3298 = vmatpush1.bf16.xpose.msra.mxu0 0
    %3299 = vmatprep.subr.bf16.mxu0 0
    %3300 = vmatpush1.bf16.xpose.msra.mxu0 0
    %3301 = vmatprep.subr.bf16.mxu0 0
    %3302 = vmatpush1.bf16.xpose.msra.mxu0 0
    %3303 = vmatprep.subr.bf16.mxu0 0
    %3304 = vmatpush1.bf16.xpose.msra.mxu0 0
    %3305 = vmatprep.subr.bf16.mxu0 0
    %3306 = vmatpush1.bf16.xpose.msra.mxu0 0
    %3307 = vmatprep.subr.bf16.mxu0 0
    %3308 = vmatpush1.bf16.xpose.msra.mxu0 0
    %3309 = vmatprep.subr.bf16.mxu0 0
    %3310 = vmatpush1.bf16.xpose.msra.mxu0 0
    %3311 = vmatprep.subr.bf16.mxu0 0
    %3312 = vmatpush1.bf16.xpose.msra.mxu0 0
    %3313 = vmatprep.subr.bf16.mxu0 0
    %3314 = vmatpush1.bf16.xpose.msra.mxu0 0
    %3315 = vmatprep.subr.bf16.mxu0 0
    %3316 = vmatpush1.bf16.xpose.msra.mxu0 0
    %3317 = vmatprep.subr.bf16.mxu0 0
    %3318 = vmatpush1.bf16.xpose.msra.mxu0 0
    %3319 = vmatprep.subr.bf16.mxu0 0
    %3320 = vmatpush1.bf16.xpose.msra.mxu0 0
    %3321 = vmatprep.subr.bf16.mxu0 0
    %3322 = vmatpush1.bf16.xpose.msra.mxu0 0
    %3323 = vmatprep.subr.bf16.mxu0 0
    %3324 = vmatpush1.bf16.xpose.msra.mxu0 0
    %3325 = vmatprep.mubr.bf16.mxu0 0
    %3326 = vmatmul.mubr.bf16.gmra.mrb[0].mxu0 %v3288
    %v3327 = vpop.f32.mrb[0].mxu0
    %v3328 = vadd.f32 0.0, %v3327
    %v3329 = vpop.f32.mrb[0].mxu0
    %v3330 = vpop.f32.mrb[0].mxu0
    %v3331 = vpop.f32.mrb[0].mxu0
    %3332 = vdwg.mxu0
    %3333 = vrot.lane.b32.xlu0 %v2777, 96
    %v3334 = vpop.permute.xlu0 %3333
    %3335 = vrot.lane.b32.xlu0 %v2779, 96
    %v3336 = vpop.permute.xlu0 %3335
    %v3338 = vsel %vm846, %v3334, 0
    %v3341 = vsel %vm846, %v3336, 0
    %3343 = vmatprep.subr.bf16.mxu0 0
    %3344 = vmatpush1.bf16.xpose.msra.mxu0 %v3341
    %3345 = vmatprep.subr.bf16.mxu0 0
    %3346 = vmatpush1.bf16.xpose.msra.mxu0 0
    %3347 = vmatprep.subr.bf16.mxu0 0
    %3348 = vmatpush1.bf16.xpose.msra.mxu0 0
    %3349 = vmatprep.subr.bf16.mxu0 0
    %3350 = vmatpush1.bf16.xpose.msra.mxu0 0
    %3351 = vmatprep.subr.bf16.mxu0 0
    %3352 = vmatpush1.bf16.xpose.msra.mxu0 0
    %3353 = vmatprep.subr.bf16.mxu0 0
    %3354 = vmatpush1.bf16.xpose.msra.mxu0 0
    %3355 = vmatprep.subr.bf16.mxu0 0
    %3356 = vmatpush1.bf16.xpose.msra.mxu0 0
    %3357 = vmatprep.subr.bf16.mxu0 0
    %3358 = vmatpush1.bf16.xpose.msra.mxu0 0
    %3359 = vmatprep.subr.bf16.mxu0 0
    %3360 = vmatpush1.bf16.xpose.msra.mxu0 0
    %3361 = vmatprep.subr.bf16.mxu0 0
    %3362 = vmatpush1.bf16.xpose.msra.mxu0 0
    %3363 = vmatprep.subr.bf16.mxu0 0
    %3364 = vmatpush1.bf16.xpose.msra.mxu0 0
    %3365 = vmatprep.subr.bf16.mxu0 0
    %3366 = vmatpush1.bf16.xpose.msra.mxu0 0
    %3367 = vmatprep.subr.bf16.mxu0 0
    %3368 = vmatpush1.bf16.xpose.msra.mxu0 0
    %3369 = vmatprep.subr.bf16.mxu0 0
    %3370 = vmatpush1.bf16.xpose.msra.mxu0 0
    %3371 = vmatprep.subr.bf16.mxu0 0
    %3372 = vmatpush1.bf16.xpose.msra.mxu0 0
    %3373 = vmatprep.subr.bf16.mxu0 0
    %3374 = vmatpush1.bf16.xpose.msra.mxu0 0
    %3375 = vmatprep.mubr.bf16.mxu0 0
    %3376 = vmatmul.mubr.bf16.gmra.mrb[0].mxu0 %v3338
    %v3377 = vpop.f32.mrb[0].mxu0
    %v3378 = vadd.f32 0.0, %v3377
    %v3379 = vpop.f32.mrb[0].mxu0
    %v3380 = vpop.f32.mrb[0].mxu0
    %v3381 = vpop.f32.mrb[0].mxu0
    %3382 = vdwg.mxu0
    %v3383 = vmul.f32 %v3328, 0.25
    %v3384 = vmul.f32 %v3378, 0.25
    %v3385 = vadd.f32 %v3383, %v967
    %v3386 = vadd.f32 %v3384, %v971
    %v3387 = vsel %vm976, %v3385, -inf
    %3388 = vmax.xlane.f32.xlu0 %v3387
    %v3389 = vpop.xlane.xlu0 %3388
    %v3390 = vsel %vm976, %v3386, -inf
    %3391 = vmax.xlane.f32.xlu0 %v3390
    %v3392 = vpop.xlane.xlu0 %3391
    %v3393 = vsub.f32 %v3385, %v3389
    %v3394 = vsub.f32 %v3386, %v3392
    %v3395 = vmul.f32 %v3393, 1.442695
    %v3396 = vpow.pop %v3395
    %v3397 = vmul.f32 %v3394, 1.442695
    %v3398 = vpow.pop %v3397
    %v3399 = vsel %vm976, %v3396, 0.0
    %3400 = vadd.xlane.f32.xlu0 %v3399
    %v3401 = vpop.xlane.xlu0 %3400
    %v3402 = vsel %vm976, %v3398, 0.0
    %3403 = vadd.xlane.f32.xlu0 %v3402
    %v3404 = vpop.xlane.xlu0 %3403
    %v3405 = vrcp.pop %v3401
    %v3406 = vrcp.pop %v3404
    %v3407 = vmul.f32 %v3396, %v3405
    %v3408 = vmul.f32 %v3398, %v3406
    %v3409 = vpack.c.bf16 %v3407, %v3407
    %v3410 = vpack.c.bf16 %v3408, %v3408
    %3411 = vrot.lane.b32.xlu0 %v2900, 96
    %v3412 = vpop.permute.xlu0 %3411
    %v3414 = vsel %vm976, %v3409, 0
    %v3417 = vsel %vm1006, %v3412, 0
    %3419 = vmatprep.subr.bf16.mxu0 0
    %3420 = vmatpush1.bf16.msra.mxu0 %v3417
    %3421 = vmatprep.subr.bf16.mxu0 0
    %3422 = vmatpush1.bf16.msra.mxu0 0
    %3423 = vmatprep.subr.bf16.mxu0 0
    %3424 = vmatpush1.bf16.msra.mxu0 0
    %3425 = vmatprep.subr.bf16.mxu0 0
    %3426 = vmatpush1.bf16.msra.mxu0 0
    %3427 = vmatprep.subr.bf16.mxu0 0
    %3428 = vmatpush1.bf16.msra.mxu0 0
    %3429 = vmatprep.subr.bf16.mxu0 0
    %3430 = vmatpush1.bf16.msra.mxu0 0
    %3431 = vmatprep.subr.bf16.mxu0 0
    %3432 = vmatpush1.bf16.msra.mxu0 0
    %3433 = vmatprep.subr.bf16.mxu0 0
    %3434 = vmatpush1.bf16.msra.mxu0 0
    %3435 = vmatprep.subr.bf16.mxu0 0
    %3436 = vmatpush1.bf16.msra.mxu0 0
    %3437 = vmatprep.subr.bf16.mxu0 0
    %3438 = vmatpush1.bf16.msra.mxu0 0
    %3439 = vmatprep.subr.bf16.mxu0 0
    %3440 = vmatpush1.bf16.msra.mxu0 0
    %3441 = vmatprep.subr.bf16.mxu0 0
    %3442 = vmatpush1.bf16.msra.mxu0 0
    %3443 = vmatprep.subr.bf16.mxu0 0
    %3444 = vmatpush1.bf16.msra.mxu0 0
    %3445 = vmatprep.subr.bf16.mxu0 0
    %3446 = vmatpush1.bf16.msra.mxu0 0
    %3447 = vmatprep.subr.bf16.mxu0 0
    %3448 = vmatpush1.bf16.msra.mxu0 0
    %3449 = vmatprep.subr.bf16.mxu0 0
    %3450 = vmatpush1.bf16.msra.mxu0 0
    %3451 = vmatprep.mubr.bf16.mxu0 0
    %3452 = vmatmul.mubr.bf16.gmra.mrb[0].mxu0 %v3414
    %v3453 = vpop.f32.mrb[0].mxu0
    %v3454 = vadd.f32 0.0, %v3453
    %v3455 = vpop.f32.mrb[0].mxu0
    %v3456 = vpop.f32.mrb[0].mxu0
    %v3457 = vpop.f32.mrb[0].mxu0
    %3458 = vdwg.mxu0
    %3459 = vrot.lane.b32.xlu0 %v2901, 96
    %v3460 = vpop.permute.xlu0 %3459
    %v3462 = vsel %vm976, %v3410, 0
    %v3465 = vsel %vm1006, %v3460, 0
    %3467 = vmatprep.subr.bf16.mxu0 0
    %3468 = vmatpush1.bf16.msra.mxu0 %v3465
    %3469 = vmatprep.subr.bf16.mxu0 0
    %3470 = vmatpush1.bf16.msra.mxu0 0
    %3471 = vmatprep.subr.bf16.mxu0 0
    %3472 = vmatpush1.bf16.msra.mxu0 0
    %3473 = vmatprep.subr.bf16.mxu0 0
    %3474 = vmatpush1.bf16.msra.mxu0 0
    %3475 = vmatprep.subr.bf16.mxu0 0
    %3476 = vmatpush1.bf16.msra.mxu0 0
    %3477 = vmatprep.subr.bf16.mxu0 0
    %3478 = vmatpush1.bf16.msra.mxu0 0
    %3479 = vmatprep.subr.bf16.mxu0 0
    %3480 = vmatpush1.bf16.msra.mxu0 0
    %3481 = vmatprep.subr.bf16.mxu0 0
    %3482 = vmatpush1.bf16.msra.mxu0 0
    %3483 = vmatprep.subr.bf16.mxu0 0
    %3484 = vmatpush1.bf16.msra.mxu0 0
    %3485 = vmatprep.subr.bf16.mxu0 0
    %3486 = vmatpush1.bf16.msra.mxu0 0
    %3487 = vmatprep.subr.bf16.mxu0 0
    %3488 = vmatpush1.bf16.msra.mxu0 0
    %3489 = vmatprep.subr.bf16.mxu0 0
    %3490 = vmatpush1.bf16.msra.mxu0 0
    %3491 = vmatprep.subr.bf16.mxu0 0
    %3492 = vmatpush1.bf16.msra.mxu0 0
    %3493 = vmatprep.subr.bf16.mxu0 0
    %3494 = vmatpush1.bf16.msra.mxu0 0
    %3495 = vmatprep.subr.bf16.mxu0 0
    %3496 = vmatpush1.bf16.msra.mxu0 0
    %3497 = vmatprep.subr.bf16.mxu0 0
    %3498 = vmatpush1.bf16.msra.mxu0 0
    %3499 = vmatprep.mubr.bf16.mxu0 0
    %3500 = vmatmul.mubr.bf16.gmra.mrb[0].mxu0 %v3462
    %v3501 = vpop.f32.mrb[0].mxu0
    %v3502 = vadd.f32 0.0, %v3501
    %v3503 = vpop.f32.mrb[0].mxu0
    %v3504 = vpop.f32.mrb[0].mxu0
    %v3505 = vpop.f32.mrb[0].mxu0
    %3506 = vdwg.mxu0
    %v3507 = vpack.c.bf16 %v3454, %v3454
    %v3508 = vpack.c.bf16 %v3502, %v3502
    %3509 = vrot.lane.b32.xlu0 %v2776, 80
    %v3510 = vpop.permute.xlu0 %3509
    %3511 = vrot.lane.b32.xlu0 %v2778, 80
    %v3512 = vpop.permute.xlu0 %3511
    %v3514 = vsel %vm846, %v3510, 0
    %v3517 = vsel %vm846, %v3512, 0
    %3519 = vmatprep.subr.bf16.mxu0 0
    %3520 = vmatpush1.bf16.xpose.msra.mxu0 %v3517
    %3521 = vmatprep.subr.bf16.mxu0 0
    %3522 = vmatpush1.bf16.xpose.msra.mxu0 0
    %3523 = vmatprep.subr.bf16.mxu0 0
    %3524 = vmatpush1.bf16.xpose.msra.mxu0 0
    %3525 = vmatprep.subr.bf16.mxu0 0
    %3526 = vmatpush1.bf16.xpose.msra.mxu0 0
    %3527 = vmatprep.subr.bf16.mxu0 0
    %3528 = vmatpush1.bf16.xpose.msra.mxu0 0
    %3529 = vmatprep.subr.bf16.mxu0 0
    %3530 = vmatpush1.bf16.xpose.msra.mxu0 0
    %3531 = vmatprep.subr.bf16.mxu0 0
    %3532 = vmatpush1.bf16.xpose.msra.mxu0 0
    %3533 = vmatprep.subr.bf16.mxu0 0
    %3534 = vmatpush1.bf16.xpose.msra.mxu0 0
    %3535 = vmatprep.subr.bf16.mxu0 0
    %3536 = vmatpush1.bf16.xpose.msra.mxu0 0
    %3537 = vmatprep.subr.bf16.mxu0 0
    %3538 = vmatpush1.bf16.xpose.msra.mxu0 0
    %3539 = vmatprep.subr.bf16.mxu0 0
    %3540 = vmatpush1.bf16.xpose.msra.mxu0 0
    %3541 = vmatprep.subr.bf16.mxu0 0
    %3542 = vmatpush1.bf16.xpose.msra.mxu0 0
    %3543 = vmatprep.subr.bf16.mxu0 0
    %3544 = vmatpush1.bf16.xpose.msra.mxu0 0
    %3545 = vmatprep.subr.bf16.mxu0 0
    %3546 = vmatpush1.bf16.xpose.msra.mxu0 0
    %3547 = vmatprep.subr.bf16.mxu0 0
    %3548 = vmatpush1.bf16.xpose.msra.mxu0 0
    %3549 = vmatprep.subr.bf16.mxu0 0
    %3550 = vmatpush1.bf16.xpose.msra.mxu0 0
    %3551 = vmatprep.mubr.bf16.mxu0 0
    %3552 = vmatmul.mubr.bf16.gmra.mrb[0].mxu0 %v3514
    %v3553 = vpop.f32.mrb[0].mxu0
    %v3554 = vadd.f32 0.0, %v3553
    %v3555 = vpop.f32.mrb[0].mxu0
    %v3556 = vpop.f32.mrb[0].mxu0
    %v3557 = vpop.f32.mrb[0].mxu0
    %3558 = vdwg.mxu0
    %3559 = vrot.lane.b32.xlu0 %v2777, 80
    %v3560 = vpop.permute.xlu0 %3559
    %3561 = vrot.lane.b32.xlu0 %v2779, 80
    %v3562 = vpop.permute.xlu0 %3561
    %v3564 = vsel %vm846, %v3560, 0
    %v3567 = vsel %vm846, %v3562, 0
    %3569 = vmatprep.subr.bf16.mxu0 0
    %3570 = vmatpush1.bf16.xpose.msra.mxu0 %v3567
    %3571 = vmatprep.subr.bf16.mxu0 0
    %3572 = vmatpush1.bf16.xpose.msra.mxu0 0
    %3573 = vmatprep.subr.bf16.mxu0 0
    %3574 = vmatpush1.bf16.xpose.msra.mxu0 0
    %3575 = vmatprep.subr.bf16.mxu0 0
    %3576 = vmatpush1.bf16.xpose.msra.mxu0 0
    %3577 = vmatprep.subr.bf16.mxu0 0
    %3578 = vmatpush1.bf16.xpose.msra.mxu0 0
    %3579 = vmatprep.subr.bf16.mxu0 0
    %3580 = vmatpush1.bf16.xpose.msra.mxu0 0
    %3581 = vmatprep.subr.bf16.mxu0 0
    %3582 = vmatpush1.bf16.xpose.msra.mxu0 0
    %3583 = vmatprep.subr.bf16.mxu0 0
    %3584 = vmatpush1.bf16.xpose.msra.mxu0 0
    %3585 = vmatprep.subr.bf16.mxu0 0
    %3586 = vmatpush1.bf16.xpose.msra.mxu0 0
    %3587 = vmatprep.subr.bf16.mxu0 0
    %3588 = vmatpush1.bf16.xpose.msra.mxu0 0
    %3589 = vmatprep.subr.bf16.mxu0 0
    %3590 = vmatpush1.bf16.xpose.msra.mxu0 0
    %3591 = vmatprep.subr.bf16.mxu0 0
    %3592 = vmatpush1.bf16.xpose.msra.mxu0 0
    %3593 = vmatprep.subr.bf16.mxu0 0
    %3594 = vmatpush1.bf16.xpose.msra.mxu0 0
    %3595 = vmatprep.subr.bf16.mxu0 0
    %3596 = vmatpush1.bf16.xpose.msra.mxu0 0
    %3597 = vmatprep.subr.bf16.mxu0 0
    %3598 = vmatpush1.bf16.xpose.msra.mxu0 0
    %3599 = vmatprep.subr.bf16.mxu0 0
    %3600 = vmatpush1.bf16.xpose.msra.mxu0 0
    %3601 = vmatprep.mubr.bf16.mxu0 0
    %3602 = vmatmul.mubr.bf16.gmra.mrb[0].mxu0 %v3564
    %v3603 = vpop.f32.mrb[0].mxu0
    %v3604 = vadd.f32 0.0, %v3603
    %v3605 = vpop.f32.mrb[0].mxu0
    %v3606 = vpop.f32.mrb[0].mxu0
    %v3607 = vpop.f32.mrb[0].mxu0
    %3608 = vdwg.mxu0
    %v3609 = vmul.f32 %v3554, 0.25
    %v3610 = vmul.f32 %v3604, 0.25
    %v3611 = vadd.f32 %v3609, %v967
    %v3612 = vadd.f32 %v3610, %v971
    %v3613 = vsel %vm976, %v3611, -inf
    %3614 = vmax.xlane.f32.xlu0 %v3613
    %v3615 = vpop.xlane.xlu0 %3614
    %v3616 = vsel %vm976, %v3612, -inf
    %3617 = vmax.xlane.f32.xlu0 %v3616
    %v3618 = vpop.xlane.xlu0 %3617
    %v3619 = vsub.f32 %v3611, %v3615
    %v3620 = vsub.f32 %v3612, %v3618
    %v3621 = vmul.f32 %v3619, 1.442695
    %v3622 = vpow.pop %v3621
    %v3623 = vmul.f32 %v3620, 1.442695
    %v3624 = vpow.pop %v3623
    %v3625 = vsel %vm976, %v3622, 0.0
    %3626 = vadd.xlane.f32.xlu0 %v3625
    %v3627 = vpop.xlane.xlu0 %3626
    %v3628 = vsel %vm976, %v3624, 0.0
    %3629 = vadd.xlane.f32.xlu0 %v3628
    %v3630 = vpop.xlane.xlu0 %3629
    %v3631 = vrcp.pop %v3627
    %v3632 = vrcp.pop %v3630
    %v3633 = vmul.f32 %v3622, %v3631
    %v3634 = vmul.f32 %v3624, %v3632
    %v3635 = vpack.c.bf16 %v3633, %v3633
    %v3636 = vpack.c.bf16 %v3634, %v3634
    %3637 = vrot.lane.b32.xlu0 %v2900, 80
    %v3638 = vpop.permute.xlu0 %3637
    %v3640 = vsel %vm976, %v3635, 0
    %v3643 = vsel %vm1006, %v3638, 0
    %3645 = vmatprep.subr.bf16.mxu0 0
    %3646 = vmatpush1.bf16.msra.mxu0 %v3643
    %3647 = vmatprep.subr.bf16.mxu0 0
    %3648 = vmatpush1.bf16.msra.mxu0 0
    %3649 = vmatprep.subr.bf16.mxu0 0
    %3650 = vmatpush1.bf16.msra.mxu0 0
    %3651 = vmatprep.subr.bf16.mxu0 0
    %3652 = vmatpush1.bf16.msra.mxu0 0
    %3653 = vmatprep.subr.bf16.mxu0 0
    %3654 = vmatpush1.bf16.msra.mxu0 0
    %3655 = vmatprep.subr.bf16.mxu0 0
    %3656 = vmatpush1.bf16.msra.mxu0 0
    %3657 = vmatprep.subr.bf16.mxu0 0
    %3658 = vmatpush1.bf16.msra.mxu0 0
    %3659 = vmatprep.subr.bf16.mxu0 0
    %3660 = vmatpush1.bf16.msra.mxu0 0
    %3661 = vmatprep.subr.bf16.mxu0 0
    %3662 = vmatpush1.bf16.msra.mxu0 0
    %3663 = vmatprep.subr.bf16.mxu0 0
    %3664 = vmatpush1.bf16.msra.mxu0 0
    %3665 = vmatprep.subr.bf16.mxu0 0
    %3666 = vmatpush1.bf16.msra.mxu0 0
    %3667 = vmatprep.subr.bf16.mxu0 0
    %3668 = vmatpush1.bf16.msra.mxu0 0
    %3669 = vmatprep.subr.bf16.mxu0 0
    %3670 = vmatpush1.bf16.msra.mxu0 0
    %3671 = vmatprep.subr.bf16.mxu0 0
    %3672 = vmatpush1.bf16.msra.mxu0 0
    %3673 = vmatprep.subr.bf16.mxu0 0
    %3674 = vmatpush1.bf16.msra.mxu0 0
    %3675 = vmatprep.subr.bf16.mxu0 0
    %3676 = vmatpush1.bf16.msra.mxu0 0
    %3677 = vmatprep.mubr.bf16.mxu0 0
    %3678 = vmatmul.mubr.bf16.gmra.mrb[0].mxu0 %v3640
    %v3679 = vpop.f32.mrb[0].mxu0
    %v3680 = vadd.f32 0.0, %v3679
    %v3681 = vpop.f32.mrb[0].mxu0
    %v3682 = vpop.f32.mrb[0].mxu0
    %v3683 = vpop.f32.mrb[0].mxu0
    %3684 = vdwg.mxu0
    %3685 = vrot.lane.b32.xlu0 %v2901, 80
    %v3686 = vpop.permute.xlu0 %3685
    %v3688 = vsel %vm976, %v3636, 0
    %v3691 = vsel %vm1006, %v3686, 0
    %3693 = vmatprep.subr.bf16.mxu0 0
    %3694 = vmatpush1.bf16.msra.mxu0 %v3691
    %3695 = vmatprep.subr.bf16.mxu0 0
    %3696 = vmatpush1.bf16.msra.mxu0 0
    %3697 = vmatprep.subr.bf16.mxu0 0
    %3698 = vmatpush1.bf16.msra.mxu0 0
    %3699 = vmatprep.subr.bf16.mxu0 0
    %3700 = vmatpush1.bf16.msra.mxu0 0
    %3701 = vmatprep.subr.bf16.mxu0 0
    %3702 = vmatpush1.bf16.msra.mxu0 0
    %3703 = vmatprep.subr.bf16.mxu0 0
    %3704 = vmatpush1.bf16.msra.mxu0 0
    %3705 = vmatprep.subr.bf16.mxu0 0
    %3706 = vmatpush1.bf16.msra.mxu0 0
    %3707 = vmatprep.subr.bf16.mxu0 0
    %3708 = vmatpush1.bf16.msra.mxu0 0
    %3709 = vmatprep.subr.bf16.mxu0 0
    %3710 = vmatpush1.bf16.msra.mxu0 0
    %3711 = vmatprep.subr.bf16.mxu0 0
    %3712 = vmatpush1.bf16.msra.mxu0 0
    %3713 = vmatprep.subr.bf16.mxu0 0
    %3714 = vmatpush1.bf16.msra.mxu0 0
    %3715 = vmatprep.subr.bf16.mxu0 0
    %3716 = vmatpush1.bf16.msra.mxu0 0
    %3717 = vmatprep.subr.bf16.mxu0 0
    %3718 = vmatpush1.bf16.msra.mxu0 0
    %3719 = vmatprep.subr.bf16.mxu0 0
    %3720 = vmatpush1.bf16.msra.mxu0 0
    %3721 = vmatprep.subr.bf16.mxu0 0
    %3722 = vmatpush1.bf16.msra.mxu0 0
    %3723 = vmatprep.subr.bf16.mxu0 0
    %3724 = vmatpush1.bf16.msra.mxu0 0
    %3725 = vmatprep.mubr.bf16.mxu0 0
    %3726 = vmatmul.mubr.bf16.gmra.mrb[0].mxu0 %v3688
    %v3727 = vpop.f32.mrb[0].mxu0
    %v3728 = vadd.f32 0.0, %v3727
    %v3729 = vpop.f32.mrb[0].mxu0
    %v3730 = vpop.f32.mrb[0].mxu0
    %v3731 = vpop.f32.mrb[0].mxu0
    %3732 = vdwg.mxu0
    %v3733 = vpack.c.bf16 %v3680, %v3680
    %v3734 = vpack.c.bf16 %v3728, %v3728
    %v3737 = vunpack.c.l.b16 %v3733
    %v3738 = vunpack.c.l.b16 %v3734
    %v3739 = vpack.c.b16 %v3738, %v3737
    %v3742 = vunpack.c.l.b16 %v2774
    %v3743 = vunpack.c.l.b16 %v2775
    %v3744 = vpack.c.b16 %v3743, %v3742
    %v3747 = vsel %vm846, %v3739, 0
    %3749 = vmatprep.subr.bf16.mxu0 0
    %3750 = vmatpush1.bf16.msra.mxu0 %v3744
    %3751 = vmatprep.subr.bf16.mxu0 0
    %3752 = vmatpush1.bf16.msra.mxu0 0
    %3753 = vmatprep.subr.bf16.mxu0 0
    %3754 = vmatpush1.bf16.msra.mxu0 0
    %3755 = vmatprep.subr.bf16.mxu0 0
    %3756 = vmatpush1.bf16.msra.mxu0 0
    %3757 = vmatprep.subr.bf16.mxu0 0
    %3758 = vmatpush1.bf16.msra.mxu0 0
    %3759 = vmatprep.subr.bf16.mxu0 0
    %3760 = vmatpush1.bf16.msra.mxu0 0
    %3761 = vmatprep.subr.bf16.mxu0 0
    %3762 = vmatpush1.bf16.msra.mxu0 0
    %3763 = vmatprep.subr.bf16.mxu0 0
    %3764 = vmatpush1.bf16.msra.mxu0 0
    %3765 = vmatprep.subr.bf16.mxu0 0
    %3766 = vmatpush1.bf16.msra.mxu0 0
    %3767 = vmatprep.subr.bf16.mxu0 0
    %3768 = vmatpush1.bf16.msra.mxu0 0
    %3769 = vmatprep.subr.bf16.mxu0 0
    %3770 = vmatpush1.bf16.msra.mxu0 0
    %3771 = vmatprep.subr.bf16.mxu0 0
    %3772 = vmatpush1.bf16.msra.mxu0 0
    %3773 = vmatprep.subr.bf16.mxu0 0
    %3774 = vmatpush1.bf16.msra.mxu0 0
    %3775 = vmatprep.subr.bf16.mxu0 0
    %3776 = vmatpush1.bf16.msra.mxu0 0
    %3777 = vmatprep.subr.bf16.mxu0 0
    %3778 = vmatpush1.bf16.msra.mxu0 0
    %3779 = vmatprep.subr.bf16.mxu0 0
    %3780 = vmatpush1.bf16.msra.mxu0 0
    %3781 = vmatprep.mubr.bf16.mxu0 0
    %3782 = vmatmul.mubr.bf16.gmra.mrb[0].mxu0 %v3747
    %v3783 = vpop.f32.mrb[0].mxu0
    %v3784 = vadd.f32 0.0, %v3783
    %v3785 = vpop.f32.mrb[0].mxu0
    %v3786 = vpop.f32.mrb[0].mxu0
    %v3787 = vadd.f32 0.0, %v3786
    %v3788 = vpop.f32.mrb[0].mxu0
    %3789 = vdwg.mxu0
    %v3792 = vunpack.c.l.b16 %v2994
    %v3793 = vunpack.c.l.b16 %v2995
    %v3794 = vpack.c.b16 %v3793, %v3792
    %v3797 = vunpack.c.l.b16 %v2768
    %v3798 = vunpack.c.l.b16 %v2769
    %v3799 = vpack.c.b16 %v3798, %v3797
    %v3802 = vsel %vm846, %v3794, 0
    %3804 = vmatprep.subr.bf16.mxu0 0
    %3805 = vmatpush1.bf16.msra.mxu0 %v3799
    %3806 = vmatprep.subr.bf16.mxu0 0
    %3807 = vmatpush1.bf16.msra.mxu0 0
    %3808 = vmatprep.subr.bf16.mxu0 0
    %3809 = vmatpush1.bf16.msra.mxu0 0
    %3810 = vmatprep.subr.bf16.mxu0 0
    %3811 = vmatpush1.bf16.msra.mxu0 0
    %3812 = vmatprep.subr.bf16.mxu0 0
    %3813 = vmatpush1.bf16.msra.mxu0 0
    %3814 = vmatprep.subr.bf16.mxu0 0
    %3815 = vmatpush1.bf16.msra.mxu0 0
    %3816 = vmatprep.subr.bf16.mxu0 0
    %3817 = vmatpush1.bf16.msra.mxu0 0
    %3818 = vmatprep.subr.bf16.mxu0 0
    %3819 = vmatpush1.bf16.msra.mxu0 0
    %3820 = vmatprep.subr.bf16.mxu0 0
    %3821 = vmatpush1.bf16.msra.mxu0 0
    %3822 = vmatprep.subr.bf16.mxu0 0
    %3823 = vmatpush1.bf16.msra.mxu0 0
    %3824 = vmatprep.subr.bf16.mxu0 0
    %3825 = vmatpush1.bf16.msra.mxu0 0
    %3826 = vmatprep.subr.bf16.mxu0 0
    %3827 = vmatpush1.bf16.msra.mxu0 0
    %3828 = vmatprep.subr.bf16.mxu0 0
    %3829 = vmatpush1.bf16.msra.mxu0 0
    %3830 = vmatprep.subr.bf16.mxu0 0
    %3831 = vmatpush1.bf16.msra.mxu0 0
    %3832 = vmatprep.subr.bf16.mxu0 0
    %3833 = vmatpush1.bf16.msra.mxu0 0
    %3834 = vmatprep.subr.bf16.mxu0 0
    %3835 = vmatpush1.bf16.msra.mxu0 0
    %3836 = vmatprep.mubr.bf16.mxu0 0
    %3837 = vmatmul.mubr.bf16.gmra.mrb[0].mxu0 %v3802
    %v3838 = vpop.f32.mrb[0].mxu0
    %v3839 = vadd.f32 %v3277, %v3838
    %v3840 = vpop.f32.mrb[0].mxu0
    %v3841 = vpop.f32.mrb[0].mxu0
    %v3842 = vadd.f32 %v3280, %v3841
    %v3843 = vpop.f32.mrb[0].mxu0
    %3844 = vdwg.mxu0
    %v3847 = vunpack.c.l.b16 %v3507
    %v3848 = vunpack.c.l.b16 %v3508
    %v3849 = vpack.c.b16 %v3848, %v3847
    %v3852 = vunpack.c.l.b16 %v2772
    %v3853 = vunpack.c.l.b16 %v2773
    %v3854 = vpack.c.b16 %v3853, %v3852
    %v3857 = vsel %vm846, %v3849, 0
    %3859 = vmatprep.subr.bf16.mxu0 0
    %3860 = vmatpush1.bf16.msra.mxu0 %v3854
    %3861 = vmatprep.subr.bf16.mxu0 0
    %3862 = vmatpush1.bf16.msra.mxu0 0
    %3863 = vmatprep.subr.bf16.mxu0 0
    %3864 = vmatpush1.bf16.msra.mxu0 0
    %3865 = vmatprep.subr.bf16.mxu0 0
    %3866 = vmatpush1.bf16.msra.mxu0 0
    %3867 = vmatprep.subr.bf16.mxu0 0
    %3868 = vmatpush1.bf16.msra.mxu0 0
    %3869 = vmatprep.subr.bf16.mxu0 0
    %3870 = vmatpush1.bf16.msra.mxu0 0
    %3871 = vmatprep.subr.bf16.mxu0 0
    %3872 = vmatpush1.bf16.msra.mxu0 0
    %3873 = vmatprep.subr.bf16.mxu0 0
    %3874 = vmatpush1.bf16.msra.mxu0 0
    %3875 = vmatprep.subr.bf16.mxu0 0
    %3876 = vmatpush1.bf16.msra.mxu0 0
    %3877 = vmatprep.subr.bf16.mxu0 0
    %3878 = vmatpush1.bf16.msra.mxu0 0
    %3879 = vmatprep.subr.bf16.mxu0 0
    %3880 = vmatpush1.bf16.msra.mxu0 0
    %3881 = vmatprep.subr.bf16.mxu0 0
    %3882 = vmatpush1.bf16.msra.mxu0 0
    %3883 = vmatprep.subr.bf16.mxu0 0
    %3884 = vmatpush1.bf16.msra.mxu0 0
    %3885 = vmatprep.subr.bf16.mxu0 0
    %3886 = vmatpush1.bf16.msra.mxu0 0
    %3887 = vmatprep.subr.bf16.mxu0 0
    %3888 = vmatpush1.bf16.msra.mxu0 0
    %3889 = vmatprep.subr.bf16.mxu0 0
    %3890 = vmatpush1.bf16.msra.mxu0 0
    %3891 = vmatprep.mubr.bf16.mxu0 0
    %3892 = vmatmul.mubr.bf16.gmra.mrb[0].mxu0 %v3857
    %v3893 = vpop.f32.mrb[0].mxu0
    %v3894 = vadd.f32 %v3784, %v3893
    %v3895 = vpop.f32.mrb[0].mxu0
    %v3896 = vpop.f32.mrb[0].mxu0
    %v3897 = vadd.f32 %v3787, %v3896
    %v3898 = vpop.f32.mrb[0].mxu0
    %3899 = vdwg.mxu0
    %v3900 = vadd.f32 %v3839, %v3894
    %v3901 = vadd.f32 %v3842, %v3897
    %s3902 = scalar_lea.vmem [#allocation15], 1
    %v3903 = vld [vmem:[%s3902] sm:$0x1]
    %v3905 = vlaneseq
    %v3906 = vshrl.u32 %v3905, 7
    %v3907 = vsub.s32 0, %v3906
    %v3908 = vrot.slane %v3903, %v3907
    %v3910 = vadd.f32 %v3900, %v3908
    %v3911 = vadd.f32 %v3901, %v3908
    %v3912 = vadd.f32 %v2494, %v3910
    %v3913 = vadd.f32 %v2495, %v3911
    %s3914 = scalar_lea.vmem [#allocation17], 1
    %v3915 = vld [vmem:[%s3914] sm:$0x1]
    %s3916 = scalar_lea.vmem [#allocation18], 1
    %v3917 = vld [vmem:[%s3916] sm:$0x1]
    %3918 = vadd.xlane.f32.xlu0 %v3912
    %v3919 = vpop.xlane.xlu0 %3918
    %3920 = vadd.xlane.f32.xlu0 %v3913
    %v3921 = vpop.xlane.xlu0 %3920
    %v3922 = vmul.f32 %v3919, 0.015625
    %v3923 = vmul.f32 %v3921, 0.015625
    %v3924 = vmul.f32 %v3912, %v3912
    %v3925 = vmul.f32 %v3913, %v3913
    %3926 = vadd.xlane.f32.xlu0 %v3924
    %v3927 = vpop.xlane.xlu0 %3926
    %3928 = vadd.xlane.f32.xlu0 %v3925
    %v3929 = vpop.xlane.xlu0 %3928
    %v3930 = vmul.f32 %v3927, 0.015625
    %v3931 = vmul.f32 %v3929, 0.015625
    %v3932 = vmul.f32 %v3922, %v3922
    %v3933 = vmul.f32 %v3923, %v3923
    %v3934 = vsub.f32 %v3930, %v3932
    %v3935 = vsub.f32 %v3931, %v3933
    %v3936 = vmax.f32 %v3934, 0.0
    %v3937 = vmax.f32 %v3935, 0.0
    %v3938 = vsub.f32 %v3912, %v3922
    %v3939 = vsub.f32 %v3913, %v3923
    %v3940 = vadd.f32 %v3936, 1e-12
    %v3941 = vadd.f32 %v3937, 1e-12
    %v3942 = vrsqrt.pop %v3940
    %v3943 = vrsqrt.pop %v3941
    %v3944 = vmul.f32 %v3938, %v3942
    %v3945 = vmul.f32 %v3939, %v3943
    %v3947 = vlaneseq
    %v3948 = vshrl.u32 %v3947, 7
    %v3949 = vsub.s32 0, %v3948
    %v3950 = vrot.slane %v3915, %v3949
    %v3952 = vmul.f32 %v3944, %v3950
    %v3953 = vmul.f32 %v3945, %v3950
    %v3955 = vlaneseq
    %v3956 = vshrl.u32 %v3955, 7
    %v3957 = vsub.s32 0, %v3956
    %v3958 = vrot.slane %v3917, %v3957
    %v3960 = vadd.f32 %v3952, %v3958
    %v3961 = vadd.f32 %v3953, %v3958
    %v3962 = vpack.c.bf16 %v3960, %v3960
    %v3963 = vpack.c.bf16 %v3961, %v3961
    %s3964 = scalar_lea.vmem [#allocation20], 128
    %v3965 = vld [vmem:[%s3964] sm:$0xff]
    %v3966 = vld [vmem:[%s3964 + $0x8] sm:$0xff]
    %v3967 = vld [vmem:[%s3964 + $0x10] sm:$0xff]
    %v3968 = vld [vmem:[%s3964 + $0x18] sm:$0xff]
    %v3969 = vld [vmem:[%s3964 + $0x20] sm:$0xff]
    %v3970 = vld [vmem:[%s3964 + $0x28] sm:$0xff]
    %v3971 = vld [vmem:[%s3964 + $0x30] sm:$0xff]
    %v3972 = vld [vmem:[%s3964 + $0x38] sm:$0xff]
    %v3973 = vld [vmem:[%s3964 + $0x40] sm:$0xff]
    %v3974 = vld [vmem:[%s3964 + $0x48] sm:$0xff]
    %v3975 = vld [vmem:[%s3964 + $0x50] sm:$0xff]
    %v3976 = vld [vmem:[%s3964 + $0x58] sm:$0xff]
    %v3977 = vld [vmem:[%s3964 + $0x60] sm:$0xff]
    %v3978 = vld [vmem:[%s3964 + $0x68] sm:$0xff]
    %v3979 = vld [vmem:[%s3964 + $0x70] sm:$0xff]
    %v3980 = vld [vmem:[%s3964 + $0x78] sm:$0xff]
    %s3981 = scalar_lea.vmem %s31, 2
    %v3982 = vld [vmem:[%s3981] sm:$0x3]
    %v3984 = vlaneseq
    %v3985 = vshrl.u32 %v3984, 7
    %v3986 = vsub.s32 0, %v3985
    %v3987 = vrot.slane %v3982, %v3986
    %v3988 = vlaneseq
    %v3989 = vshrl.u32 %v3988, 7
    %v3990 = vsub.s32 1, %v3989
    %v3991 = vrot.slane %v3982, %v3990
    %v3996 = vunpack.c.l.b16 %v3962
    %v3997 = vunpack.c.l.b16 %v3963
    %v3998 = vpack.c.b16 %v3997, %v3996
    %v4016 = vunpack.c.l.b16 %v3965
    %v4017 = vunpack.c.h.b16 %v3965
    %v4018 = vunpack.c.l.b16 %v3966
    %v4019 = vunpack.c.h.b16 %v3966
    %v4020 = vunpack.c.l.b16 %v3967
    %v4021 = vunpack.c.h.b16 %v3967
    %v4022 = vunpack.c.l.b16 %v3968
    %v4023 = vunpack.c.h.b16 %v3968
    %v4024 = vunpack.c.l.b16 %v3969
    %v4025 = vunpack.c.h.b16 %v3969
    %v4026 = vunpack.c.l.b16 %v3970
    %v4027 = vunpack.c.h.b16 %v3970
    %v4028 = vunpack.c.l.b16 %v3971
    %v4029 = vunpack.c.h.b16 %v3971
    %v4030 = vunpack.c.l.b16 %v3972
    %v4031 = vunpack.c.h.b16 %v3972
    %v4032 = vunpack.c.l.b16 %v3973
    %v4033 = vunpack.c.h.b16 %v3973
    %v4034 = vunpack.c.l.b16 %v3974
    %v4035 = vunpack.c.h.b16 %v3974
    %v4036 = vunpack.c.l.b16 %v3975
    %v4037 = vunpack.c.h.b16 %v3975
    %v4038 = vunpack.c.l.b16 %v3976
    %v4039 = vunpack.c.h.b16 %v3976
    %v4040 = vunpack.c.l.b16 %v3977
    %v4041 = vunpack.c.h.b16 %v3977
    %v4042 = vunpack.c.l.b16 %v3978
    %v4043 = vunpack.c.h.b16 %v3978
    %v4044 = vunpack.c.l.b16 %v3979
    %v4045 = vunpack.c.h.b16 %v3979
    %v4046 = vunpack.c.l.b16 %v3980
    %v4047 = vunpack.c.h.b16 %v3980
    %v4048 = vpack.c.b16 %v4018, %v4016
    %v4049 = vpack.c.b16 %v4019, %v4017
    %v4050 = vpack.c.b16 %v4022, %v4020
    %v4051 = vpack.c.b16 %v4023, %v4021
    %v4052 = vpack.c.b16 %v4026, %v4024
    %v4053 = vpack.c.b16 %v4027, %v4025
    %v4054 = vpack.c.b16 %v4030, %v4028
    %v4055 = vpack.c.b16 %v4031, %v4029
    %v4056 = vpack.c.b16 %v4034, %v4032
    %v4057 = vpack.c.b16 %v4035, %v4033
    %v4058 = vpack.c.b16 %v4038, %v4036
    %v4059 = vpack.c.b16 %v4039, %v4037
    %v4060 = vpack.c.b16 %v4042, %v4040
    %v4061 = vpack.c.b16 %v4043, %v4041
    %v4062 = vpack.c.b16 %v4046, %v4044
    %v4063 = vpack.c.b16 %v4047, %v4045
    %4080 = vmatprep.subr.bf16.mxu0 %v4049
    %4081 = vmatpush1.bf16.msra.mxu0 %v4048
    %4082 = vmatprep.subr.bf16.mxu0 %v4051
    %4083 = vmatpush1.bf16.msra.mxu0 %v4050
    %4084 = vmatprep.subr.bf16.mxu0 %v4053
    %4085 = vmatpush1.bf16.msra.mxu0 %v4052
    %4086 = vmatprep.subr.bf16.mxu0 %v4055
    %4087 = vmatpush1.bf16.msra.mxu0 %v4054
    %4088 = vmatprep.subr.bf16.mxu0 %v4057
    %4089 = vmatpush1.bf16.msra.mxu0 %v4056
    %4090 = vmatprep.subr.bf16.mxu0 %v4059
    %4091 = vmatpush1.bf16.msra.mxu0 %v4058
    %4092 = vmatprep.subr.bf16.mxu0 %v4061
    %4093 = vmatpush1.bf16.msra.mxu0 %v4060
    %4094 = vmatprep.subr.bf16.mxu0 %v4063
    %4095 = vmatpush1.bf16.msra.mxu0 %v4062
    %4096 = vmatprep.subr.bf16.mxu0 0
    %4097 = vmatpush1.bf16.msra.mxu0 0
    %4098 = vmatprep.subr.bf16.mxu0 0
    %4099 = vmatpush1.bf16.msra.mxu0 0
    %4100 = vmatprep.subr.bf16.mxu0 0
    %4101 = vmatpush1.bf16.msra.mxu0 0
    %4102 = vmatprep.subr.bf16.mxu0 0
    %4103 = vmatpush1.bf16.msra.mxu0 0
    %4104 = vmatprep.subr.bf16.mxu0 0
    %4105 = vmatpush1.bf16.msra.mxu0 0
    %4106 = vmatprep.subr.bf16.mxu0 0
    %4107 = vmatpush1.bf16.msra.mxu0 0
    %4108 = vmatprep.subr.bf16.mxu0 0
    %4109 = vmatpush1.bf16.msra.mxu0 0
    %4110 = vmatprep.subr.bf16.mxu0 0
    %4111 = vmatpush1.bf16.msra.mxu0 0
    %4112 = vmatprep.mubr.bf16.mxu0 0
    %4113 = vmatmul.mubr.bf16.gmra.mrb[0].mxu0 %v3998
    %v4114 = vpop.f32.mrb[0].mxu0
    %v4115 = vadd.f32 %v3987, %v4114
    %v4116 = vpop.f32.mrb[0].mxu0
    %v4117 = vadd.f32 %v3991, %v4116
    %v4118 = vpop.f32.mrb[0].mxu0
    %v4119 = vadd.f32 %v3987, %v4118
    %v4120 = vpop.f32.mrb[0].mxu0
    %v4121 = vadd.f32 %v3991, %v4120
    %4122 = vdwg.mxu0
    %v4123 = vmul.f32 %v4115, %v4115
    %v4124 = vmul.f32 %v4117, %v4117
    %v4125 = vmul.f32 %v4119, %v4119
    %v4126 = vmul.f32 %v4121, %v4121
    %v4127 = vmul.f32 %v4115, %v4123
    %v4128 = vmul.f32 %v4117, %v4124
    %v4129 = vmul.f32 %v4119, %v4125
    %v4130 = vmul.f32 %v4121, %v4126
    %v4131 = vmul.f32 %v4127, 0.044715
    %v4132 = vmul.f32 %v4128, 0.044715
    %v4133 = vmul.f32 %v4129, 0.044715
    %v4134 = vmul.f32 %v4130, 0.044715
    %v4135 = vadd.f32 %v4115, %v4131
    %v4136 = vadd.f32 %v4117, %v4132
    %v4137 = vadd.f32 %v4119, %v4133
    %v4138 = vadd.f32 %v4121, %v4134
    %v4139 = vmul.f32 %v4135, 0.7978846
    %v4140 = vmul.f32 %v4136, 0.7978846
    %v4141 = vmul.f32 %v4137, 0.7978846
    %v4142 = vmul.f32 %v4138, 0.7978846
    %v4143 = vtanh.pop %v4139
    %v4144 = vtanh.pop %v4140
    %v4145 = vtanh.pop %v4141
    %v4146 = vtanh.pop %v4142
    %v4147 = vadd.f32 %v4143, 1.0
    %v4148 = vadd.f32 %v4144, 1.0
    %v4149 = vadd.f32 %v4145, 1.0
    %v4150 = vadd.f32 %v4146, 1.0
    %v4151 = vmul.f32 %v4147, 0.5
    %v4152 = vmul.f32 %v4148, 0.5
    %v4153 = vmul.f32 %v4149, 0.5
    %v4154 = vmul.f32 %v4150, 0.5
    %v4155 = vmul.f32 %v4115, %v4151
    %v4156 = vmul.f32 %v4117, %v4152
    %v4157 = vmul.f32 %v4119, %v4153
    %v4158 = vmul.f32 %v4121, %v4154
    %v4159 = vpack.c.bf16 %v4155, %v4155
    %v4160 = vpack.c.bf16 %v4156, %v4156
    %v4161 = vpack.c.bf16 %v4157, %v4157
    %v4162 = vpack.c.bf16 %v4158, %v4158
    %s4163 = scalar_lea.vmem [#allocation21], 128
    %v4164 = vld [vmem:[%s4163] sm:$0xf]
    %v4165 = vld [vmem:[%s4163 + $0x4] sm:$0xf]
    %v4166 = vld [vmem:[%s4163 + $0x8] sm:$0xf]
    %v4167 = vld [vmem:[%s4163 + $0xc] sm:$0xf]
    %v4168 = vld [vmem:[%s4163 + $0x10] sm:$0xf]
    %v4169 = vld [vmem:[%s4163 + $0x14] sm:$0xf]
    %v4170 = vld [vmem:[%s4163 + $0x18] sm:$0xf]
    %v4171 = vld [vmem:[%s4163 + $0x1c] sm:$0xf]
    %v4172 = vld [vmem:[%s4163 + $0x20] sm:$0xf]
    %v4173 = vld [vmem:[%s4163 + $0x24] sm:$0xf]
    %v4174 = vld [vmem:[%s4163 + $0x28] sm:$0xf]
    %v4175 = vld [vmem:[%s4163 + $0x2c] sm:$0xf]
    %v4176 = vld [vmem:[%s4163 + $0x30] sm:$0xf]
    %v4177 = vld [vmem:[%s4163 + $0x34] sm:$0xf]
    %v4178 = vld [vmem:[%s4163 + $0x38] sm:$0xf]
    %v4179 = vld [vmem:[%s4163 + $0x3c] sm:$0xf]
    %v4180 = vld [vmem:[%s4163 + $0x40] sm:$0xf]
    %v4181 = vld [vmem:[%s4163 + $0x44] sm:$0xf]
    %v4182 = vld [vmem:[%s4163 + $0x48] sm:$0xf]
    %v4183 = vld [vmem:[%s4163 + $0x4c] sm:$0xf]
    %v4184 = vld [vmem:[%s4163 + $0x50] sm:$0xf]
    %v4185 = vld [vmem:[%s4163 + $0x54] sm:$0xf]
    %v4186 = vld [vmem:[%s4163 + $0x58] sm:$0xf]
    %v4187 = vld [vmem:[%s4163 + $0x5c] sm:$0xf]
    %v4188 = vld [vmem:[%s4163 + $0x60] sm:$0xf]
    %v4189 = vld [vmem:[%s4163 + $0x64] sm:$0xf]
    %v4190 = vld [vmem:[%s4163 + $0x68] sm:$0xf]
    %v4191 = vld [vmem:[%s4163 + $0x6c] sm:$0xf]
    %v4192 = vld [vmem:[%s4163 + $0x70] sm:$0xf]
    %v4193 = vld [vmem:[%s4163 + $0x74] sm:$0xf]
    %v4194 = vld [vmem:[%s4163 + $0x78] sm:$0xf]
    %v4195 = vld [vmem:[%s4163 + $0x7c] sm:$0xf]
    %s4196 = scalar_lea.vmem [#allocation23], 1
    %v4197 = vld [vmem:[%s4196] sm:$0x1]
    %v4199 = vlaneseq
    %v4200 = vshrl.u32 %v4199, 7
    %v4201 = vsub.s32 0, %v4200
    %v4202 = vrot.slane %v4197, %v4201
    %v4208 = vunpack.c.l.b16 %v4159
    %v4209 = vunpack.c.l.b16 %v4160
    %v4210 = vunpack.c.l.b16 %v4161
    %v4211 = vunpack.c.l.b16 %v4162
    %v4212 = vpack.c.b16 %v4210, %v4208
    %v4213 = vpack.c.b16 %v4211, %v4209
    %v4248 = vunpack.c.l.b16 %v4164
    %v4249 = vunpack.c.l.b16 %v4165
    %v4250 = vunpack.c.l.b16 %v4166
    %v4251 = vunpack.c.l.b16 %v4167
    %v4252 = vunpack.c.l.b16 %v4168
    %v4253 = vunpack.c.l.b16 %v4169
    %v4254 = vunpack.c.l.b16 %v4170
    %v4255 = vunpack.c.l.b16 %v4171
    %v4256 = vunpack.c.l.b16 %v4172
    %v4257 = vunpack.c.l.b16 %v4173
    %v4258 = vunpack.c.l.b16 %v4174
    %v4259 = vunpack.c.l.b16 %v4175
    %v4260 = vunpack.c.l.b16 %v4176
    %v4261 = vunpack.c.l.b16 %v4177
    %v4262 = vunpack.c.l.b16 %v4178
    %v4263 = vunpack.c.l.b16 %v4179
    %v4264 = vunpack.c.l.b16 %v4180
    %v4265 = vunpack.c.l.b16 %v4181
    %v4266 = vunpack.c.l.b16 %v4182
    %v4267 = vunpack.c.l.b16 %v4183
    %v4268 = vunpack.c.l.b16 %v4184
    %v4269 = vunpack.c.l.b16 %v4185
    %v4270 = vunpack.c.l.b16 %v4186
    %v4271 = vunpack.c.l.b16 %v4187
    %v4272 = vunpack.c.l.b16 %v4188
    %v4273 = vunpack.c.l.b16 %v4189
    %v4274 = vunpack.c.l.b16 %v4190
    %v4275 = vunpack.c.l.b16 %v4191
    %v4276 = vunpack.c.l.b16 %v4192
    %v4277 = vunpack.c.l.b16 %v4193
    %v4278 = vunpack.c.l.b16 %v4194
    %v4279 = vunpack.c.l.b16 %v4195
    %v4280 = vpack.c.b16 %v4249, %v4248
    %v4281 = vpack.c.b16 %v4251, %v4250
    %v4282 = vpack.c.b16 %v4253, %v4252
    %v4283 = vpack.c.b16 %v4255, %v4254
    %v4284 = vpack.c.b16 %v4257, %v4256
    %v4285 = vpack.c.b16 %v4259, %v4258
    %v4286 = vpack.c.b16 %v4261, %v4260
    %v4287 = vpack.c.b16 %v4263, %v4262
    %v4288 = vpack.c.b16 %v4265, %v4264
    %v4289 = vpack.c.b16 %v4267, %v4266
    %v4290 = vpack.c.b16 %v4269, %v4268
    %v4291 = vpack.c.b16 %v4271, %v4270
    %v4292 = vpack.c.b16 %v4273, %v4272
    %v4293 = vpack.c.b16 %v4275, %v4274
    %v4294 = vpack.c.b16 %v4277, %v4276
    %v4295 = vpack.c.b16 %v4279, %v4278
    %4312 = vmatprep.subr.bf16.mxu0 0
    %4313 = vmatpush1.bf16.msra.mxu0 %v4280
    %4314 = vmatprep.subr.bf16.mxu0 0
    %4315 = vmatpush1.bf16.msra.mxu0 %v4281
    %4316 = vmatprep.subr.bf16.mxu0 0
    %4317 = vmatpush1.bf16.msra.mxu0 %v4282
    %4318 = vmatprep.subr.bf16.mxu0 0
    %4319 = vmatpush1.bf16.msra.mxu0 %v4283
    %4320 = vmatprep.subr.bf16.mxu0 0
    %4321 = vmatpush1.bf16.msra.mxu0 %v4284
    %4322 = vmatprep.subr.bf16.mxu0 0
    %4323 = vmatpush1.bf16.msra.mxu0 %v4285
    %4324 = vmatprep.subr.bf16.mxu0 0
    %4325 = vmatpush1.bf16.msra.mxu0 %v4286
    %4326 = vmatprep.subr.bf16.mxu0 0
    %4327 = vmatpush1.bf16.msra.mxu0 %v4287
    %4328 = vmatprep.subr.bf16.mxu0 0
    %4329 = vmatpush1.bf16.msra.mxu0 %v4288
    %4330 = vmatprep.subr.bf16.mxu0 0
    %4331 = vmatpush1.bf16.msra.mxu0 %v4289
    %4332 = vmatprep.subr.bf16.mxu0 0
    %4333 = vmatpush1.bf16.msra.mxu0 %v4290
    %4334 = vmatprep.subr.bf16.mxu0 0
    %4335 = vmatpush1.bf16.msra.mxu0 %v4291
    %4336 = vmatprep.subr.bf16.mxu0 0
    %4337 = vmatpush1.bf16.msra.mxu0 %v4292
    %4338 = vmatprep.subr.bf16.mxu0 0
    %4339 = vmatpush1.bf16.msra.mxu0 %v4293
    %4340 = vmatprep.subr.bf16.mxu0 0
    %4341 = vmatpush1.bf16.msra.mxu0 %v4294
    %4342 = vmatprep.subr.bf16.mxu0 0
    %4343 = vmatpush1.bf16.msra.mxu0 %v4295
    %4344 = vmatprep.mubr.bf16.mxu0 %v4213
    %4345 = vmatmul.mubr.bf16.gmra.mrb[0].mxu0 %v4212
    %v4346 = vpop.f32.mrb[0].mxu0
    %v4347 = vadd.f32 %v4202, %v4346
    %v4348 = vpop.f32.mrb[0].mxu0
    %v4349 = vpop.f32.mrb[0].mxu0
    %v4350 = vadd.f32 %v4202, %v4349
    %v4351 = vpop.f32.mrb[0].mxu0
    %4352 = vdwg.mxu0
    %v4353 = vadd.f32 %v3960, %v4347
    %v4354 = vadd.f32 %v3961, %v4350
    %s4355 = scalar_lea.vmem [#allocation24], 1
    %v4356 = vld [vmem:[%s4355] sm:$0x1]
    %s4357 = scalar_lea.vmem [#allocation26], 1
    %v4358 = vld [vmem:[%s4357] sm:$0x1]
    %4359 = vadd.xlane.f32.xlu0 %v4353
    %v4360 = vpop.xlane.xlu0 %4359
    %4361 = vadd.xlane.f32.xlu0 %v4354
    %v4362 = vpop.xlane.xlu0 %4361
    %v4363 = vmul.f32 %v4360, 0.015625
    %v4364 = vmul.f32 %v4362, 0.015625
    %v4365 = vmul.f32 %v4353, %v4353
    %v4366 = vmul.f32 %v4354, %v4354
    %4367 = vadd.xlane.f32.xlu0 %v4365
    %v4368 = vpop.xlane.xlu0 %4367
    %4369 = vadd.xlane.f32.xlu0 %v4366
    %v4370 = vpop.xlane.xlu0 %4369
    %v4371 = vmul.f32 %v4368, 0.015625
    %v4372 = vmul.f32 %v4370, 0.015625
    %v4373 = vmul.f32 %v4363, %v4363
    %v4374 = vmul.f32 %v4364, %v4364
    %v4375 = vsub.f32 %v4371, %v4373
    %v4376 = vsub.f32 %v4372, %v4374
    %v4377 = vmax.f32 %v4375, 0.0
    %v4378 = vmax.f32 %v4376, 0.0
    %v4379 = vsub.f32 %v4353, %v4363
    %v4380 = vsub.f32 %v4354, %v4364
    %v4381 = vadd.f32 %v4377, 1e-12
    %v4382 = vadd.f32 %v4378, 1e-12
    %v4383 = vrsqrt.pop %v4381
    %v4384 = vrsqrt.pop %v4382
    %v4385 = vmul.f32 %v4379, %v4383
    %v4386 = vmul.f32 %v4380, %v4384
    %v4388 = vlaneseq
    %v4389 = vshrl.u32 %v4388, 7
    %v4390 = vsub.s32 0, %v4389
    %v4391 = vrot.slane %v4356, %v4390
    %v4393 = vmul.f32 %v4385, %v4391
    %v4394 = vmul.f32 %v4386, %v4391
    %v4396 = vlaneseq
    %v4397 = vshrl.u32 %v4396, 7
    %v4398 = vsub.s32 0, %v4397
    %v4399 = vrot.slane %v4358, %v4398
    %v4401 = vadd.f32 %v4393, %v4399
    %v4402 = vadd.f32 %v4394, %v4399
    %v4403 = vpack.c.bf16 %v4401, %v4401
    %v4404 = vpack.c.bf16 %v4402, %v4402
    %v4405 = vld [vmem:[%s41] sm:$0xf]
    %v4406 = vld [vmem:[%s41 + $0x4] sm:$0xf]
    %v4407 = vld [vmem:[%s41 + $0x8] sm:$0xf]
    %v4408 = vld [vmem:[%s41 + $0xc] sm:$0xf]
    %v4409 = vld [vmem:[%s41 + $0x10] sm:$0xf]
    %v4410 = vld [vmem:[%s41 + $0x14] sm:$0xf]
    %v4411 = vld [vmem:[%s41 + $0x18] sm:$0xf]
    %v4412 = vld [vmem:[%s41 + $0x1c] sm:$0xf]
    %v4413 = vld [vmem:[%s41 + $0x20] sm:$0xf]
    %v4414 = vld [vmem:[%s41 + $0x24] sm:$0xf]
    %v4415 = vld [vmem:[%s41 + $0x28] sm:$0xf]
    %v4416 = vld [vmem:[%s41 + $0x2c] sm:$0xf]
    %v4417 = vld [vmem:[%s41 + $0x30] sm:$0xf]
    %v4418 = vld [vmem:[%s41 + $0x34] sm:$0xf]
    %v4419 = vld [vmem:[%s41 + $0x38] sm:$0xf]
    %v4420 = vld [vmem:[%s41 + $0x3c] sm:$0xf]
    %v4421 = vld [vmem:[%s43] sm:$0x1]
    %v4423 = vlaneseq
    %v4424 = vshrl.u32 %v4423, 7
    %v4425 = vsub.s32 0, %v4424
    %v4426 = vrot.slane %v4421, %v4425
    %v4430 = vunpack.c.l.b16 %v4403
    %v4431 = vunpack.c.l.b16 %v4404
    %v4432 = vrot.slane %v4431, 7
    %vm4433 = vcmask 1041409
    %v4434 = vsel %vm4433, %v4432, %v4430
    %v4435 = vpack.c.b16 %v4434, %v4434
    %v4453 = vunpack.c.l.b16 %v4405
    %v4454 = vunpack.c.l.b16 %v4406
    %v4455 = vunpack.c.l.b16 %v4407
    %v4456 = vunpack.c.l.b16 %v4408
    %v4457 = vunpack.c.l.b16 %v4409
    %v4458 = vunpack.c.l.b16 %v4410
    %v4459 = vunpack.c.l.b16 %v4411
    %v4460 = vunpack.c.l.b16 %v4412
    %v4461 = vunpack.c.l.b16 %v4413
    %v4462 = vunpack.c.l.b16 %v4414
    %v4463 = vunpack.c.l.b16 %v4415
    %v4464 = vunpack.c.l.b16 %v4416
    %v4465 = vunpack.c.l.b16 %v4417
    %v4466 = vunpack.c.l.b16 %v4418
    %v4467 = vunpack.c.l.b16 %v4419
    %v4468 = vunpack.c.l.b16 %v4420
    %v4469 = vpack.c.b16 %v4454, %v4453
    %v4470 = vpack.c.b16 %v4456, %v4455
    %v4471 = vpack.c.b16 %v4458, %v4457
    %v4472 = vpack.c.b16 %v4460, %v4459
    %v4473 = vpack.c.b16 %v4462, %v4461
    %v4474 = vpack.c.b16 %v4464, %v4463
    %v4475 = vpack.c.b16 %v4466, %v4465
    %v4476 = vpack.c.b16 %v4468, %v4467
    %4485 = vmatprep.subr.bf16.mxu0 0
    %4486 = vmatpush1.bf16.msra.mxu0 %v4469
    %4487 = vmatprep.subr.bf16.mxu0 0
    %4488 = vmatpush1.bf16.msra.mxu0 %v4470
    %4489 = vmatprep.subr.bf16.mxu0 0
    %4490 = vmatpush1.bf16.msra.mxu0 %v4471
    %4491 = vmatprep.subr.bf16.mxu0 0
    %4492 = vmatpush1.bf16.msra.mxu0 %v4472
    %4493 = vmatprep.subr.bf16.mxu0 0
    %4494 = vmatpush1.bf16.msra.mxu0 %v4473
    %4495 = vmatprep.subr.bf16.mxu0 0
    %4496 = vmatpush1.bf16.msra.mxu0 %v4474
    %4497 = vmatprep.subr.bf16.mxu0 0
    %4498 = vmatpush1.bf16.msra.mxu0 %v4475
    %4499 = vmatprep.subr.bf16.mxu0 0
    %4500 = vmatpush1.bf16.msra.mxu0 %v4476
    %4501 = vmatprep.subr.bf16.mxu0 0
    %4502 = vmatpush1.bf16.msra.mxu0 0
    %4503 = vmatprep.subr.bf16.mxu0 0
    %4504 = vmatpush1.bf16.msra.mxu0 0
    %4505 = vmatprep.subr.bf16.mxu0 0
    %4506 = vmatpush1.bf16.msra.mxu0 0
    %4507 = vmatprep.subr.bf16.mxu0 0
    %4508 = vmatpush1.bf16.msra.mxu0 0
    %4509 = vmatprep.subr.bf16.mxu0 0
    %4510 = vmatpush1.bf16.msra.mxu0 0
    %4511 = vmatprep.subr.bf16.mxu0 0
    %4512 = vmatpush1.bf16.msra.mxu0 0
    %4513 = vmatprep.subr.bf16.mxu0 0
    %4514 = vmatpush1.bf16.msra.mxu0 0
    %4515 = vmatprep.subr.bf16.mxu0 0
    %4516 = vmatpush1.bf16.msra.mxu0 0
    %4517 = vmatprep.mubr.bf16.mxu0 0
    %4518 = vmatmul.mubr.bf16.gmra.mrb[0].mxu0 %v4435
    %v4519 = vpop.f32.mrb[0].mxu0
    %v4520 = vadd.f32 %v4426, %v4519
    %v4521 = vpop.f32.mrb[0].mxu0
    %v4522 = vpop.f32.mrb[0].mxu0
    %v4523 = vpop.f32.mrb[0].mxu0
    %4524 = vdwg.mxu0
    %v4525 = vtanh.pop %v4520
    %v4526 = vpack.c.bf16 %v4525, %v4525
    %v4527 = vld [vmem:[#allocation27] sm:$0xf]
    %v4528 = vld [vmem:[#allocation27 + $0x4] sm:$0xf]
    %v4529 = vld [vmem:[#allocation27 + $0x8] sm:$0xf]
    %v4530 = vld [vmem:[#allocation27 + $0xc] sm:$0xf]
    %v4531 = vld [vmem:[#allocation27 + $0x10] sm:$0xf]
    %v4532 = vld [vmem:[#allocation27 + $0x14] sm:$0xf]
    %v4533 = vld [vmem:[#allocation27 + $0x18] sm:$0xf]
    %v4534 = vld [vmem:[#allocation27 + $0x1c] sm:$0xf]
    %v4535 = vld [vmem:[#allocation27 + $0x20] sm:$0xf]
    %v4536 = vld [vmem:[#allocation27 + $0x24] sm:$0xf]
    %v4537 = vld [vmem:[#allocation27 + $0x28] sm:$0xf]
    %v4538 = vld [vmem:[#allocation27 + $0x2c] sm:$0xf]
    %v4539 = vld [vmem:[#allocation27 + $0x30] sm:$0xf]
    %v4540 = vld [vmem:[#allocation27 + $0x34] sm:$0xf]
    %v4541 = vld [vmem:[#allocation27 + $0x38] sm:$0xf]
    %v4542 = vld [vmem:[#allocation27 + $0x3c] sm:$0xf]
    %v4543 = vld [vmem:[%s47] sm:$0x1]
    %v4545 = vlaneseq
    %v4546 = vshrl.u32 %v4545, 7
    %v4547 = vsub.s32 0, %v4546
    %v4548 = vrot.slane %v4543, %v4547
    %v4566 = vunpack.c.l.b16 %v4527
    %v4567 = vunpack.c.l.b16 %v4528
    %v4568 = vunpack.c.l.b16 %v4529
    %v4569 = vunpack.c.l.b16 %v4530
    %v4570 = vunpack.c.l.b16 %v4531
    %v4571 = vunpack.c.l.b16 %v4532
    %v4572 = vunpack.c.l.b16 %v4533
    %v4573 = vunpack.c.l.b16 %v4534
    %v4574 = vunpack.c.l.b16 %v4535
    %v4575 = vunpack.c.l.b16 %v4536
    %v4576 = vunpack.c.l.b16 %v4537
    %v4577 = vunpack.c.l.b16 %v4538
    %v4578 = vunpack.c.l.b16 %v4539
    %v4579 = vunpack.c.l.b16 %v4540
    %v4580 = vunpack.c.l.b16 %v4541
    %v4581 = vunpack.c.l.b16 %v4542
    %v4582 = vpack.c.b16 %v4567, %v4566
    %v4583 = vpack.c.b16 %v4569, %v4568
    %v4584 = vpack.c.b16 %v4571, %v4570
    %v4585 = vpack.c.b16 %v4573, %v4572
    %v4586 = vpack.c.b16 %v4575, %v4574
    %v4587 = vpack.c.b16 %v4577, %v4576
    %v4588 = vpack.c.b16 %v4579, %v4578
    %v4589 = vpack.c.b16 %v4581, %v4580
    %4598 = vmatprep.subr.bf16.mxu0 0
    %4599 = vmatpush1.bf16.msra.mxu0 %v4582
    %4600 = vmatprep.subr.bf16.mxu0 0
    %4601 = vmatpush1.bf16.msra.mxu0 %v4583
    %4602 = vmatprep.subr.bf16.mxu0 0
    %4603 = vmatpush1.bf16.msra.mxu0 %v4584
    %4604 = vmatprep.subr.bf16.mxu0 0
    %4605 = vmatpush1.bf16.msra.mxu0 %v4585
    %4606 = vmatprep.subr.bf16.mxu0 0
    %4607 = vmatpush1.bf16.msra.mxu0 %v4586
    %4608 = vmatprep.subr.bf16.mxu0 0
    %4609 = vmatpush1.bf16.msra.mxu0 %v4587
    %4610 = vmatprep.subr.bf16.mxu0 0
    %4611 = vmatpush1.bf16.msra.mxu0 %v4588
    %4612 = vmatprep.subr.bf16.mxu0 0
    %4613 = vmatpush1.bf16.msra.mxu0 %v4589
    %4614 = vmatprep.subr.bf16.mxu0 0
    %4615 = vmatpush1.bf16.msra.mxu0 0
    %4616 = vmatprep.subr.bf16.mxu0 0
    %4617 = vmatpush1.bf16.msra.mxu0 0
    %4618 = vmatprep.subr.bf16.mxu0 0
    %4619 = vmatpush1.bf16.msra.mxu0 0
    %4620 = vmatprep.subr.bf16.mxu0 0
    %4621 = vmatpush1.bf16.msra.mxu0 0
    %4622 = vmatprep.subr.bf16.mxu0 0
    %4623 = vmatpush1.bf16.msra.mxu0 0
    %4624 = vmatprep.subr.bf16.mxu0 0
    %4625 = vmatpush1.bf16.msra.mxu0 0
    %4626 = vmatprep.subr.bf16.mxu0 0
    %4627 = vmatpush1.bf16.msra.mxu0 0
    %4628 = vmatprep.subr.bf16.mxu0 0
    %4629 = vmatpush1.bf16.msra.mxu0 0
    %4630 = vmatprep.mubr.bf16.mxu0 0
    %4631 = vmatmul.mubr.bf16.gmra.mrb[0].mxu0 %v4526
    %v4632 = vpop.f32.mrb[0].mxu0
    %v4633 = vadd.f32 %v4548, %v4632
    %v4634 = vpop.f32.mrb[0].mxu0
    %v4635 = vpop.f32.mrb[0].mxu0
    %v4636 = vpop.f32.mrb[0].mxu0
    %4637 = vdwg.mxu0
    %v4638 = vmax.f32 %v4633, 0.0
    %v4639 = vpack.c.bf16 %v4638, %v4638
    %v4640 = vld [vmem:[#allocation29] sm:$0xf]
    %v4641 = vld [vmem:[#allocation29 + $0x4] sm:$0xf]
    %v4642 = vld [vmem:[#allocation29 + $0x8] sm:$0xf]
    %v4643 = vld [vmem:[#allocation29 + $0xc] sm:$0xf]
    %v4644 = vld [vmem:[#allocation29 + $0x10] sm:$0xf]
    %v4645 = vld [vmem:[#allocation29 + $0x14] sm:$0xf]
    %v4646 = vld [vmem:[#allocation29 + $0x18] sm:$0xf]
    %v4647 = vld [vmem:[#allocation29 + $0x1c] sm:$0xf]
    %v4648 = vld [vmem:[#allocation29 + $0x20] sm:$0xf]
    %v4649 = vld [vmem:[#allocation29 + $0x24] sm:$0xf]
    %v4650 = vld [vmem:[#allocation29 + $0x28] sm:$0xf]
    %v4651 = vld [vmem:[#allocation29 + $0x2c] sm:$0xf]
    %v4652 = vld [vmem:[#allocation29 + $0x30] sm:$0xf]
    %v4653 = vld [vmem:[#allocation29 + $0x34] sm:$0xf]
    %v4654 = vld [vmem:[#allocation29 + $0x38] sm:$0xf]
    %v4655 = vld [vmem:[#allocation29 + $0x3c] sm:$0xf]
    %v4656 = vld [vmem:[%s51] sm:$0x1]
    %v4658 = vlaneseq
    %v4659 = vshrl.u32 %v4658, 7
    %v4660 = vsub.s32 0, %v4659
    %v4661 = vrot.slane %v4656, %v4660
    %v4679 = vunpack.c.l.b16 %v4640
    %v4680 = vunpack.c.l.b16 %v4641
    %v4681 = vunpack.c.l.b16 %v4642
    %v4682 = vunpack.c.l.b16 %v4643
    %v4683 = vunpack.c.l.b16 %v4644
    %v4684 = vunpack.c.l.b16 %v4645
    %v4685 = vunpack.c.l.b16 %v4646
    %v4686 = vunpack.c.l.b16 %v4647
    %v4687 = vunpack.c.l.b16 %v4648
    %v4688 = vunpack.c.l.b16 %v4649
    %v4689 = vunpack.c.l.b16 %v4650
    %v4690 = vunpack.c.l.b16 %v4651
    %v4691 = vunpack.c.l.b16 %v4652
    %v4692 = vunpack.c.l.b16 %v4653
    %v4693 = vunpack.c.l.b16 %v4654
    %v4694 = vunpack.c.l.b16 %v4655
    %v4695 = vpack.c.b16 %v4680, %v4679
    %v4696 = vpack.c.b16 %v4682, %v4681
    %v4697 = vpack.c.b16 %v4684, %v4683
    %v4698 = vpack.c.b16 %v4686, %v4685
    %v4699 = vpack.c.b16 %v4688, %v4687
    %v4700 = vpack.c.b16 %v4690, %v4689
    %v4701 = vpack.c.b16 %v4692, %v4691
    %v4702 = vpack.c.b16 %v4694, %v4693
    %4711 = vmatprep.subr.bf16.mxu0 0
    %4712 = vmatpush1.bf16.msra.mxu0 %v4695
    %4713 = vmatprep.subr.bf16.mxu0 0
    %4714 = vmatpush1.bf16.msra.mxu0 %v4696
    %4715 = vmatprep.subr.bf16.mxu0 0
    %4716 = vmatpush1.bf16.msra.mxu0 %v4697
    %4717 = vmatprep.subr.bf16.mxu0 0
    %4718 = vmatpush1.bf16.msra.mxu0 %v4698
    %4719 = vmatprep.subr.bf16.mxu0 0
    %4720 = vmatpush1.bf16.msra.mxu0 %v4699
    %4721 = vmatprep.subr.bf16.mxu0 0
    %4722 = vmatpush1.bf16.msra.mxu0 %v4700
    %4723 = vmatprep.subr.bf16.mxu0 0
    %4724 = vmatpush1.bf16.msra.mxu0 %v4701
    %4725 = vmatprep.subr.bf16.mxu0 0
    %4726 = vmatpush1.bf16.msra.mxu0 %v4702
    %4727 = vmatprep.subr.bf16.mxu0 0
    %4728 = vmatpush1.bf16.msra.mxu0 0
    %4729 = vmatprep.subr.bf16.mxu0 0
    %4730 = vmatpush1.bf16.msra.mxu0 0
    %4731 = vmatprep.subr.bf16.mxu0 0
    %4732 = vmatpush1.bf16.msra.mxu0 0
    %4733 = vmatprep.subr.bf16.mxu0 0
    %4734 = vmatpush1.bf16.msra.mxu0 0
    %4735 = vmatprep.subr.bf16.mxu0 0
    %4736 = vmatpush1.bf16.msra.mxu0 0
    %4737 = vmatprep.subr.bf16.mxu0 0
    %4738 = vmatpush1.bf16.msra.mxu0 0
    %4739 = vmatprep.subr.bf16.mxu0 0
    %4740 = vmatpush1.bf16.msra.mxu0 0
    %4741 = vmatprep.subr.bf16.mxu0 0
    %4742 = vmatpush1.bf16.msra.mxu0 0
    %4743 = vmatprep.mubr.bf16.mxu0 0
    %4744 = vmatmul.mubr.bf16.gmra.mrb[0].mxu0 %v4639
    %v4745 = vpop.f32.mrb[0].mxu0
    %v4746 = vadd.f32 %v4661, %v4745
    %v4747 = vpop.f32.mrb[0].mxu0
    %v4748 = vpop.f32.mrb[0].mxu0
    %v4749 = vpop.f32.mrb[0].mxu0
    %4750 = vdwg.mxu0
    %v4751 = vmax.f32 %v4746, 0.0
    %v4752 = vpack.c.bf16 %v4751, %v4751
    %v4753 = vld [vmem:[#allocation30] sm:$0xf]
    %v4754 = vld [vmem:[#allocation30 + $0x4] sm:$0xf]
    %v4755 = vld [vmem:[#allocation30 + $0x8] sm:$0xf]
    %v4756 = vld [vmem:[#allocation30 + $0xc] sm:$0xf]
    %v4757 = vld [vmem:[#allocation30 + $0x10] sm:$0xf]
    %v4758 = vld [vmem:[#allocation30 + $0x14] sm:$0xf]
    %v4759 = vld [vmem:[#allocation30 + $0x18] sm:$0xf]
    %v4760 = vld [vmem:[#allocation30 + $0x1c] sm:$0xf]
    %v4761 = vld [vmem:[#allocation30 + $0x20] sm:$0xf]
    %v4762 = vld [vmem:[#allocation30 + $0x24] sm:$0xf]
    %v4763 = vld [vmem:[#allocation30 + $0x28] sm:$0xf]
    %v4764 = vld [vmem:[#allocation30 + $0x2c] sm:$0xf]
    %v4765 = vld [vmem:[#allocation30 + $0x30] sm:$0xf]
    %v4766 = vld [vmem:[#allocation30 + $0x34] sm:$0xf]
    %v4767 = vld [vmem:[#allocation30 + $0x38] sm:$0xf]
    %v4768 = vld [vmem:[#allocation30 + $0x3c] sm:$0xf]
    %v4769 = vld [vmem:[%s55] sm:$0x1]
    %v4771 = vlaneseq
    %v4772 = vshrl.u32 %v4771, 7
    %v4773 = vsub.s32 0, %v4772
    %v4774 = vrot.slane %v4769, %v4773
    %v4792 = vunpack.c.l.b16 %v4753
    %v4793 = vunpack.c.l.b16 %v4754
    %v4794 = vunpack.c.l.b16 %v4755
    %v4795 = vunpack.c.l.b16 %v4756
    %v4796 = vunpack.c.l.b16 %v4757
    %v4797 = vunpack.c.l.b16 %v4758
    %v4798 = vunpack.c.l.b16 %v4759
    %v4799 = vunpack.c.l.b16 %v4760
    %v4800 = vunpack.c.l.b16 %v4761
    %v4801 = vunpack.c.l.b16 %v4762
    %v4802 = vunpack.c.l.b16 %v4763
    %v4803 = vunpack.c.l.b16 %v4764
    %v4804 = vunpack.c.l.b16 %v4765
    %v4805 = vunpack.c.l.b16 %v4766
    %v4806 = vunpack.c.l.b16 %v4767
    %v4807 = vunpack.c.l.b16 %v4768
    %v4808 = vpack.c.b16 %v4793, %v4792
    %v4809 = vpack.c.b16 %v4795, %v4794
    %v4810 = vpack.c.b16 %v4797, %v4796
    %v4811 = vpack.c.b16 %v4799, %v4798
    %v4812 = vpack.c.b16 %v4801, %v4800
    %v4813 = vpack.c.b16 %v4803, %v4802
    %v4814 = vpack.c.b16 %v4805, %v4804
    %v4815 = vpack.c.b16 %v4807, %v4806
    %4824 = vmatprep.subr.bf16.mxu0 0
    %4825 = vmatpush1.bf16.msra.mxu0 %v4808
    %4826 = vmatprep.subr.bf16.mxu0 0
    %4827 = vmatpush1.bf16.msra.mxu0 %v4809
    %4828 = vmatprep.subr.bf16.mxu0 0
    %4829 = vmatpush1.bf16.msra.mxu0 %v4810
    %4830 = vmatprep.subr.bf16.mxu0 0
    %4831 = vmatpush1.bf16.msra.mxu0 %v4811
    %4832 = vmatprep.subr.bf16.mxu0 0
    %4833 = vmatpush1.bf16.msra.mxu0 %v4812
    %4834 = vmatprep.subr.bf16.mxu0 0
    %4835 = vmatpush1.bf16.msra.mxu0 %v4813
    %4836 = vmatprep.subr.bf16.mxu0 0
    %4837 = vmatpush1.bf16.msra.mxu0 %v4814
    %4838 = vmatprep.subr.bf16.mxu0 0
    %4839 = vmatpush1.bf16.msra.mxu0 %v4815
    %4840 = vmatprep.subr.bf16.mxu0 0
    %4841 = vmatpush1.bf16.msra.mxu0 0
    %4842 = vmatprep.subr.bf16.mxu0 0
    %4843 = vmatpush1.bf16.msra.mxu0 0
    %4844 = vmatprep.subr.bf16.mxu0 0
    %4845 = vmatpush1.bf16.msra.mxu0 0
    %4846 = vmatprep.subr.bf16.mxu0 0
    %4847 = vmatpush1.bf16.msra.mxu0 0
    %4848 = vmatprep.subr.bf16.mxu0 0
    %4849 = vmatpush1.bf16.msra.mxu0 0
    %4850 = vmatprep.subr.bf16.mxu0 0
    %4851 = vmatpush1.bf16.msra.mxu0 0
    %4852 = vmatprep.subr.bf16.mxu0 0
    %4853 = vmatpush1.bf16.msra.mxu0 0
    %4854 = vmatprep.subr.bf16.mxu0 0
    %4855 = vmatpush1.bf16.msra.mxu0 0
    %4856 = vmatprep.mubr.bf16.mxu0 0
    %4857 = vmatmul.mubr.bf16.gmra.mrb[0].mxu0 %v4752
    %v4858 = vpop.f32.mrb[0].mxu0
    %v4859 = vadd.f32 %v4774, %v4858
    %v4860 = vpop.f32.mrb[0].mxu0
    %v4861 = vpop.f32.mrb[0].mxu0
    %v4862 = vpop.f32.mrb[0].mxu0
    %4863 = vdwg.mxu0
    %v4864 = vmax.f32 %v4859, 0.0
    %v4865 = vld [vmem:[%s57] sm:$0x1]
    %v4867 = vlaneseq
    %v4868 = vshrl.u32 %v4867, 7
    %v4869 = vsub.s32 0, %v4868
    %v4870 = vrot.slane %v4865, %v4869
    %v4872 = vmul.f32 %v4864, %v4870
    %vm4873 = vcmask 1041408
    %v4874 = vsel %vm4873, %v4872, 0.0
    %4875 = vadd.xlane.f32.xlu0 %v4874
    %v4876 = vpop.xlane.xlu0 %4875
    %v4877 = vld [vmem:[#allocation2] sm:$0x1]
    %v4879 = vlaneseq
    %v4880 = vshrl.u32 %v4879, 7
    %v4881 = vsub.s32 0, %v4880
    %v4882 = vrot.slane %v4877, %v4881
    %v4884 = vadd.f32 %v4876, %v4882
    %vm4885 = vcmask 1024
    %4886 = vst.msk [vmem:[%s61] sm:$0x3] %vm4885, %v4884
    %4887 = vst [vmem:[#allocation32] sm:$0x3] %v4525
    %v4888 = vld [vmem:[%s5] sm:$0x3]
    %v4889 = vsub.f32 %v4884, %v4888
    %v4890 = vmul.f32 %v4889, %v4889
    %v4891 = vsel %vm4885, %v4890, 0.0
    %4892 = vadd.xlane.f32.xlu0 %v4891
    %v4893 = vpop.xlane.xlu0 %4892
    %v4894 = vrot.slane %v4893, 4
    %v4895 = vadd.f32 %v4893, %v4894
    %v4896 = vrot.slane %v4895, 2
    %v4897 = vadd.f32 %v4895, %v4896
    %v4898 = vrot.slane %v4897, 1
    %v4899 = vadd.f32 %v4897, %v4898
    %s4900 = vtos %v4899
    %v4901 = vrcp.pop 2.0
    %s4902 = vtos %v4901
    %s4903 = smul.f32 %s4900, %s4902
    %v4904 = vstv %s4903
    %vm4905 = vcmask 0
    %4906 = vst.msk [vmem:[#allocation33] sm:$0x1] %vm4905, %v4904
    // Predicated region
    $region194: #{tpu_custom_call.1} parent=1 // pred_check
      _
    $region195: #{tpu_custom_call.1} parent=1 // pred_check_branch
      %4908 = sbr.rel (0) target = $region197
    $region196: #{tpu_custom_call.1} parent=1 // pred_region
      _
    $region197: #{tpu_custom_call.1} parent=1 // pred_fallthru
      _
    // Predicated region
    $region198: #{tpu_custom_call.1} parent=1 // pred_check
      _
    $region199: #{tpu_custom_call.1} parent=1 // pred_check_branch
      %4910 = sbr.rel (0) target = $region201
    $region200: #{tpu_custom_call.1} parent=1 // pred_region
      %s4912 = ssub.s32 32, 32
      %4913 = vsyncadd [#allocation5], %s4912
      %s4915 = sshll.u32 [#allocation32], 4
      %s4916 = int_to_ptr.vmem [resolvable:$true] %s4915
      %4918 = dma.vmem_to_hbm [thread:$0]  %s4916, 32, %s63, [#allocation5]
    $region201: #{tpu_custom_call.1} parent=1 // pred_fallthru
      _
    // Predicated region
    $region202: #{tpu_custom_call.1} parent=1 // pred_check
      _
    $region203: #{tpu_custom_call.1} parent=1 // pred_check_branch
      %4920 = sbr.rel (0) target = $region205
    $region204: #{tpu_custom_call.1} parent=1 // pred_region
      %s4922 = ssub.s32 16, 16
      %4923 = vsyncadd [#allocation34], %s4922
      %s4925 = sshll.u32 [#allocation33], 4
      %s4926 = int_to_ptr.vmem [resolvable:$true] %s4925
      %4928 = dma.vmem_to_hbm [thread:$0]  %s4926, 16, %s65, [#allocation34]
    $region205: #{tpu_custom_call.1} parent=1 // pred_fallthru
      _
    // Predicated region
    $region206: #{tpu_custom_call.1} parent=1 // pred_check
      _
    $region207: #{tpu_custom_call.1} parent=1 // pred_check_branch
      %4930 = sbr.rel (0) target = $region209
    $region208: #{tpu_custom_call.1} parent=1 // pred_region
      _
    $region209: #{tpu_custom_call.1} parent=1 // pred_fallthru
      _
    // Predicated region
    $region210: #{tpu_custom_call.1} parent=1 // pred_check
      _
    $region211: #{tpu_custom_call.1} parent=1 // pred_check_branch
      %4932 = sbr.rel (0) target = $region213
    $region212: #{tpu_custom_call.1} parent=1 // pred_region
      %4933 = dma.done [#allocation5], 32
    $region213: #{tpu_custom_call.1} parent=1 // pred_fallthru
      _
    // Predicated region
    $region214: #{tpu_custom_call.1} parent=1 // pred_check
      _
    $region215: #{tpu_custom_call.1} parent=1 // pred_check_branch
      %4935 = sbr.rel (0) target = $region217
    $region216: #{tpu_custom_call.1} parent=1 // pred_region
      %4936 = dma.done [#allocation34], 16
    $region217: #{tpu_custom_call.1} parent=1 // pred_fallthru
      _
    %4937 = vsyncpa [#allocation4], 1
    %4938 = vsyncpa [#allocation7], 1
    %4939 = vsyncpa [#allocation10], 1
    %4940 = vsyncpa [#allocation13], 1
    %4941 = vsyncpa [#allocation16], 1
    %4942 = vsyncpa [#allocation19], 1
    %4943 = vsyncpa [#allocation22], 1
    %4944 = vsyncpa [#allocation25], 1
    %4945 = vsyncpa [#allocation28], 1
    %4946 = vsyncpa [#allocation31], 1
    %4947 = vsyncpa [#allocation5], 1
    %4948 = vsyncpa [#allocation34], 1

</llo_original>
